<compile_context>
chip_gen: v7x
topology: tpu7x:2x2x1
jax: 0.10.0
libtpu: 0.0.40
codegen_flags: <defaults>
</compile_context>

<pallas_src>
import functools
import math

import numpy as np
import jax
import jax.numpy as jnp
from jax.experimental import pallas as pl
from jax.experimental.pallas import tpu as pltpu

HIDDEN = 32          # hidden_size
INPUT = 16           # input_size
HEADS = 4            # num_heads
HEAD_DIM = HIDDEN // HEADS


# ---------------------------------------------------------------------------
# Constant 0/1 matrices encoding PyTorch's raw `.view(B, -1, S, H//nh)` split.
# ---------------------------------------------------------------------------
@functools.lru_cache(maxsize=None)
def _head_permutation(batch, seq):
    """gather[p, j, r] == 1 iff head-row j (j = b*nh*S + n*S + s') is taken from
    row r of the flattened (B*S, H) tensor, using lane chunk p (width HEAD_DIM).
    scatter[p, h, r, s'] = gather[p, h*S + s', r] (inverse mapping, for the output merge)."""
    nh, d, H, S = HEADS, HEAD_DIM, HIDDEN, seq
    n_chunks = H // d                      # == nh
    gather = np.zeros((n_chunks, batch * nh * S, batch * S), np.float32)
    for j in range(batch * nh * S):
        b, rem = divmod(j, nh * S)
        n, sp = divmod(rem, S)
        flat = n * S * d + sp * d          # flat offset of element (n, s', 0) inside one batch
        r = b * S + flat // H
        p = (flat % H) // d
        gather[p, j, r] = 1.0
    scatter = gather.reshape(n_chunks, batch * nh, S, batch * S).transpose(0, 1, 3, 2)
    return jnp.asarray(gather), jnp.asarray(scatter)


# ---------------------------------------------------------------------------
# Single fused kernel: QKV projection + quirky head split + heads-axis softmax
# attention + merge back to a lane-dense (B*S, H) slab.
# ---------------------------------------------------------------------------
def _fused_multi_attention_kernel(x_ref, w_ref, b_ref, gat_ref, sct_ref, o_ref, heads_ref):
    nh, d, H = HEADS, HEAD_DIM, HIDDEN
    n_chunks = H // d                     # == nh
    S = heads_ref.shape[2]
    n_heads = heads_ref.shape[1]          # B * nh
    batch = n_heads // nh
    scale = 1.0 / math.sqrt(H)

    # ---- fused Q/K/V projection: one MXU matmul ----------------------------
    qkv = jnp.dot(x_ref[...], w_ref[...],
                  preferred_element_type=jnp.float32) + b_ref[...]          # (B*S, 3H)

    # ---- quirky row-major head split, expressed as 0/1 gather matmuls ------
    gq = gk = gv = None
    for p in range(n_chunks):
        rows_p = jnp.dot(gat_ref[p], qkv,
                         preferred_element_type=jnp.float32)                # (B*nh*S, 3H)
        q_p = rows_p[:, p * d:(p + 1) * d]
        k_p = rows_p[:, H + p * d:H + (p + 1) * d]
        v_p = rows_p[:, 2 * H + p * d:2 * H + (p + 1) * d]
        gq = q_p if gq is None else gq + q_p
        gk = k_p if gk is None else gk + k_p
        gv = v_p if gv is None else gv + v_p

    # ---- stash (head, S, d) blocks so attention is batched over all heads ---
    for h in range(n_heads):
        heads_ref[0, h] = gq[h * S:(h + 1) * S, :]
        heads_ref[1, h] = gk[h * S:(h + 1) * S, :]
        heads_ref[2, h] = gv[h * S:(h + 1) * S, :]
    qh = heads_ref[0]                                                       # (B*nh, S, d)
    kh = heads_ref[1]
    vh = heads_ref[2]

    # ---- attention logits (scaled by 1/sqrt(hidden_size)) ------------------
    e = jnp.einsum('hqd,hkd->hqk', qh, kh,
                   preferred_element_type=jnp.float32) * scale              # (B*nh, S, S)

    sct = sct_ref[...]                                                      # (nc, B*nh, B*S, S)
    out_chunks = [None] * n_chunks
    for b in range(batch):
        hs = slice(b * nh, (b + 1) * nh)
        e_b = e[hs]                                                         # (nh, S, S)
        # nn.Softmax(dim=1): normalize over the HEADS axis, exact f32 math.
        m = jnp.max(e_b, axis=0, keepdims=True)
        p_b = jnp.exp(e_b - m)
        a_b = p_b / jnp.sum(p_b, axis=0, keepdims=True)
        o_b = jnp.einsum('hqk,hkd->hqd', a_b, vh[hs],
                         preferred_element_type=jnp.float32)                # (nh, S, d)
        # inverse head-merge (.view(B, S, H)) via 0/1 scatter matmuls per lane chunk
        for p in range(n_chunks):
            contrib = jnp.einsum('hrs,hsd->hrd', sct[p, hs], o_b,
                                 preferred_element_type=jnp.float32)        # (nh, B*S, d)
            contrib = jnp.sum(contrib, axis=0)                              # (B*S, d)
            out_chunks[p] = contrib if out_chunks[p] is None else out_chunks[p] + contrib

    # ---- one lane-dense (B*S, H) store --------------------------------------
    o_ref[...] = jnp.concatenate(out_chunks, axis=1)


# ---------------------------------------------------------------------------
# Wrappers
# ---------------------------------------------------------------------------
def prepare_params(params):
    """Hoisted once per parameter set: transpose + concat the three projections."""
    wqkv = jnp.concatenate([params['wq'].T, params['wk'].T, params['wv'].T], axis=1)   # (I, 3H)
    bqkv = jnp.concatenate([params['bq'], params['bk'], params['bv']]).reshape(1, 3 * HIDDEN)
    return wqkv, bqkv


def multi_attention_forward(x, wqkv, bqkv):
    B, S, I = x.shape
    gather, scatter = _head_permutation(B, S)
    x2 = x.reshape(B * S, I)                        # leading-dim flatten (outside the kernel)
    out = pl.pallas_call(
        _fused_multi_attention_kernel,
        out_shape=jax.ShapeDtypeStruct((B * S, HIDDEN), jnp.float32),
        scratch_shapes=[pltpu.VMEM((3, B * HEADS, S, HEAD_DIM), jnp.float32)],
    )(x2, wqkv, bqkv, gather, scatter)
    return out.reshape(B, S, HIDDEN)


# ---------------------------------------------------------------------------
# Pure-JAX reference (mirrors the PyTorch forward, mask=False)
# ---------------------------------------------------------------------------
def multi_attention_reference(x, params):
    B, S, I = x.shape
    H, nh, d = HIDDEN, HEADS, HEAD_DIM
    Q = x @ params['wq'].T + params['bq']
    K = x @ params['wk'].T + params['bk']
    V = x @ params['wv'].T + params['bv']
    Q = Q.reshape(B, nh, S, d)
    K = K.reshape(B, nh, S, d)
    V = V.reshape(B, nh, S, d)
    e = jnp.einsum('bhqd,bhkd->bhqk', Q, K) / math.sqrt(H)
    a = jax.nn.softmax(e, axis=1)                    # softmax over the heads axis
    o = jnp.einsum('bhqk,bhkd->bhqd', a, V)
    return o.reshape(B, S, H)


if __name__ == "__main__":
    B, S = 2, 8
    key = jax.random.PRNGKey(0)
    kx, kwq, kwk, kwv, kbq, kbk, kbv = jax.random.split(key, 7)

    x = jax.random.normal(kx, (B, S, INPUT), dtype=jnp.float32)

    bound = 1.0 / math.sqrt(INPUT)   # nn.Linear default init range
    params = {
        'wq': jax.random.uniform(kwq, (HIDDEN, INPUT), jnp.float32, -bound, bound),
        'wk': jax.random.uniform(kwk, (HIDDEN, INPUT), jnp.float32, -bound, bound),
        'wv': jax.random.uniform(kwv, (HIDDEN, INPUT), jnp.float32, -bound, bound),
        'bq': jax.random.uniform(kbq, (HIDDEN,), jnp.float32, -bound, bound),
        'bk': jax.random.uniform(kbk, (HIDDEN,), jnp.float32, -bound, bound),
        'bv': jax.random.uniform(kbv, (HIDDEN,), jnp.float32, -bound, bound),
    }

    wqkv, bqkv = prepare_params(params)

    out = multi_attention_forward(x, wqkv, bqkv)
    out = jax.block_until_ready(out)

    ref = multi_attention_reference(x, params)
    assert out.shape == (B, S, HIDDEN)
    assert jnp.allclose(out, ref, atol=1e-5, rtol=1e-5), "mismatch vs JAX reference"

    print("KERNEL_OK")
</pallas_src>

<mosaic_0001>
module attributes {stable_mosaic.version = 11 : i64} {
  func.func @_fused_multi_attention_kernel(%arg0: memref<16x16xf32, #tpu.memory_space<vmem>>, %arg1: memref<16x96xf32, #tpu.memory_space<vmem>>, %arg2: memref<1x96xf32, #tpu.memory_space<vmem>>, %arg3: memref<4x64x16xf32, #tpu.memory_space<vmem>>, %arg4: memref<4x8x16x8xf32, #tpu.memory_space<vmem>>, %arg5: memref<16x32xf32, #tpu.memory_space<vmem>>, %arg6: memref<3x8x8x8xf32, #tpu.memory_space<vmem>>) attributes {dimension_semantics = [], scalar_prefetch = 0 : i64, scratch_operands = 1 : i64, tpu.core_type = #tpu.core_type<tc>} {
    %c0 = arith.constant 0 : index
    %c0_0 = arith.constant 0 : index
    %0 = vector.load %arg0[%c0, %c0_0] : memref<16x16xf32, #tpu.memory_space<vmem>>, vector<16x16xf32>
    %c0_1 = arith.constant 0 : index
    %c0_2 = arith.constant 0 : index
    %1 = vector.load %arg1[%c0_1, %c0_2] : memref<16x96xf32, #tpu.memory_space<vmem>>, vector<16x96xf32>
    %cst = arith.constant dense<0.000000e+00> : vector<16x96xf32>
    %2 = tpu.matmul %0, %1, %cst {dimension_numbers = #tpu.dot_dimension_numbers<[1], [0], [0], [1], [0, 0, 1, 1], [], []>} : vector<16x16xf32>, vector<16x96xf32>, vector<16x96xf32> -> vector<16x96xf32>
    %c0_3 = arith.constant 0 : index
    %c0_4 = arith.constant 0 : index
    %3 = vector.load %arg2[%c0_3, %c0_4] : memref<1x96xf32, #tpu.memory_space<vmem>>, vector<1x96xf32>
    %4 = vector.broadcast %3 : vector<1x96xf32> to vector<16x96xf32>
    %5 = arith.addf %2, %4 : vector<16x96xf32>
    %c0_5 = arith.constant 0 : index
    %c0_6 = arith.constant 0 : index
    %c0_7 = arith.constant 0 : index
    %6 = vector.load %arg3[%c0_5, %c0_6, %c0_7] : memref<4x64x16xf32, #tpu.memory_space<vmem>>, vector<1x64x16xf32>
    %7 = vector.shape_cast %6 : vector<1x64x16xf32> to vector<64x16xf32>
    %cst_8 = arith.constant dense<0.000000e+00> : vector<64x96xf32>
    %8 = tpu.matmul %7, %5, %cst_8 {dimension_numbers = #tpu.dot_dimension_numbers<[1], [0], [0], [1], [0, 0, 1, 1], [], []>} : vector<64x16xf32>, vector<16x96xf32>, vector<64x96xf32> -> vector<64x96xf32>
    %9 = vector.extract_strided_slice %8 {offsets = [0, 0], sizes = [64, 8], strides = [1, 1]} : vector<64x96xf32> to vector<64x8xf32>
    %10 = vector.extract_strided_slice %8 {offsets = [0, 32], sizes = [64, 8], strides = [1, 1]} : vector<64x96xf32> to vector<64x8xf32>
    %11 = vector.extract_strided_slice %8 {offsets = [0, 64], sizes = [64, 8], strides = [1, 1]} : vector<64x96xf32> to vector<64x8xf32>
    %c1 = arith.constant 1 : index
    %c0_9 = arith.constant 0 : index
    %c0_10 = arith.constant 0 : index
    %12 = vector.load %arg3[%c1, %c0_9, %c0_10] : memref<4x64x16xf32, #tpu.memory_space<vmem>>, vector<1x64x16xf32>
    %13 = vector.shape_cast %12 : vector<1x64x16xf32> to vector<64x16xf32>
    %cst_11 = arith.constant dense<0.000000e+00> : vector<64x96xf32>
    %14 = tpu.matmul %13, %5, %cst_11 {dimension_numbers = #tpu.dot_dimension_numbers<[1], [0], [0], [1], [0, 0, 1, 1], [], []>} : vector<64x16xf32>, vector<16x96xf32>, vector<64x96xf32> -> vector<64x96xf32>
    %15 = vector.extract_strided_slice %14 {offsets = [0, 8], sizes = [64, 8], strides = [1, 1]} : vector<64x96xf32> to vector<64x8xf32>
    %16 = vector.extract_strided_slice %14 {offsets = [0, 40], sizes = [64, 8], strides = [1, 1]} : vector<64x96xf32> to vector<64x8xf32>
    %17 = vector.extract_strided_slice %14 {offsets = [0, 72], sizes = [64, 8], strides = [1, 1]} : vector<64x96xf32> to vector<64x8xf32>
    %18 = arith.addf %9, %15 : vector<64x8xf32>
    %19 = arith.addf %10, %16 : vector<64x8xf32>
    %20 = arith.addf %11, %17 : vector<64x8xf32>
    %c2 = arith.constant 2 : index
    %c0_12 = arith.constant 0 : index
    %c0_13 = arith.constant 0 : index
    %21 = vector.load %arg3[%c2, %c0_12, %c0_13] : memref<4x64x16xf32, #tpu.memory_space<vmem>>, vector<1x64x16xf32>
    %22 = vector.shape_cast %21 : vector<1x64x16xf32> to vector<64x16xf32>
    %cst_14 = arith.constant dense<0.000000e+00> : vector<64x96xf32>
    %23 = tpu.matmul %22, %5, %cst_14 {dimension_numbers = #tpu.dot_dimension_numbers<[1], [0], [0], [1], [0, 0, 1, 1], [], []>} : vector<64x16xf32>, vector<16x96xf32>, vector<64x96xf32> -> vector<64x96xf32>
    %24 = vector.extract_strided_slice %23 {offsets = [0, 16], sizes = [64, 8], strides = [1, 1]} : vector<64x96xf32> to vector<64x8xf32>
    %25 = vector.extract_strided_slice %23 {offsets = [0, 48], sizes = [64, 8], strides = [1, 1]} : vector<64x96xf32> to vector<64x8xf32>
    %26 = vector.extract_strided_slice %23 {offsets = [0, 80], sizes = [64, 8], strides = [1, 1]} : vector<64x96xf32> to vector<64x8xf32>
    %27 = arith.addf %18, %24 : vector<64x8xf32>
    %28 = arith.addf %19, %25 : vector<64x8xf32>
    %29 = arith.addf %20, %26 : vector<64x8xf32>
    %c3 = arith.constant 3 : index
    %c0_15 = arith.constant 0 : index
    %c0_16 = arith.constant 0 : index
    %30 = vector.load %arg3[%c3, %c0_15, %c0_16] : memref<4x64x16xf32, #tpu.memory_space<vmem>>, vector<1x64x16xf32>
    %31 = vector.shape_cast %30 : vector<1x64x16xf32> to vector<64x16xf32>
    %cst_17 = arith.constant dense<0.000000e+00> : vector<64x96xf32>
    %32 = tpu.matmul %31, %5, %cst_17 {dimension_numbers = #tpu.dot_dimension_numbers<[1], [0], [0], [1], [0, 0, 1, 1], [], []>} : vector<64x16xf32>, vector<16x96xf32>, vector<64x96xf32> -> vector<64x96xf32>
    %33 = vector.extract_strided_slice %32 {offsets = [0, 24], sizes = [64, 8], strides = [1, 1]} : vector<64x96xf32> to vector<64x8xf32>
    %34 = vector.extract_strided_slice %32 {offsets = [0, 56], sizes = [64, 8], strides = [1, 1]} : vector<64x96xf32> to vector<64x8xf32>
    %35 = vector.extract_strided_slice %32 {offsets = [0, 88], sizes = [64, 8], strides = [1, 1]} : vector<64x96xf32> to vector<64x8xf32>
    %36 = arith.addf %27, %33 : vector<64x8xf32>
    %37 = arith.addf %28, %34 : vector<64x8xf32>
    %38 = arith.addf %29, %35 : vector<64x8xf32>
    %39 = vector.extract_strided_slice %36 {offsets = [0, 0], sizes = [8, 8], strides = [1, 1]} : vector<64x8xf32> to vector<8x8xf32>
    %c0_18 = arith.constant 0 : index
    %c0_19 = arith.constant 0 : index
    %c0_20 = arith.constant 0 : index
    %c0_21 = arith.constant 0 : index
    %40 = vector.load %arg6[%c0_18, %c0_19, %c0_20, %c0_21] : memref<3x8x8x8xf32, #tpu.memory_space<vmem>>, vector<1x1x8x8xf32>
    %41 = vector.shape_cast %40 : vector<1x1x8x8xf32> to vector<8x8xf32>
    %42 = vector.shape_cast %39 : vector<8x8xf32> to vector<1x1x8x8xf32>
    tpu.vector_store %arg6[%c0_18, %c0_19, %c0_20, %c0_21], %42 {strides = array<i32>} : memref<3x8x8x8xf32, #tpu.memory_space<vmem>>, vector<1x1x8x8xf32>,
    %43 = vector.extract_strided_slice %37 {offsets = [0, 0], sizes = [8, 8], strides = [1, 1]} : vector<64x8xf32> to vector<8x8xf32>
    %c1_22 = arith.constant 1 : index
    %c0_23 = arith.constant 0 : index
    %c0_24 = arith.constant 0 : index
    %c0_25 = arith.constant 0 : index
    %44 = vector.load %arg6[%c1_22, %c0_23, %c0_24, %c0_25] : memref<3x8x8x8xf32, #tpu.memory_space<vmem>>, vector<1x1x8x8xf32>
    %45 = vector.shape_cast %44 : vector<1x1x8x8xf32> to vector<8x8xf32>
    %46 = vector.shape_cast %43 : vector<8x8xf32> to vector<1x1x8x8xf32>
    tpu.vector_store %arg6[%c1_22, %c0_23, %c0_24, %c0_25], %46 {strides = array<i32>} : memref<3x8x8x8xf32, #tpu.memory_space<vmem>>, vector<1x1x8x8xf32>,
    %47 = vector.extract_strided_slice %38 {offsets = [0, 0], sizes = [8, 8], strides = [1, 1]} : vector<64x8xf32> to vector<8x8xf32>
    %c2_26 = arith.constant 2 : index
    %c0_27 = arith.constant 0 : index
    %c0_28 = arith.constant 0 : index
    %c0_29 = arith.constant 0 : index
    %48 = vector.load %arg6[%c2_26, %c0_27, %c0_28, %c0_29] : memref<3x8x8x8xf32, #tpu.memory_space<vmem>>, vector<1x1x8x8xf32>
    %49 = vector.shape_cast %48 : vector<1x1x8x8xf32> to vector<8x8xf32>
    %50 = vector.shape_cast %47 : vector<8x8xf32> to vector<1x1x8x8xf32>
    tpu.vector_store %arg6[%c2_26, %c0_27, %c0_28, %c0_29], %50 {strides = array<i32>} : memref<3x8x8x8xf32, #tpu.memory_space<vmem>>, vector<1x1x8x8xf32>,
    %51 = vector.extract_strided_slice %36 {offsets = [8, 0], sizes = [8, 8], strides = [1, 1]} : vector<64x8xf32> to vector<8x8xf32>
    %c0_30 = arith.constant 0 : index
    %c1_31 = arith.constant 1 : index
    %c0_32 = arith.constant 0 : index
    %c0_33 = arith.constant 0 : index
    %52 = vector.load %arg6[%c0_30, %c1_31, %c0_32, %c0_33] : memref<3x8x8x8xf32, #tpu.memory_space<vmem>>, vector<1x1x8x8xf32>
    %53 = vector.shape_cast %52 : vector<1x1x8x8xf32> to vector<8x8xf32>
    %54 = vector.shape_cast %51 : vector<8x8xf32> to vector<1x1x8x8xf32>
    tpu.vector_store %arg6[%c0_30, %c1_31, %c0_32, %c0_33], %54 {strides = array<i32>} : memref<3x8x8x8xf32, #tpu.memory_space<vmem>>, vector<1x1x8x8xf32>,
    %55 = vector.extract_strided_slice %37 {offsets = [8, 0], sizes = [8, 8], strides = [1, 1]} : vector<64x8xf32> to vector<8x8xf32>
    %c1_34 = arith.constant 1 : index
    %c1_35 = arith.constant 1 : index
    %c0_36 = arith.constant 0 : index
    %c0_37 = arith.constant 0 : index
    %56 = vector.load %arg6[%c1_34, %c1_35, %c0_36, %c0_37] : memref<3x8x8x8xf32, #tpu.memory_space<vmem>>, vector<1x1x8x8xf32>
    %57 = vector.shape_cast %56 : vector<1x1x8x8xf32> to vector<8x8xf32>
    %58 = vector.shape_cast %55 : vector<8x8xf32> to vector<1x1x8x8xf32>
    tpu.vector_store %arg6[%c1_34, %c1_35, %c0_36, %c0_37], %58 {strides = array<i32>} : memref<3x8x8x8xf32, #tpu.memory_space<vmem>>, vector<1x1x8x8xf32>,
    %59 = vector.extract_strided_slice %38 {offsets = [8, 0], sizes = [8, 8], strides = [1, 1]} : vector<64x8xf32> to vector<8x8xf32>
    %c2_38 = arith.constant 2 : index
    %c1_39 = arith.constant 1 : index
    %c0_40 = arith.constant 0 : index
    %c0_41 = arith.constant 0 : index
    %60 = vector.load %arg6[%c2_38, %c1_39, %c0_40, %c0_41] : memref<3x8x8x8xf32, #tpu.memory_space<vmem>>, vector<1x1x8x8xf32>
    %61 = vector.shape_cast %60 : vector<1x1x8x8xf32> to vector<8x8xf32>
    %62 = vector.shape_cast %59 : vector<8x8xf32> to vector<1x1x8x8xf32>
    tpu.vector_store %arg6[%c2_38, %c1_39, %c0_40, %c0_41], %62 {strides = array<i32>} : memref<3x8x8x8xf32, #tpu.memory_space<vmem>>, vector<1x1x8x8xf32>,
    %63 = vector.extract_strided_slice %36 {offsets = [16, 0], sizes = [8, 8], strides = [1, 1]} : vector<64x8xf32> to vector<8x8xf32>
    %c0_42 = arith.constant 0 : index
    %c2_43 = arith.constant 2 : index
    %c0_44 = arith.constant 0 : index
    %c0_45 = arith.constant 0 : index
    %64 = vector.load %arg6[%c0_42, %c2_43, %c0_44, %c0_45] : memref<3x8x8x8xf32, #tpu.memory_space<vmem>>, vector<1x1x8x8xf32>
    %65 = vector.shape_cast %64 : vector<1x1x8x8xf32> to vector<8x8xf32>
    %66 = vector.shape_cast %63 : vector<8x8xf32> to vector<1x1x8x8xf32>
    tpu.vector_store %arg6[%c0_42, %c2_43, %c0_44, %c0_45], %66 {strides = array<i32>} : memref<3x8x8x8xf32, #tpu.memory_space<vmem>>, vector<1x1x8x8xf32>,
    %67 = vector.extract_strided_slice %37 {offsets = [16, 0], sizes = [8, 8], strides = [1, 1]} : vector<64x8xf32> to vector<8x8xf32>
    %c1_46 = arith.constant 1 : index
    %c2_47 = arith.constant 2 : index
    %c0_48 = arith.constant 0 : index
    %c0_49 = arith.constant 0 : index
    %68 = vector.load %arg6[%c1_46, %c2_47, %c0_48, %c0_49] : memref<3x8x8x8xf32, #tpu.memory_space<vmem>>, vector<1x1x8x8xf32>
    %69 = vector.shape_cast %68 : vector<1x1x8x8xf32> to vector<8x8xf32>
    %70 = vector.shape_cast %67 : vector<8x8xf32> to vector<1x1x8x8xf32>
    tpu.vector_store %arg6[%c1_46, %c2_47, %c0_48, %c0_49], %70 {strides = array<i32>} : memref<3x8x8x8xf32, #tpu.memory_space<vmem>>, vector<1x1x8x8xf32>,
    %71 = vector.extract_strided_slice %38 {offsets = [16, 0], sizes = [8, 8], strides = [1, 1]} : vector<64x8xf32> to vector<8x8xf32>
    %c2_50 = arith.constant 2 : index
    %c2_51 = arith.constant 2 : index
    %c0_52 = arith.constant 0 : index
    %c0_53 = arith.constant 0 : index
    %72 = vector.load %arg6[%c2_50, %c2_51, %c0_52, %c0_53] : memref<3x8x8x8xf32, #tpu.memory_space<vmem>>, vector<1x1x8x8xf32>
    %73 = vector.shape_cast %72 : vector<1x1x8x8xf32> to vector<8x8xf32>
    %74 = vector.shape_cast %71 : vector<8x8xf32> to vector<1x1x8x8xf32>
    tpu.vector_store %arg6[%c2_50, %c2_51, %c0_52, %c0_53], %74 {strides = array<i32>} : memref<3x8x8x8xf32, #tpu.memory_space<vmem>>, vector<1x1x8x8xf32>,
    %75 = vector.extract_strided_slice %36 {offsets = [24, 0], sizes = [8, 8], strides = [1, 1]} : vector<64x8xf32> to vector<8x8xf32>
    %c0_54 = arith.constant 0 : index
    %c3_55 = arith.constant 3 : index
    %c0_56 = arith.constant 0 : index
    %c0_57 = arith.constant 0 : index
    %76 = vector.load %arg6[%c0_54, %c3_55, %c0_56, %c0_57] : memref<3x8x8x8xf32, #tpu.memory_space<vmem>>, vector<1x1x8x8xf32>
    %77 = vector.shape_cast %76 : vector<1x1x8x8xf32> to vector<8x8xf32>
    %78 = vector.shape_cast %75 : vector<8x8xf32> to vector<1x1x8x8xf32>
    tpu.vector_store %arg6[%c0_54, %c3_55, %c0_56, %c0_57], %78 {strides = array<i32>} : memref<3x8x8x8xf32, #tpu.memory_space<vmem>>, vector<1x1x8x8xf32>,
    %79 = vector.extract_strided_slice %37 {offsets = [24, 0], sizes = [8, 8], strides = [1, 1]} : vector<64x8xf32> to vector<8x8xf32>
    %c1_58 = arith.constant 1 : index
    %c3_59 = arith.constant 3 : index
    %c0_60 = arith.constant 0 : index
    %c0_61 = arith.constant 0 : index
    %80 = vector.load %arg6[%c1_58, %c3_59, %c0_60, %c0_61] : memref<3x8x8x8xf32, #tpu.memory_space<vmem>>, vector<1x1x8x8xf32>
    %81 = vector.shape_cast %80 : vector<1x1x8x8xf32> to vector<8x8xf32>
    %82 = vector.shape_cast %79 : vector<8x8xf32> to vector<1x1x8x8xf32>
    tpu.vector_store %arg6[%c1_58, %c3_59, %c0_60, %c0_61], %82 {strides = array<i32>} : memref<3x8x8x8xf32, #tpu.memory_space<vmem>>, vector<1x1x8x8xf32>,
    %83 = vector.extract_strided_slice %38 {offsets = [24, 0], sizes = [8, 8], strides = [1, 1]} : vector<64x8xf32> to vector<8x8xf32>
    %c2_62 = arith.constant 2 : index
    %c3_63 = arith.constant 3 : index
    %c0_64 = arith.constant 0 : index
    %c0_65 = arith.constant 0 : index
    %84 = vector.load %arg6[%c2_62, %c3_63, %c0_64, %c0_65] : memref<3x8x8x8xf32, #tpu.memory_space<vmem>>, vector<1x1x8x8xf32>
    %85 = vector.shape_cast %84 : vector<1x1x8x8xf32> to vector<8x8xf32>
    %86 = vector.shape_cast %83 : vector<8x8xf32> to vector<1x1x8x8xf32>
    tpu.vector_store %arg6[%c2_62, %c3_63, %c0_64, %c0_65], %86 {strides = array<i32>} : memref<3x8x8x8xf32, #tpu.memory_space<vmem>>, vector<1x1x8x8xf32>,
    %87 = vector.extract_strided_slice %36 {offsets = [32, 0], sizes = [8, 8], strides = [1, 1]} : vector<64x8xf32> to vector<8x8xf32>
    %c0_66 = arith.constant 0 : index
    %c4 = arith.constant 4 : index
    %c0_67 = arith.constant 0 : index
    %c0_68 = arith.constant 0 : index
    %88 = vector.load %arg6[%c0_66, %c4, %c0_67, %c0_68] : memref<3x8x8x8xf32, #tpu.memory_space<vmem>>, vector<1x1x8x8xf32>
    %89 = vector.shape_cast %88 : vector<1x1x8x8xf32> to vector<8x8xf32>
    %90 = vector.shape_cast %87 : vector<8x8xf32> to vector<1x1x8x8xf32>
    tpu.vector_store %arg6[%c0_66, %c4, %c0_67, %c0_68], %90 {strides = array<i32>} : memref<3x8x8x8xf32, #tpu.memory_space<vmem>>, vector<1x1x8x8xf32>,
    %91 = vector.extract_strided_slice %37 {offsets = [32, 0], sizes = [8, 8], strides = [1, 1]} : vector<64x8xf32> to vector<8x8xf32>
    %c1_69 = arith.constant 1 : index
    %c4_70 = arith.constant 4 : index
    %c0_71 = arith.constant 0 : index
    %c0_72 = arith.constant 0 : index
    %92 = vector.load %arg6[%c1_69, %c4_70, %c0_71, %c0_72] : memref<3x8x8x8xf32, #tpu.memory_space<vmem>>, vector<1x1x8x8xf32>
    %93 = vector.shape_cast %92 : vector<1x1x8x8xf32> to vector<8x8xf32>
    %94 = vector.shape_cast %91 : vector<8x8xf32> to vector<1x1x8x8xf32>
    tpu.vector_store %arg6[%c1_69, %c4_70, %c0_71, %c0_72], %94 {strides = array<i32>} : memref<3x8x8x8xf32, #tpu.memory_space<vmem>>, vector<1x1x8x8xf32>,
    %95 = vector.extract_strided_slice %38 {offsets = [32, 0], sizes = [8, 8], strides = [1, 1]} : vector<64x8xf32> to vector<8x8xf32>
    %c2_73 = arith.constant 2 : index
    %c4_74 = arith.constant 4 : index
    %c0_75 = arith.constant 0 : index
    %c0_76 = arith.constant 0 : index
    %96 = vector.load %arg6[%c2_73, %c4_74, %c0_75, %c0_76] : memref<3x8x8x8xf32, #tpu.memory_space<vmem>>, vector<1x1x8x8xf32>
    %97 = vector.shape_cast %96 : vector<1x1x8x8xf32> to vector<8x8xf32>
    %98 = vector.shape_cast %95 : vector<8x8xf32> to vector<1x1x8x8xf32>
    tpu.vector_store %arg6[%c2_73, %c4_74, %c0_75, %c0_76], %98 {strides = array<i32>} : memref<3x8x8x8xf32, #tpu.memory_space<vmem>>, vector<1x1x8x8xf32>,
    %99 = vector.extract_strided_slice %36 {offsets = [40, 0], sizes = [8, 8], strides = [1, 1]} : vector<64x8xf32> to vector<8x8xf32>
    %c0_77 = arith.constant 0 : index
    %c5 = arith.constant 5 : index
    %c0_78 = arith.constant 0 : index
    %c0_79 = arith.constant 0 : index
    %100 = vector.load %arg6[%c0_77, %c5, %c0_78, %c0_79] : memref<3x8x8x8xf32, #tpu.memory_space<vmem>>, vector<1x1x8x8xf32>
    %101 = vector.shape_cast %100 : vector<1x1x8x8xf32> to vector<8x8xf32>
    %102 = vector.shape_cast %99 : vector<8x8xf32> to vector<1x1x8x8xf32>
    tpu.vector_store %arg6[%c0_77, %c5, %c0_78, %c0_79], %102 {strides = array<i32>} : memref<3x8x8x8xf32, #tpu.memory_space<vmem>>, vector<1x1x8x8xf32>,
    %103 = vector.extract_strided_slice %37 {offsets = [40, 0], sizes = [8, 8], strides = [1, 1]} : vector<64x8xf32> to vector<8x8xf32>
    %c1_80 = arith.constant 1 : index
    %c5_81 = arith.constant 5 : index
    %c0_82 = arith.constant 0 : index
    %c0_83 = arith.constant 0 : index
    %104 = vector.load %arg6[%c1_80, %c5_81, %c0_82, %c0_83] : memref<3x8x8x8xf32, #tpu.memory_space<vmem>>, vector<1x1x8x8xf32>
    %105 = vector.shape_cast %104 : vector<1x1x8x8xf32> to vector<8x8xf32>
    %106 = vector.shape_cast %103 : vector<8x8xf32> to vector<1x1x8x8xf32>
    tpu.vector_store %arg6[%c1_80, %c5_81, %c0_82, %c0_83], %106 {strides = array<i32>} : memref<3x8x8x8xf32, #tpu.memory_space<vmem>>, vector<1x1x8x8xf32>,
    %107 = vector.extract_strided_slice %38 {offsets = [40, 0], sizes = [8, 8], strides = [1, 1]} : vector<64x8xf32> to vector<8x8xf32>
    %c2_84 = arith.constant 2 : index
    %c5_85 = arith.constant 5 : index
    %c0_86 = arith.constant 0 : index
    %c0_87 = arith.constant 0 : index
    %108 = vector.load %arg6[%c2_84, %c5_85, %c0_86, %c0_87] : memref<3x8x8x8xf32, #tpu.memory_space<vmem>>, vector<1x1x8x8xf32>
    %109 = vector.shape_cast %108 : vector<1x1x8x8xf32> to vector<8x8xf32>
    %110 = vector.shape_cast %107 : vector<8x8xf32> to vector<1x1x8x8xf32>
    tpu.vector_store %arg6[%c2_84, %c5_85, %c0_86, %c0_87], %110 {strides = array<i32>} : memref<3x8x8x8xf32, #tpu.memory_space<vmem>>, vector<1x1x8x8xf32>,
    %111 = vector.extract_strided_slice %36 {offsets = [48, 0], sizes = [8, 8], strides = [1, 1]} : vector<64x8xf32> to vector<8x8xf32>
    %c0_88 = arith.constant 0 : index
    %c6 = arith.constant 6 : index
    %c0_89 = arith.constant 0 : index
    %c0_90 = arith.constant 0 : index
    %112 = vector.load %arg6[%c0_88, %c6, %c0_89, %c0_90] : memref<3x8x8x8xf32, #tpu.memory_space<vmem>>, vector<1x1x8x8xf32>
    %113 = vector.shape_cast %112 : vector<1x1x8x8xf32> to vector<8x8xf32>
    %114 = vector.shape_cast %111 : vector<8x8xf32> to vector<1x1x8x8xf32>
    tpu.vector_store %arg6[%c0_88, %c6, %c0_89, %c0_90], %114 {strides = array<i32>} : memref<3x8x8x8xf32, #tpu.memory_space<vmem>>, vector<1x1x8x8xf32>,
    %115 = vector.extract_strided_slice %37 {offsets = [48, 0], sizes = [8, 8], strides = [1, 1]} : vector<64x8xf32> to vector<8x8xf32>
    %c1_91 = arith.constant 1 : index
    %c6_92 = arith.constant 6 : index
    %c0_93 = arith.constant 0 : index
    %c0_94 = arith.constant 0 : index
    %116 = vector.load %arg6[%c1_91, %c6_92, %c0_93, %c0_94] : memref<3x8x8x8xf32, #tpu.memory_space<vmem>>, vector<1x1x8x8xf32>
    %117 = vector.shape_cast %116 : vector<1x1x8x8xf32> to vector<8x8xf32>
    %118 = vector.shape_cast %115 : vector<8x8xf32> to vector<1x1x8x8xf32>
    tpu.vector_store %arg6[%c1_91, %c6_92, %c0_93, %c0_94], %118 {strides = array<i32>} : memref<3x8x8x8xf32, #tpu.memory_space<vmem>>, vector<1x1x8x8xf32>,
    %119 = vector.extract_strided_slice %38 {offsets = [48, 0], sizes = [8, 8], strides = [1, 1]} : vector<64x8xf32> to vector<8x8xf32>
    %c2_95 = arith.constant 2 : index
    %c6_96 = arith.constant 6 : index
    %c0_97 = arith.constant 0 : index
    %c0_98 = arith.constant 0 : index
    %120 = vector.load %arg6[%c2_95, %c6_96, %c0_97, %c0_98] : memref<3x8x8x8xf32, #tpu.memory_space<vmem>>, vector<1x1x8x8xf32>
    %121 = vector.shape_cast %120 : vector<1x1x8x8xf32> to vector<8x8xf32>
    %122 = vector.shape_cast %119 : vector<8x8xf32> to vector<1x1x8x8xf32>
    tpu.vector_store %arg6[%c2_95, %c6_96, %c0_97, %c0_98], %122 {strides = array<i32>} : memref<3x8x8x8xf32, #tpu.memory_space<vmem>>, vector<1x1x8x8xf32>,
    %123 = vector.extract_strided_slice %36 {offsets = [56, 0], sizes = [8, 8], strides = [1, 1]} : vector<64x8xf32> to vector<8x8xf32>
    %c0_99 = arith.constant 0 : index
    %c7 = arith.constant 7 : index
    %c0_100 = arith.constant 0 : index
    %c0_101 = arith.constant 0 : index
    %124 = vector.load %arg6[%c0_99, %c7, %c0_100, %c0_101] : memref<3x8x8x8xf32, #tpu.memory_space<vmem>>, vector<1x1x8x8xf32>
    %125 = vector.shape_cast %124 : vector<1x1x8x8xf32> to vector<8x8xf32>
    %126 = vector.shape_cast %123 : vector<8x8xf32> to vector<1x1x8x8xf32>
    tpu.vector_store %arg6[%c0_99, %c7, %c0_100, %c0_101], %126 {strides = array<i32>} : memref<3x8x8x8xf32, #tpu.memory_space<vmem>>, vector<1x1x8x8xf32>,
    %127 = vector.extract_strided_slice %37 {offsets = [56, 0], sizes = [8, 8], strides = [1, 1]} : vector<64x8xf32> to vector<8x8xf32>
    %c1_102 = arith.constant 1 : index
    %c7_103 = arith.constant 7 : index
    %c0_104 = arith.constant 0 : index
    %c0_105 = arith.constant 0 : index
    %128 = vector.load %arg6[%c1_102, %c7_103, %c0_104, %c0_105] : memref<3x8x8x8xf32, #tpu.memory_space<vmem>>, vector<1x1x8x8xf32>
    %129 = vector.shape_cast %128 : vector<1x1x8x8xf32> to vector<8x8xf32>
    %130 = vector.shape_cast %127 : vector<8x8xf32> to vector<1x1x8x8xf32>
    tpu.vector_store %arg6[%c1_102, %c7_103, %c0_104, %c0_105], %130 {strides = array<i32>} : memref<3x8x8x8xf32, #tpu.memory_space<vmem>>, vector<1x1x8x8xf32>,
    %131 = vector.extract_strided_slice %38 {offsets = [56, 0], sizes = [8, 8], strides = [1, 1]} : vector<64x8xf32> to vector<8x8xf32>
    %c2_106 = arith.constant 2 : index
    %c7_107 = arith.constant 7 : index
    %c0_108 = arith.constant 0 : index
    %c0_109 = arith.constant 0 : index
    %132 = vector.load %arg6[%c2_106, %c7_107, %c0_108, %c0_109] : memref<3x8x8x8xf32, #tpu.memory_space<vmem>>, vector<1x1x8x8xf32>
    %133 = vector.shape_cast %132 : vector<1x1x8x8xf32> to vector<8x8xf32>
    %134 = vector.shape_cast %131 : vector<8x8xf32> to vector<1x1x8x8xf32>
    tpu.vector_store %arg6[%c2_106, %c7_107, %c0_108, %c0_109], %134 {strides = array<i32>} : memref<3x8x8x8xf32, #tpu.memory_space<vmem>>, vector<1x1x8x8xf32>,
    %c0_110 = arith.constant 0 : index
    %c0_111 = arith.constant 0 : index
    %c0_112 = arith.constant 0 : index
    %c0_113 = arith.constant 0 : index
    %135 = vector.load %arg6[%c0_110, %c0_111, %c0_112, %c0_113] : memref<3x8x8x8xf32, #tpu.memory_space<vmem>>, vector<1x8x8x8xf32>
    %136 = vector.shape_cast %135 : vector<1x8x8x8xf32> to vector<8x8x8xf32>
    %c1_114 = arith.constant 1 : index
    %c0_115 = arith.constant 0 : index
    %c0_116 = arith.constant 0 : index
    %c0_117 = arith.constant 0 : index
    %137 = vector.load %arg6[%c1_114, %c0_115, %c0_116, %c0_117] : memref<3x8x8x8xf32, #tpu.memory_space<vmem>>, vector<1x8x8x8xf32>
    %138 = vector.shape_cast %137 : vector<1x8x8x8xf32> to vector<8x8x8xf32>
    %c2_118 = arith.constant 2 : index
    %c0_119 = arith.constant 0 : index
    %c0_120 = arith.constant 0 : index
    %c0_121 = arith.constant 0 : index
    %139 = vector.load %arg6[%c2_118, %c0_119, %c0_120, %c0_121] : memref<3x8x8x8xf32, #tpu.memory_space<vmem>>, vector<1x8x8x8xf32>
    %140 = vector.shape_cast %139 : vector<1x8x8x8xf32> to vector<8x8x8xf32>
    "tpu.trace_start"() <{level = 10 : i32, message = "hqd,hkd->hqk"}> : () -> ()
    %cst_122 = arith.constant dense<0.000000e+00> : vector<8x8x8xf32>
    %141 = tpu.matmul %136, %138, %cst_122 {dimension_numbers = #tpu.dot_dimension_numbers<[2], [2], [1], [1], [0, 0, 0, 1, 1, 1], [0], [0]>} : vector<8x8x8xf32>, vector<8x8x8xf32>, vector<8x8x8xf32> -> vector<8x8x8xf32>
    "tpu.trace_stop"() : () -> ()
    %cst_123 = arith.constant 0.176776692 : f32
    %142 = vector.broadcast %cst_123 : f32 to vector<8x8x8xf32>
    %143 = arith.mulf %141, %142 : vector<8x8x8xf32>
    %c0_124 = arith.constant 0 : index
    %c0_125 = arith.constant 0 : index
    %c0_126 = arith.constant 0 : index
    %c0_127 = arith.constant 0 : index
    %144 = vector.load %arg4[%c0_124, %c0_125, %c0_126, %c0_127] : memref<4x8x16x8xf32, #tpu.memory_space<vmem>>, vector<4x8x16x8xf32>
    %145 = vector.extract_strided_slice %143 {offsets = [0, 0, 0], sizes = [4, 8, 8], strides = [1, 1, 1]} : vector<8x8x8xf32> to vector<4x8x8xf32>
    %cst_128 = arith.constant dense<0xFF800000> : vector<8x8xf32>
    %146 = vector.multi_reduction <maximumf>, %145, %cst_128 [0] : vector<4x8x8xf32> to vector<8x8xf32>
    %147 = vector.shape_cast %146 : vector<8x8xf32> to vector<1x8x8xf32>
    %148 = vector.broadcast %147 : vector<1x8x8xf32> to vector<4x8x8xf32>
    %149 = arith.subf %145, %148 : vector<4x8x8xf32>
    %150 = math.exp %149 : vector<4x8x8xf32>
    %cst_129 = arith.constant dense<0.000000e+00> : vector<8x8xf32>
    %151 = vector.multi_reduction <add>, %150, %cst_129 [0] : vector<4x8x8xf32> to vector<8x8xf32>
    %152 = vector.shape_cast %151 : vector<8x8xf32> to vector<1x8x8xf32>
    %153 = vector.broadcast %152 : vector<1x8x8xf32> to vector<4x8x8xf32>
    %154 = arith.divf %150, %153 : vector<4x8x8xf32>
    %155 = vector.extract_strided_slice %140 {offsets = [0, 0, 0], sizes = [4, 8, 8], strides = [1, 1, 1]} : vector<8x8x8xf32> to vector<4x8x8xf32>
    "tpu.trace_start"() <{level = 10 : i32, message = "hqk,hkd->hqd"}> : () -> ()
    %cst_130 = arith.constant dense<0.000000e+00> : vector<4x8x8xf32>
    %156 = tpu.matmul %154, %155, %cst_130 {dimension_numbers = #tpu.dot_dimension_numbers<[2], [1], [1], [2], [0, 0, 0, 1, 1, 2], [0], [0]>} : vector<4x8x8xf32>, vector<4x8x8xf32>, vector<4x8x8xf32> -> vector<4x8x8xf32>
    "tpu.trace_stop"() : () -> ()
    %157 = vector.extract_strided_slice %144 {offsets = [0, 0, 0, 0], sizes = [1, 4, 16, 8], strides = [1, 1, 1, 1]} : vector<4x8x16x8xf32> to vector<1x4x16x8xf32>
    %158 = vector.shape_cast %157 : vector<1x4x16x8xf32> to vector<4x16x8xf32>
    "tpu.trace_start"() <{level = 10 : i32, message = "hrs,hsd->hrd"}> : () -> ()
    %cst_131 = arith.constant dense<0.000000e+00> : vector<4x16x8xf32>
    %159 = tpu.matmul %158, %156, %cst_131 {dimension_numbers = #tpu.dot_dimension_numbers<[2], [1], [1], [2], [0, 0, 0, 1, 1, 2], [0], [0]>} : vector<4x16x8xf32>, vector<4x8x8xf32>, vector<4x16x8xf32> -> vector<4x16x8xf32>
    "tpu.trace_stop"() : () -> ()
    %cst_132 = arith.constant dense<0.000000e+00> : vector<16x8xf32>
    %160 = vector.multi_reduction <add>, %159, %cst_132 [0] : vector<4x16x8xf32> to vector<16x8xf32>
    %161 = vector.extract_strided_slice %144 {offsets = [1, 0, 0, 0], sizes = [1, 4, 16, 8], strides = [1, 1, 1, 1]} : vector<4x8x16x8xf32> to vector<1x4x16x8xf32>
    %162 = vector.shape_cast %161 : vector<1x4x16x8xf32> to vector<4x16x8xf32>
    "tpu.trace_start"() <{level = 10 : i32, message = "hrs,hsd->hrd"}> : () -> ()
    %cst_133 = arith.constant dense<0.000000e+00> : vector<4x16x8xf32>
    %163 = tpu.matmul %162, %156, %cst_133 {dimension_numbers = #tpu.dot_dimension_numbers<[2], [1], [1], [2], [0, 0, 0, 1, 1, 2], [0], [0]>} : vector<4x16x8xf32>, vector<4x8x8xf32>, vector<4x16x8xf32> -> vector<4x16x8xf32>
    "tpu.trace_stop"() : () -> ()
    %cst_134 = arith.constant dense<0.000000e+00> : vector<16x8xf32>
    %164 = vector.multi_reduction <add>, %163, %cst_134 [0] : vector<4x16x8xf32> to vector<16x8xf32>
    %165 = vector.extract_strided_slice %144 {offsets = [2, 0, 0, 0], sizes = [1, 4, 16, 8], strides = [1, 1, 1, 1]} : vector<4x8x16x8xf32> to vector<1x4x16x8xf32>
    %166 = vector.shape_cast %165 : vector<1x4x16x8xf32> to vector<4x16x8xf32>
    "tpu.trace_start"() <{level = 10 : i32, message = "hrs,hsd->hrd"}> : () -> ()
    %cst_135 = arith.constant dense<0.000000e+00> : vector<4x16x8xf32>
    %167 = tpu.matmul %166, %156, %cst_135 {dimension_numbers = #tpu.dot_dimension_numbers<[2], [1], [1], [2], [0, 0, 0, 1, 1, 2], [0], [0]>} : vector<4x16x8xf32>, vector<4x8x8xf32>, vector<4x16x8xf32> -> vector<4x16x8xf32>
    "tpu.trace_stop"() : () -> ()
    %cst_136 = arith.constant dense<0.000000e+00> : vector<16x8xf32>
    %168 = vector.multi_reduction <add>, %167, %cst_136 [0] : vector<4x16x8xf32> to vector<16x8xf32>
    %169 = vector.extract_strided_slice %144 {offsets = [3, 0, 0, 0], sizes = [1, 4, 16, 8], strides = [1, 1, 1, 1]} : vector<4x8x16x8xf32> to vector<1x4x16x8xf32>
    %170 = vector.shape_cast %169 : vector<1x4x16x8xf32> to vector<4x16x8xf32>
    "tpu.trace_start"() <{level = 10 : i32, message = "hrs,hsd->hrd"}> : () -> ()
    %cst_137 = arith.constant dense<0.000000e+00> : vector<4x16x8xf32>
    %171 = tpu.matmul %170, %156, %cst_137 {dimension_numbers = #tpu.dot_dimension_numbers<[2], [1], [1], [2], [0, 0, 0, 1, 1, 2], [0], [0]>} : vector<4x16x8xf32>, vector<4x8x8xf32>, vector<4x16x8xf32> -> vector<4x16x8xf32>
    "tpu.trace_stop"() : () -> ()
    %cst_138 = arith.constant dense<0.000000e+00> : vector<16x8xf32>
    %172 = vector.multi_reduction <add>, %171, %cst_138 [0] : vector<4x16x8xf32> to vector<16x8xf32>
    %173 = vector.extract_strided_slice %143 {offsets = [4, 0, 0], sizes = [4, 8, 8], strides = [1, 1, 1]} : vector<8x8x8xf32> to vector<4x8x8xf32>
    %cst_139 = arith.constant dense<0xFF800000> : vector<8x8xf32>
    %174 = vector.multi_reduction <maximumf>, %173, %cst_139 [0] : vector<4x8x8xf32> to vector<8x8xf32>
    %175 = vector.shape_cast %174 : vector<8x8xf32> to vector<1x8x8xf32>
    %176 = vector.broadcast %175 : vector<1x8x8xf32> to vector<4x8x8xf32>
    %177 = arith.subf %173, %176 : vector<4x8x8xf32>
    %178 = math.exp %177 : vector<4x8x8xf32>
    %cst_140 = arith.constant dense<0.000000e+00> : vector<8x8xf32>
    %179 = vector.multi_reduction <add>, %178, %cst_140 [0] : vector<4x8x8xf32> to vector<8x8xf32>
    %180 = vector.shape_cast %179 : vector<8x8xf32> to vector<1x8x8xf32>
    %181 = vector.broadcast %180 : vector<1x8x8xf32> to vector<4x8x8xf32>
    %182 = arith.divf %178, %181 : vector<4x8x8xf32>
    %183 = vector.extract_strided_slice %140 {offsets = [4, 0, 0], sizes = [4, 8, 8], strides = [1, 1, 1]} : vector<8x8x8xf32> to vector<4x8x8xf32>
    "tpu.trace_start"() <{level = 10 : i32, message = "hqk,hkd->hqd"}> : () -> ()
    %cst_141 = arith.constant dense<0.000000e+00> : vector<4x8x8xf32>
    %184 = tpu.matmul %182, %183, %cst_141 {dimension_numbers = #tpu.dot_dimension_numbers<[2], [1], [1], [2], [0, 0, 0, 1, 1, 2], [0], [0]>} : vector<4x8x8xf32>, vector<4x8x8xf32>, vector<4x8x8xf32> -> vector<4x8x8xf32>
    "tpu.trace_stop"() : () -> ()
    %185 = vector.extract_strided_slice %144 {offsets = [0, 4, 0, 0], sizes = [1, 4, 16, 8], strides = [1, 1, 1, 1]} : vector<4x8x16x8xf32> to vector<1x4x16x8xf32>
    %186 = vector.shape_cast %185 : vector<1x4x16x8xf32> to vector<4x16x8xf32>
    "tpu.trace_start"() <{level = 10 : i32, message = "hrs,hsd->hrd"}> : () -> ()
    %cst_142 = arith.constant dense<0.000000e+00> : vector<4x16x8xf32>
    %187 = tpu.matmul %186, %184, %cst_142 {dimension_numbers = #tpu.dot_dimension_numbers<[2], [1], [1], [2], [0, 0, 0, 1, 1, 2], [0], [0]>} : vector<4x16x8xf32>, vector<4x8x8xf32>, vector<4x16x8xf32> -> vector<4x16x8xf32>
    "tpu.trace_stop"() : () -> ()
    %cst_143 = arith.constant dense<0.000000e+00> : vector<16x8xf32>
    %188 = vector.multi_reduction <add>, %187, %cst_143 [0] : vector<4x16x8xf32> to vector<16x8xf32>
    %189 = arith.addf %160, %188 : vector<16x8xf32>
    %190 = vector.extract_strided_slice %144 {offsets = [1, 4, 0, 0], sizes = [1, 4, 16, 8], strides = [1, 1, 1, 1]} : vector<4x8x16x8xf32> to vector<1x4x16x8xf32>
    %191 = vector.shape_cast %190 : vector<1x4x16x8xf32> to vector<4x16x8xf32>
    "tpu.trace_start"() <{level = 10 : i32, message = "hrs,hsd->hrd"}> : () -> ()
    %cst_144 = arith.constant dense<0.000000e+00> : vector<4x16x8xf32>
    %192 = tpu.matmul %191, %184, %cst_144 {dimension_numbers = #tpu.dot_dimension_numbers<[2], [1], [1], [2], [0, 0, 0, 1, 1, 2], [0], [0]>} : vector<4x16x8xf32>, vector<4x8x8xf32>, vector<4x16x8xf32> -> vector<4x16x8xf32>
    "tpu.trace_stop"() : () -> ()
    %cst_145 = arith.constant dense<0.000000e+00> : vector<16x8xf32>
    %193 = vector.multi_reduction <add>, %192, %cst_145 [0] : vector<4x16x8xf32> to vector<16x8xf32>
    %194 = arith.addf %164, %193 : vector<16x8xf32>
    %195 = vector.extract_strided_slice %144 {offsets = [2, 4, 0, 0], sizes = [1, 4, 16, 8], strides = [1, 1, 1, 1]} : vector<4x8x16x8xf32> to vector<1x4x16x8xf32>
    %196 = vector.shape_cast %195 : vector<1x4x16x8xf32> to vector<4x16x8xf32>
    "tpu.trace_start"() <{level = 10 : i32, message = "hrs,hsd->hrd"}> : () -> ()
    %cst_146 = arith.constant dense<0.000000e+00> : vector<4x16x8xf32>
    %197 = tpu.matmul %196, %184, %cst_146 {dimension_numbers = #tpu.dot_dimension_numbers<[2], [1], [1], [2], [0, 0, 0, 1, 1, 2], [0], [0]>} : vector<4x16x8xf32>, vector<4x8x8xf32>, vector<4x16x8xf32> -> vector<4x16x8xf32>
    "tpu.trace_stop"() : () -> ()
    %cst_147 = arith.constant dense<0.000000e+00> : vector<16x8xf32>
    %198 = vector.multi_reduction <add>, %197, %cst_147 [0] : vector<4x16x8xf32> to vector<16x8xf32>
    %199 = arith.addf %168, %198 : vector<16x8xf32>
    %200 = vector.extract_strided_slice %144 {offsets = [3, 4, 0, 0], sizes = [1, 4, 16, 8], strides = [1, 1, 1, 1]} : vector<4x8x16x8xf32> to vector<1x4x16x8xf32>
    %201 = vector.shape_cast %200 : vector<1x4x16x8xf32> to vector<4x16x8xf32>
    "tpu.trace_start"() <{level = 10 : i32, message = "hrs,hsd->hrd"}> : () -> ()
    %cst_148 = arith.constant dense<0.000000e+00> : vector<4x16x8xf32>
    %202 = tpu.matmul %201, %184, %cst_148 {dimension_numbers = #tpu.dot_dimension_numbers<[2], [1], [1], [2], [0, 0, 0, 1, 1, 2], [0], [0]>} : vector<4x16x8xf32>, vector<4x8x8xf32>, vector<4x16x8xf32> -> vector<4x16x8xf32>
    "tpu.trace_stop"() : () -> ()
    %cst_149 = arith.constant dense<0.000000e+00> : vector<16x8xf32>
    %203 = vector.multi_reduction <add>, %202, %cst_149 [0] : vector<4x16x8xf32> to vector<16x8xf32>
    %204 = arith.addf %172, %203 : vector<16x8xf32>
    %205 = tpu.concatenate %189, %194, %199, %204 in 1 : vector<16x8xf32>, vector<16x8xf32>, vector<16x8xf32>, vector<16x8xf32> -> vector<16x32xf32>
    %c0_150 = arith.constant 0 : index
    %c0_151 = arith.constant 0 : index
    %206 = vector.load %arg5[%c0_150, %c0_151] : memref<16x32xf32, #tpu.memory_space<vmem>>, vector<16x32xf32>
    tpu.vector_store %arg5[%c0_150, %c0_151], %205 {strides = array<i32>} : memref<16x32xf32, #tpu.memory_space<vmem>>, vector<16x32xf32>,
    return
  }
}

</mosaic_0001>

<llo_original>
// kernel: tpu_custom_call.1
$region0: #{tpu_custom_call.1}
  #allocation0 [shape = 'u32[]', space=smem, size = 0x4, offset = 0x4, fixed_abs, tag = 'smem constant byte address 0x4 - core index']
  #allocation1 [shape = 'u32[144,128]{1,0:T(1,128)}', space=vmem, size = 0x12000, scoped, tag = 'internal scratch']
  #allocation2 [shape = 'f32[3,8,8,8]{3,2,1,0:T(8,128)}', space=vmem, size = 0x18000, scoped, tag = 'scratch operand']
  %s0 = inlined_call_operand.vmem [shape: f32[16,16], index: 0, kind: input, shape index: {}]
  %s1 = inlined_call_operand.vmem [shape: f32[16,96], index: 1, kind: input, shape index: {}]
  %s2 = inlined_call_operand.vmem [shape: f32[1,96], index: 2, kind: input, shape index: {}]
  %s3 = inlined_call_operand.vmem [shape: f32[4,64,16], index: 3, kind: input, shape index: {}]
  %s4 = inlined_call_operand.vmem [shape: f32[4,8,16,8], index: 4, kind: input, shape index: {}]
  %s5 = inlined_call_operand.hbm [shape: f32[16,32], index: 5, kind: output, shape index: {}]
  %s6 = sld [smem:[#allocation0]]
  $region30: #{tpu_custom_call.1} parent=0
    _
  %s8 = ssub.s32 1, %s6
  %s9 = scalar_select 0, %s8, %s6
  $region1: #{tpu_custom_call.1} parent=0
    #allocation3 [shape = 'u8[8192]{0}', space=vmem, size = 0x2000, scoped, tag = 'output window, operand 0, single buffered']
    #allocation4 [shape = 's32[1]{0}', space=sflag, size = 0x4, scoped, tag = 'scoped memory for tpu_custom_call.1']
    %10 = vsyncpa [#allocation4], 0
    // Predicated region
    $region2: #{tpu_custom_call.1} parent=1 // pred_check
      _
    $region3: #{tpu_custom_call.1} parent=1 // pred_check_branch
      %12 = sbr.rel (0) target = $region5
    $region4: #{tpu_custom_call.1} parent=1 // pred_region
      _
    $region5: #{tpu_custom_call.1} parent=1 // pred_fallthru
      _
    // Predicated region
    $region6: #{tpu_custom_call.1} parent=1 // pred_check
      _
    $region7: #{tpu_custom_call.1} parent=1 // pred_check_branch
      %14 = sbr.rel (0) target = $region9
    $region8: #{tpu_custom_call.1} parent=1 // pred_region
      _
    $region9: #{tpu_custom_call.1} parent=1 // pred_fallthru
      _
    // Predicated region
    $region10: #{tpu_custom_call.1} parent=1 // pred_check
      _
    $region11: #{tpu_custom_call.1} parent=1 // pred_check_branch
      %16 = sbr.rel (0) target = $region13
    $region12: #{tpu_custom_call.1} parent=1 // pred_region
      _
    $region13: #{tpu_custom_call.1} parent=1 // pred_fallthru
      _
    // Predicated region
    $region14: #{tpu_custom_call.1} parent=1 // pred_check
      _
    $region15: #{tpu_custom_call.1} parent=1 // pred_check_branch
      %18 = sbr.rel (0) target = $region17
    $region16: #{tpu_custom_call.1} parent=1 // pred_region
      _
    $region17: #{tpu_custom_call.1} parent=1 // pred_fallthru
      _
    // Predicated region
    $region18: #{tpu_custom_call.1} parent=1 // pred_check
      _
    $region19: #{tpu_custom_call.1} parent=1 // pred_check_branch
      %20 = sbr.rel (0) target = $region21
    $region20: #{tpu_custom_call.1} parent=1 // pred_region
      _
    $region21: #{tpu_custom_call.1} parent=1 // pred_fallthru
      _
    %v21 = vld [vmem:[%s0] sm:$0xff]
    %v22 = vld [vmem:[%s0 + $0x8] sm:$0xff]
    %v23 = vld [vmem:[%s1] sm:$0xff]
    %v24 = vld [vmem:[%s1 + $0x8] sm:$0xff]
    %v25 = vld [vmem:[%s2] sm:$0x1]
    %v27 = vlaneseq
    %v28 = vshrl.u32 %v27, 7
    %v29 = vsub.s32 0, %v28
    %v30 = vrot.slane %v25, %v29
    %vm32 = vcmask 130048
    %v34 = vsel %vm32, %v21, 0
    %v37 = vsel %vm32, %v22, 0
    %39 = vmatprep.subr.mxu0 0.0
    %40 = vmatpush1.msra.mxu0 %v23
    %41 = vmatprep.subr.mxu0 0.0
    %42 = vmatpush1.msra.mxu0 %v24
    %43 = vmatprep.subr.mxu0 0.0
    %44 = vmatpush1.msra.mxu0 0.0
    %45 = vmatprep.subr.mxu0 0.0
    %46 = vmatpush1.msra.mxu0 0.0
    %47 = vmatprep.subr.mxu0 0.0
    %48 = vmatpush1.msra.mxu0 0.0
    %49 = vmatprep.subr.mxu0 0.0
    %50 = vmatpush1.msra.mxu0 0.0
    %51 = vmatprep.subr.mxu0 0.0
    %52 = vmatpush1.msra.mxu0 0.0
    %53 = vmatprep.subr.mxu0 0.0
    %54 = vmatpush1.msra.mxu0 0.0
    %55 = vmatprep.subr.mxu0 0.0
    %56 = vmatpush1.msra.mxu0 0.0
    %57 = vmatprep.subr.mxu0 0.0
    %58 = vmatpush1.msra.mxu0 0.0
    %59 = vmatprep.subr.mxu0 0.0
    %60 = vmatpush1.msra.mxu0 0.0
    %61 = vmatprep.subr.mxu0 0.0
    %62 = vmatpush1.msra.mxu0 0.0
    %63 = vmatprep.subr.mxu0 0.0
    %64 = vmatpush1.msra.mxu0 0.0
    %65 = vmatprep.subr.mxu0 0.0
    %66 = vmatpush1.msra.mxu0 0.0
    %67 = vmatprep.subr.mxu0 0.0
    %68 = vmatpush1.msra.mxu0 0.0
    %69 = vmatprep.subr.mxu0 0.0
    %70 = vmatpush1.msra.mxu0 0.0
    %71 = vmatprep.subr.mxu0 0.0
    %72 = vmatpush1.msra.mxu0 0.0
    %73 = vmatprep.subr.mxu0 0.0
    %74 = vmatpush1.msra.mxu0 0.0
    %75 = vmatprep.subr.mxu0 0.0
    %76 = vmatpush1.msra.mxu0 0.0
    %77 = vmatprep.subr.mxu0 0.0
    %78 = vmatpush1.msra.mxu0 0.0
    %79 = vmatprep.subr.mxu0 0.0
    %80 = vmatpush1.msra.mxu0 0.0
    %81 = vmatprep.subr.mxu0 0.0
    %82 = vmatpush1.msra.mxu0 0.0
    %83 = vmatprep.subr.mxu0 0.0
    %84 = vmatpush1.msra.mxu0 0.0
    %85 = vmatprep.subr.mxu0 0.0
    %86 = vmatpush1.msra.mxu0 0.0
    %87 = vmatprep.subr.mxu0 0.0
    %88 = vmatpush1.msra.mxu0 0.0
    %89 = vmatprep.subr.mxu0 0.0
    %90 = vmatpush1.msra.mxu0 0.0
    %91 = vmatprep.subr.mxu0 0.0
    %92 = vmatpush1.msra.mxu0 0.0
    %93 = vmatprep.subr.mxu0 0.0
    %94 = vmatpush1.msra.mxu0 0.0
    %95 = vmatprep.subr.mxu0 0.0
    %96 = vmatpush1.msra.mxu0 0.0
    %97 = vmatprep.subr.mxu0 0.0
    %98 = vmatpush1.msra.mxu0 0.0
    %99 = vmatprep.subr.mxu0 0.0
    %100 = vmatpush1.msra.mxu0 0.0
    %101 = vmatprep.subr.mxu0 0.0
    %102 = vmatpush1.msra.mxu0 0.0
    %103 = vmatprep.mubr.f32.mxu0 0.0
    %104 = vmatmul.mubr.f32.gmra.mrb[0].mxu0 %v34
    %v105 = vpop.f32.mrb[0].mxu0
    %v106 = vadd.f32 %v30, %v105
    %v107 = vpop.f32.mrb[0].mxu0
    %108 = vmatprep.mubr.f32.mxu0 0.0
    %109 = vmatmul.mubr.f32.gmra.mrb[0].mxu0 %v37
    %v110 = vpop.f32.mrb[0].mxu0
    %v111 = vadd.f32 %v30, %v110
    %v112 = vpop.f32.mrb[0].mxu0
    %113 = vdwg.mxu0
    %v114 = vld [vmem:[%s3] sm:$0xff]
    %v115 = vld [vmem:[%s3 + $0x8] sm:$0xff]
    %v116 = vld [vmem:[%s3 + $0x10] sm:$0xff]
    %v117 = vld [vmem:[%s3 + $0x18] sm:$0xff]
    %v118 = vld [vmem:[%s3 + $0x20] sm:$0xff]
    %v119 = vld [vmem:[%s3 + $0x28] sm:$0xff]
    %v120 = vld [vmem:[%s3 + $0x30] sm:$0xff]
    %v121 = vld [vmem:[%s3 + $0x38] sm:$0xff]
    %v123 = vsel %vm32, %v114, 0
    %v126 = vsel %vm32, %v115, 0
    %v129 = vsel %vm32, %v116, 0
    %v132 = vsel %vm32, %v117, 0
    %v135 = vsel %vm32, %v118, 0
    %v138 = vsel %vm32, %v119, 0
    %v141 = vsel %vm32, %v120, 0
    %v144 = vsel %vm32, %v121, 0
    %146 = vmatprep.subr.mxu0 0.0
    %147 = vmatpush1.msra.mxu0 %v106
    %148 = vmatprep.subr.mxu0 0.0
    %149 = vmatpush1.msra.mxu0 %v111
    %150 = vmatprep.subr.mxu0 0.0
    %151 = vmatpush1.msra.mxu0 0.0
    %152 = vmatprep.subr.mxu0 0.0
    %153 = vmatpush1.msra.mxu0 0.0
    %154 = vmatprep.subr.mxu0 0.0
    %155 = vmatpush1.msra.mxu0 0.0
    %156 = vmatprep.subr.mxu0 0.0
    %157 = vmatpush1.msra.mxu0 0.0
    %158 = vmatprep.subr.mxu0 0.0
    %159 = vmatpush1.msra.mxu0 0.0
    %160 = vmatprep.subr.mxu0 0.0
    %161 = vmatpush1.msra.mxu0 0.0
    %162 = vmatprep.subr.mxu0 0.0
    %163 = vmatpush1.msra.mxu0 0.0
    %164 = vmatprep.subr.mxu0 0.0
    %165 = vmatpush1.msra.mxu0 0.0
    %166 = vmatprep.subr.mxu0 0.0
    %167 = vmatpush1.msra.mxu0 0.0
    %168 = vmatprep.subr.mxu0 0.0
    %169 = vmatpush1.msra.mxu0 0.0
    %170 = vmatprep.subr.mxu0 0.0
    %171 = vmatpush1.msra.mxu0 0.0
    %172 = vmatprep.subr.mxu0 0.0
    %173 = vmatpush1.msra.mxu0 0.0
    %174 = vmatprep.subr.mxu0 0.0
    %175 = vmatpush1.msra.mxu0 0.0
    %176 = vmatprep.subr.mxu0 0.0
    %177 = vmatpush1.msra.mxu0 0.0
    %178 = vmatprep.subr.mxu0 0.0
    %179 = vmatpush1.msra.mxu0 0.0
    %180 = vmatprep.subr.mxu0 0.0
    %181 = vmatpush1.msra.mxu0 0.0
    %182 = vmatprep.subr.mxu0 0.0
    %183 = vmatpush1.msra.mxu0 0.0
    %184 = vmatprep.subr.mxu0 0.0
    %185 = vmatpush1.msra.mxu0 0.0
    %186 = vmatprep.subr.mxu0 0.0
    %187 = vmatpush1.msra.mxu0 0.0
    %188 = vmatprep.subr.mxu0 0.0
    %189 = vmatpush1.msra.mxu0 0.0
    %190 = vmatprep.subr.mxu0 0.0
    %191 = vmatpush1.msra.mxu0 0.0
    %192 = vmatprep.subr.mxu0 0.0
    %193 = vmatpush1.msra.mxu0 0.0
    %194 = vmatprep.subr.mxu0 0.0
    %195 = vmatpush1.msra.mxu0 0.0
    %196 = vmatprep.subr.mxu0 0.0
    %197 = vmatpush1.msra.mxu0 0.0
    %198 = vmatprep.subr.mxu0 0.0
    %199 = vmatpush1.msra.mxu0 0.0
    %200 = vmatprep.subr.mxu0 0.0
    %201 = vmatpush1.msra.mxu0 0.0
    %202 = vmatprep.subr.mxu0 0.0
    %203 = vmatpush1.msra.mxu0 0.0
    %204 = vmatprep.subr.mxu0 0.0
    %205 = vmatpush1.msra.mxu0 0.0
    %206 = vmatprep.subr.mxu0 0.0
    %207 = vmatpush1.msra.mxu0 0.0
    %208 = vmatprep.subr.mxu0 0.0
    %209 = vmatpush1.msra.mxu0 0.0
    %210 = vmatprep.mubr.f32.mxu0 0.0
    %211 = vmatmul.mubr.f32.gmra.mrb[0].mxu0 %v123
    %v212 = vpop.f32.mrb[0].mxu0
    %v213 = vadd.f32 0.0, %v212
    %v214 = vpop.f32.mrb[0].mxu0
    %215 = vmatprep.mubr.f32.mxu0 0.0
    %216 = vmatmul.mubr.f32.gmra.mrb[0].mxu0 %v126
    %v217 = vpop.f32.mrb[0].mxu0
    %v218 = vadd.f32 0.0, %v217
    %v219 = vpop.f32.mrb[0].mxu0
    %220 = vmatprep.mubr.f32.mxu0 0.0
    %221 = vmatmul.mubr.f32.gmra.mrb[0].mxu0 %v129
    %v222 = vpop.f32.mrb[0].mxu0
    %v223 = vadd.f32 0.0, %v222
    %v224 = vpop.f32.mrb[0].mxu0
    %225 = vmatprep.mubr.f32.mxu0 0.0
    %226 = vmatmul.mubr.f32.gmra.mrb[0].mxu0 %v132
    %v227 = vpop.f32.mrb[0].mxu0
    %v228 = vadd.f32 0.0, %v227
    %v229 = vpop.f32.mrb[0].mxu0
    %230 = vmatprep.mubr.f32.mxu0 0.0
    %231 = vmatmul.mubr.f32.gmra.mrb[0].mxu0 %v135
    %v232 = vpop.f32.mrb[0].mxu0
    %v233 = vadd.f32 0.0, %v232
    %v234 = vpop.f32.mrb[0].mxu0
    %235 = vmatprep.mubr.f32.mxu0 0.0
    %236 = vmatmul.mubr.f32.gmra.mrb[0].mxu0 %v138
    %v237 = vpop.f32.mrb[0].mxu0
    %v238 = vadd.f32 0.0, %v237
    %v239 = vpop.f32.mrb[0].mxu0
    %240 = vmatprep.mubr.f32.mxu0 0.0
    %241 = vmatmul.mubr.f32.gmra.mrb[0].mxu0 %v141
    %v242 = vpop.f32.mrb[0].mxu0
    %v243 = vadd.f32 0.0, %v242
    %v244 = vpop.f32.mrb[0].mxu0
    %245 = vmatprep.mubr.f32.mxu0 0.0
    %246 = vmatmul.mubr.f32.gmra.mrb[0].mxu0 %v144
    %v247 = vpop.f32.mrb[0].mxu0
    %v248 = vadd.f32 0.0, %v247
    %v249 = vpop.f32.mrb[0].mxu0
    %250 = vdwg.mxu0
    %s251 = scalar_lea.vmem %s3, 64
    %v252 = vld [vmem:[%s251] sm:$0xff]
    %v253 = vld [vmem:[%s251 + $0x8] sm:$0xff]
    %v254 = vld [vmem:[%s251 + $0x10] sm:$0xff]
    %v255 = vld [vmem:[%s251 + $0x18] sm:$0xff]
    %v256 = vld [vmem:[%s251 + $0x20] sm:$0xff]
    %v257 = vld [vmem:[%s251 + $0x28] sm:$0xff]
    %v258 = vld [vmem:[%s251 + $0x30] sm:$0xff]
    %v259 = vld [vmem:[%s251 + $0x38] sm:$0xff]
    %v261 = vsel %vm32, %v252, 0
    %v264 = vsel %vm32, %v253, 0
    %v267 = vsel %vm32, %v254, 0
    %v270 = vsel %vm32, %v255, 0
    %v273 = vsel %vm32, %v256, 0
    %v276 = vsel %vm32, %v257, 0
    %v279 = vsel %vm32, %v258, 0
    %v282 = vsel %vm32, %v259, 0
    %284 = vmatprep.subr.mxu0 0.0
    %285 = vmatpush1.msra.mxu0 %v106
    %286 = vmatprep.subr.mxu0 0.0
    %287 = vmatpush1.msra.mxu0 %v111
    %288 = vmatprep.subr.mxu0 0.0
    %289 = vmatpush1.msra.mxu0 0.0
    %290 = vmatprep.subr.mxu0 0.0
    %291 = vmatpush1.msra.mxu0 0.0
    %292 = vmatprep.subr.mxu0 0.0
    %293 = vmatpush1.msra.mxu0 0.0
    %294 = vmatprep.subr.mxu0 0.0
    %295 = vmatpush1.msra.mxu0 0.0
    %296 = vmatprep.subr.mxu0 0.0
    %297 = vmatpush1.msra.mxu0 0.0
    %298 = vmatprep.subr.mxu0 0.0
    %299 = vmatpush1.msra.mxu0 0.0
    %300 = vmatprep.subr.mxu0 0.0
    %301 = vmatpush1.msra.mxu0 0.0
    %302 = vmatprep.subr.mxu0 0.0
    %303 = vmatpush1.msra.mxu0 0.0
    %304 = vmatprep.subr.mxu0 0.0
    %305 = vmatpush1.msra.mxu0 0.0
    %306 = vmatprep.subr.mxu0 0.0
    %307 = vmatpush1.msra.mxu0 0.0
    %308 = vmatprep.subr.mxu0 0.0
    %309 = vmatpush1.msra.mxu0 0.0
    %310 = vmatprep.subr.mxu0 0.0
    %311 = vmatpush1.msra.mxu0 0.0
    %312 = vmatprep.subr.mxu0 0.0
    %313 = vmatpush1.msra.mxu0 0.0
    %314 = vmatprep.subr.mxu0 0.0
    %315 = vmatpush1.msra.mxu0 0.0
    %316 = vmatprep.subr.mxu0 0.0
    %317 = vmatpush1.msra.mxu0 0.0
    %318 = vmatprep.subr.mxu0 0.0
    %319 = vmatpush1.msra.mxu0 0.0
    %320 = vmatprep.subr.mxu0 0.0
    %321 = vmatpush1.msra.mxu0 0.0
    %322 = vmatprep.subr.mxu0 0.0
    %323 = vmatpush1.msra.mxu0 0.0
    %324 = vmatprep.subr.mxu0 0.0
    %325 = vmatpush1.msra.mxu0 0.0
    %326 = vmatprep.subr.mxu0 0.0
    %327 = vmatpush1.msra.mxu0 0.0
    %328 = vmatprep.subr.mxu0 0.0
    %329 = vmatpush1.msra.mxu0 0.0
    %330 = vmatprep.subr.mxu0 0.0
    %331 = vmatpush1.msra.mxu0 0.0
    %332 = vmatprep.subr.mxu0 0.0
    %333 = vmatpush1.msra.mxu0 0.0
    %334 = vmatprep.subr.mxu0 0.0
    %335 = vmatpush1.msra.mxu0 0.0
    %336 = vmatprep.subr.mxu0 0.0
    %337 = vmatpush1.msra.mxu0 0.0
    %338 = vmatprep.subr.mxu0 0.0
    %339 = vmatpush1.msra.mxu0 0.0
    %340 = vmatprep.subr.mxu0 0.0
    %341 = vmatpush1.msra.mxu0 0.0
    %342 = vmatprep.subr.mxu0 0.0
    %343 = vmatpush1.msra.mxu0 0.0
    %344 = vmatprep.subr.mxu0 0.0
    %345 = vmatpush1.msra.mxu0 0.0
    %346 = vmatprep.subr.mxu0 0.0
    %347 = vmatpush1.msra.mxu0 0.0
    %348 = vmatprep.mubr.f32.mxu0 0.0
    %349 = vmatmul.mubr.f32.gmra.mrb[0].mxu0 %v261
    %v350 = vpop.f32.mrb[0].mxu0
    %v351 = vadd.f32 0.0, %v350
    %v352 = vpop.f32.mrb[0].mxu0
    %353 = vmatprep.mubr.f32.mxu0 0.0
    %354 = vmatmul.mubr.f32.gmra.mrb[0].mxu0 %v264
    %v355 = vpop.f32.mrb[0].mxu0
    %v356 = vadd.f32 0.0, %v355
    %v357 = vpop.f32.mrb[0].mxu0
    %358 = vmatprep.mubr.f32.mxu0 0.0
    %359 = vmatmul.mubr.f32.gmra.mrb[0].mxu0 %v267
    %v360 = vpop.f32.mrb[0].mxu0
    %v361 = vadd.f32 0.0, %v360
    %v362 = vpop.f32.mrb[0].mxu0
    %363 = vmatprep.mubr.f32.mxu0 0.0
    %364 = vmatmul.mubr.f32.gmra.mrb[0].mxu0 %v270
    %v365 = vpop.f32.mrb[0].mxu0
    %v366 = vadd.f32 0.0, %v365
    %v367 = vpop.f32.mrb[0].mxu0
    %368 = vmatprep.mubr.f32.mxu0 0.0
    %369 = vmatmul.mubr.f32.gmra.mrb[0].mxu0 %v273
    %v370 = vpop.f32.mrb[0].mxu0
    %v371 = vadd.f32 0.0, %v370
    %v372 = vpop.f32.mrb[0].mxu0
    %373 = vmatprep.mubr.f32.mxu0 0.0
    %374 = vmatmul.mubr.f32.gmra.mrb[0].mxu0 %v276
    %v375 = vpop.f32.mrb[0].mxu0
    %v376 = vadd.f32 0.0, %v375
    %v377 = vpop.f32.mrb[0].mxu0
    %378 = vmatprep.mubr.f32.mxu0 0.0
    %379 = vmatmul.mubr.f32.gmra.mrb[0].mxu0 %v279
    %v380 = vpop.f32.mrb[0].mxu0
    %v381 = vadd.f32 0.0, %v380
    %v382 = vpop.f32.mrb[0].mxu0
    %383 = vmatprep.mubr.f32.mxu0 0.0
    %384 = vmatmul.mubr.f32.gmra.mrb[0].mxu0 %v282
    %v385 = vpop.f32.mrb[0].mxu0
    %v386 = vadd.f32 0.0, %v385
    %v387 = vpop.f32.mrb[0].mxu0
    %388 = vdwg.mxu0
    %397 = vrot.lane.b32.xlu0 %v351, 120
    %v398 = vpop.permute.xlu0 %397
    %399 = vrot.lane.b32.xlu0 %v356, 120
    %v400 = vpop.permute.xlu0 %399
    %401 = vrot.lane.b32.xlu0 %v361, 120
    %v402 = vpop.permute.xlu0 %401
    %403 = vrot.lane.b32.xlu0 %v366, 120
    %v404 = vpop.permute.xlu0 %403
    %405 = vrot.lane.b32.xlu0 %v371, 120
    %v406 = vpop.permute.xlu0 %405
    %407 = vrot.lane.b32.xlu0 %v376, 120
    %v408 = vpop.permute.xlu0 %407
    %409 = vrot.lane.b32.xlu0 %v381, 120
    %v410 = vpop.permute.xlu0 %409
    %411 = vrot.lane.b32.xlu0 %v386, 120
    %v412 = vpop.permute.xlu0 %411
    %v421 = vadd.f32 %v213, %v398
    %v422 = vadd.f32 %v218, %v400
    %v423 = vadd.f32 %v223, %v402
    %v424 = vadd.f32 %v228, %v404
    %v425 = vadd.f32 %v233, %v406
    %v426 = vadd.f32 %v238, %v408
    %v427 = vadd.f32 %v243, %v410
    %v428 = vadd.f32 %v248, %v412
    %s429 = scalar_lea.vmem %s3, 128
    %v430 = vld [vmem:[%s429] sm:$0xff]
    %v431 = vld [vmem:[%s429 + $0x8] sm:$0xff]
    %v432 = vld [vmem:[%s429 + $0x10] sm:$0xff]
    %v433 = vld [vmem:[%s429 + $0x18] sm:$0xff]
    %v434 = vld [vmem:[%s429 + $0x20] sm:$0xff]
    %v435 = vld [vmem:[%s429 + $0x28] sm:$0xff]
    %v436 = vld [vmem:[%s429 + $0x30] sm:$0xff]
    %v437 = vld [vmem:[%s429 + $0x38] sm:$0xff]
    %v439 = vsel %vm32, %v430, 0
    %v442 = vsel %vm32, %v431, 0
    %v445 = vsel %vm32, %v432, 0
    %v448 = vsel %vm32, %v433, 0
    %v451 = vsel %vm32, %v434, 0
    %v454 = vsel %vm32, %v435, 0
    %v457 = vsel %vm32, %v436, 0
    %v460 = vsel %vm32, %v437, 0
    %462 = vmatprep.subr.mxu0 0.0
    %463 = vmatpush1.msra.mxu0 %v106
    %464 = vmatprep.subr.mxu0 0.0
    %465 = vmatpush1.msra.mxu0 %v111
    %466 = vmatprep.subr.mxu0 0.0
    %467 = vmatpush1.msra.mxu0 0.0
    %468 = vmatprep.subr.mxu0 0.0
    %469 = vmatpush1.msra.mxu0 0.0
    %470 = vmatprep.subr.mxu0 0.0
    %471 = vmatpush1.msra.mxu0 0.0
    %472 = vmatprep.subr.mxu0 0.0
    %473 = vmatpush1.msra.mxu0 0.0
    %474 = vmatprep.subr.mxu0 0.0
    %475 = vmatpush1.msra.mxu0 0.0
    %476 = vmatprep.subr.mxu0 0.0
    %477 = vmatpush1.msra.mxu0 0.0
    %478 = vmatprep.subr.mxu0 0.0
    %479 = vmatpush1.msra.mxu0 0.0
    %480 = vmatprep.subr.mxu0 0.0
    %481 = vmatpush1.msra.mxu0 0.0
    %482 = vmatprep.subr.mxu0 0.0
    %483 = vmatpush1.msra.mxu0 0.0
    %484 = vmatprep.subr.mxu0 0.0
    %485 = vmatpush1.msra.mxu0 0.0
    %486 = vmatprep.subr.mxu0 0.0
    %487 = vmatpush1.msra.mxu0 0.0
    %488 = vmatprep.subr.mxu0 0.0
    %489 = vmatpush1.msra.mxu0 0.0
    %490 = vmatprep.subr.mxu0 0.0
    %491 = vmatpush1.msra.mxu0 0.0
    %492 = vmatprep.subr.mxu0 0.0
    %493 = vmatpush1.msra.mxu0 0.0
    %494 = vmatprep.subr.mxu0 0.0
    %495 = vmatpush1.msra.mxu0 0.0
    %496 = vmatprep.subr.mxu0 0.0
    %497 = vmatpush1.msra.mxu0 0.0
    %498 = vmatprep.subr.mxu0 0.0
    %499 = vmatpush1.msra.mxu0 0.0
    %500 = vmatprep.subr.mxu0 0.0
    %501 = vmatpush1.msra.mxu0 0.0
    %502 = vmatprep.subr.mxu0 0.0
    %503 = vmatpush1.msra.mxu0 0.0
    %504 = vmatprep.subr.mxu0 0.0
    %505 = vmatpush1.msra.mxu0 0.0
    %506 = vmatprep.subr.mxu0 0.0
    %507 = vmatpush1.msra.mxu0 0.0
    %508 = vmatprep.subr.mxu0 0.0
    %509 = vmatpush1.msra.mxu0 0.0
    %510 = vmatprep.subr.mxu0 0.0
    %511 = vmatpush1.msra.mxu0 0.0
    %512 = vmatprep.subr.mxu0 0.0
    %513 = vmatpush1.msra.mxu0 0.0
    %514 = vmatprep.subr.mxu0 0.0
    %515 = vmatpush1.msra.mxu0 0.0
    %516 = vmatprep.subr.mxu0 0.0
    %517 = vmatpush1.msra.mxu0 0.0
    %518 = vmatprep.subr.mxu0 0.0
    %519 = vmatpush1.msra.mxu0 0.0
    %520 = vmatprep.subr.mxu0 0.0
    %521 = vmatpush1.msra.mxu0 0.0
    %522 = vmatprep.subr.mxu0 0.0
    %523 = vmatpush1.msra.mxu0 0.0
    %524 = vmatprep.subr.mxu0 0.0
    %525 = vmatpush1.msra.mxu0 0.0
    %526 = vmatprep.mubr.f32.mxu0 0.0
    %527 = vmatmul.mubr.f32.gmra.mrb[0].mxu0 %v439
    %v528 = vpop.f32.mrb[0].mxu0
    %v529 = vadd.f32 0.0, %v528
    %v530 = vpop.f32.mrb[0].mxu0
    %531 = vmatprep.mubr.f32.mxu0 0.0
    %532 = vmatmul.mubr.f32.gmra.mrb[0].mxu0 %v442
    %v533 = vpop.f32.mrb[0].mxu0
    %v534 = vadd.f32 0.0, %v533
    %v535 = vpop.f32.mrb[0].mxu0
    %536 = vmatprep.mubr.f32.mxu0 0.0
    %537 = vmatmul.mubr.f32.gmra.mrb[0].mxu0 %v445
    %v538 = vpop.f32.mrb[0].mxu0
    %v539 = vadd.f32 0.0, %v538
    %v540 = vpop.f32.mrb[0].mxu0
    %541 = vmatprep.mubr.f32.mxu0 0.0
    %542 = vmatmul.mubr.f32.gmra.mrb[0].mxu0 %v448
    %v543 = vpop.f32.mrb[0].mxu0
    %v544 = vadd.f32 0.0, %v543
    %v545 = vpop.f32.mrb[0].mxu0
    %546 = vmatprep.mubr.f32.mxu0 0.0
    %547 = vmatmul.mubr.f32.gmra.mrb[0].mxu0 %v451
    %v548 = vpop.f32.mrb[0].mxu0
    %v549 = vadd.f32 0.0, %v548
    %v550 = vpop.f32.mrb[0].mxu0
    %551 = vmatprep.mubr.f32.mxu0 0.0
    %552 = vmatmul.mubr.f32.gmra.mrb[0].mxu0 %v454
    %v553 = vpop.f32.mrb[0].mxu0
    %v554 = vadd.f32 0.0, %v553
    %v555 = vpop.f32.mrb[0].mxu0
    %556 = vmatprep.mubr.f32.mxu0 0.0
    %557 = vmatmul.mubr.f32.gmra.mrb[0].mxu0 %v457
    %v558 = vpop.f32.mrb[0].mxu0
    %v559 = vadd.f32 0.0, %v558
    %v560 = vpop.f32.mrb[0].mxu0
    %561 = vmatprep.mubr.f32.mxu0 0.0
    %562 = vmatmul.mubr.f32.gmra.mrb[0].mxu0 %v460
    %v563 = vpop.f32.mrb[0].mxu0
    %v564 = vadd.f32 0.0, %v563
    %v565 = vpop.f32.mrb[0].mxu0
    %566 = vdwg.mxu0
    %575 = vrot.lane.b32.xlu0 %v529, 112
    %v576 = vpop.permute.xlu0 %575
    %577 = vrot.lane.b32.xlu0 %v534, 112
    %v578 = vpop.permute.xlu0 %577
    %579 = vrot.lane.b32.xlu0 %v539, 112
    %v580 = vpop.permute.xlu0 %579
    %581 = vrot.lane.b32.xlu0 %v544, 112
    %v582 = vpop.permute.xlu0 %581
    %583 = vrot.lane.b32.xlu0 %v549, 112
    %v584 = vpop.permute.xlu0 %583
    %585 = vrot.lane.b32.xlu0 %v554, 112
    %v586 = vpop.permute.xlu0 %585
    %587 = vrot.lane.b32.xlu0 %v559, 112
    %v588 = vpop.permute.xlu0 %587
    %589 = vrot.lane.b32.xlu0 %v564, 112
    %v590 = vpop.permute.xlu0 %589
    %v599 = vadd.f32 %v421, %v576
    %v600 = vadd.f32 %v422, %v578
    %v601 = vadd.f32 %v423, %v580
    %v602 = vadd.f32 %v424, %v582
    %v603 = vadd.f32 %v425, %v584
    %v604 = vadd.f32 %v426, %v586
    %v605 = vadd.f32 %v427, %v588
    %v606 = vadd.f32 %v428, %v590
    %s607 = scalar_lea.vmem %s3, 192
    %v608 = vld [vmem:[%s607] sm:$0xff]
    %v609 = vld [vmem:[%s607 + $0x8] sm:$0xff]
    %v610 = vld [vmem:[%s607 + $0x10] sm:$0xff]
    %v611 = vld [vmem:[%s607 + $0x18] sm:$0xff]
    %v612 = vld [vmem:[%s607 + $0x20] sm:$0xff]
    %v613 = vld [vmem:[%s607 + $0x28] sm:$0xff]
    %v614 = vld [vmem:[%s607 + $0x30] sm:$0xff]
    %v615 = vld [vmem:[%s607 + $0x38] sm:$0xff]
    %v617 = vsel %vm32, %v608, 0
    %v620 = vsel %vm32, %v609, 0
    %v623 = vsel %vm32, %v610, 0
    %v626 = vsel %vm32, %v611, 0
    %v629 = vsel %vm32, %v612, 0
    %v632 = vsel %vm32, %v613, 0
    %v635 = vsel %vm32, %v614, 0
    %v638 = vsel %vm32, %v615, 0
    %640 = vmatprep.subr.mxu0 0.0
    %641 = vmatpush1.msra.mxu0 %v106
    %642 = vmatprep.subr.mxu0 0.0
    %643 = vmatpush1.msra.mxu0 %v111
    %644 = vmatprep.subr.mxu0 0.0
    %645 = vmatpush1.msra.mxu0 0.0
    %646 = vmatprep.subr.mxu0 0.0
    %647 = vmatpush1.msra.mxu0 0.0
    %648 = vmatprep.subr.mxu0 0.0
    %649 = vmatpush1.msra.mxu0 0.0
    %650 = vmatprep.subr.mxu0 0.0
    %651 = vmatpush1.msra.mxu0 0.0
    %652 = vmatprep.subr.mxu0 0.0
    %653 = vmatpush1.msra.mxu0 0.0
    %654 = vmatprep.subr.mxu0 0.0
    %655 = vmatpush1.msra.mxu0 0.0
    %656 = vmatprep.subr.mxu0 0.0
    %657 = vmatpush1.msra.mxu0 0.0
    %658 = vmatprep.subr.mxu0 0.0
    %659 = vmatpush1.msra.mxu0 0.0
    %660 = vmatprep.subr.mxu0 0.0
    %661 = vmatpush1.msra.mxu0 0.0
    %662 = vmatprep.subr.mxu0 0.0
    %663 = vmatpush1.msra.mxu0 0.0
    %664 = vmatprep.subr.mxu0 0.0
    %665 = vmatpush1.msra.mxu0 0.0
    %666 = vmatprep.subr.mxu0 0.0
    %667 = vmatpush1.msra.mxu0 0.0
    %668 = vmatprep.subr.mxu0 0.0
    %669 = vmatpush1.msra.mxu0 0.0
    %670 = vmatprep.subr.mxu0 0.0
    %671 = vmatpush1.msra.mxu0 0.0
    %672 = vmatprep.subr.mxu0 0.0
    %673 = vmatpush1.msra.mxu0 0.0
    %674 = vmatprep.subr.mxu0 0.0
    %675 = vmatpush1.msra.mxu0 0.0
    %676 = vmatprep.subr.mxu0 0.0
    %677 = vmatpush1.msra.mxu0 0.0
    %678 = vmatprep.subr.mxu0 0.0
    %679 = vmatpush1.msra.mxu0 0.0
    %680 = vmatprep.subr.mxu0 0.0
    %681 = vmatpush1.msra.mxu0 0.0
    %682 = vmatprep.subr.mxu0 0.0
    %683 = vmatpush1.msra.mxu0 0.0
    %684 = vmatprep.subr.mxu0 0.0
    %685 = vmatpush1.msra.mxu0 0.0
    %686 = vmatprep.subr.mxu0 0.0
    %687 = vmatpush1.msra.mxu0 0.0
    %688 = vmatprep.subr.mxu0 0.0
    %689 = vmatpush1.msra.mxu0 0.0
    %690 = vmatprep.subr.mxu0 0.0
    %691 = vmatpush1.msra.mxu0 0.0
    %692 = vmatprep.subr.mxu0 0.0
    %693 = vmatpush1.msra.mxu0 0.0
    %694 = vmatprep.subr.mxu0 0.0
    %695 = vmatpush1.msra.mxu0 0.0
    %696 = vmatprep.subr.mxu0 0.0
    %697 = vmatpush1.msra.mxu0 0.0
    %698 = vmatprep.subr.mxu0 0.0
    %699 = vmatpush1.msra.mxu0 0.0
    %700 = vmatprep.subr.mxu0 0.0
    %701 = vmatpush1.msra.mxu0 0.0
    %702 = vmatprep.subr.mxu0 0.0
    %703 = vmatpush1.msra.mxu0 0.0
    %704 = vmatprep.mubr.f32.mxu0 0.0
    %705 = vmatmul.mubr.f32.gmra.mrb[0].mxu0 %v617
    %v706 = vpop.f32.mrb[0].mxu0
    %v707 = vadd.f32 0.0, %v706
    %v708 = vpop.f32.mrb[0].mxu0
    %709 = vmatprep.mubr.f32.mxu0 0.0
    %710 = vmatmul.mubr.f32.gmra.mrb[0].mxu0 %v620
    %v711 = vpop.f32.mrb[0].mxu0
    %v712 = vadd.f32 0.0, %v711
    %v713 = vpop.f32.mrb[0].mxu0
    %714 = vmatprep.mubr.f32.mxu0 0.0
    %715 = vmatmul.mubr.f32.gmra.mrb[0].mxu0 %v623
    %v716 = vpop.f32.mrb[0].mxu0
    %v717 = vadd.f32 0.0, %v716
    %v718 = vpop.f32.mrb[0].mxu0
    %719 = vmatprep.mubr.f32.mxu0 0.0
    %720 = vmatmul.mubr.f32.gmra.mrb[0].mxu0 %v626
    %v721 = vpop.f32.mrb[0].mxu0
    %v722 = vadd.f32 0.0, %v721
    %v723 = vpop.f32.mrb[0].mxu0
    %724 = vmatprep.mubr.f32.mxu0 0.0
    %725 = vmatmul.mubr.f32.gmra.mrb[0].mxu0 %v629
    %v726 = vpop.f32.mrb[0].mxu0
    %v727 = vadd.f32 0.0, %v726
    %v728 = vpop.f32.mrb[0].mxu0
    %729 = vmatprep.mubr.f32.mxu0 0.0
    %730 = vmatmul.mubr.f32.gmra.mrb[0].mxu0 %v632
    %v731 = vpop.f32.mrb[0].mxu0
    %v732 = vadd.f32 0.0, %v731
    %v733 = vpop.f32.mrb[0].mxu0
    %734 = vmatprep.mubr.f32.mxu0 0.0
    %735 = vmatmul.mubr.f32.gmra.mrb[0].mxu0 %v635
    %v736 = vpop.f32.mrb[0].mxu0
    %v737 = vadd.f32 0.0, %v736
    %v738 = vpop.f32.mrb[0].mxu0
    %739 = vmatprep.mubr.f32.mxu0 0.0
    %740 = vmatmul.mubr.f32.gmra.mrb[0].mxu0 %v638
    %v741 = vpop.f32.mrb[0].mxu0
    %v742 = vadd.f32 0.0, %v741
    %v743 = vpop.f32.mrb[0].mxu0
    %744 = vdwg.mxu0
    %753 = vrot.lane.b32.xlu0 %v707, 104
    %v754 = vpop.permute.xlu0 %753
    %755 = vrot.lane.b32.xlu0 %v712, 104
    %v756 = vpop.permute.xlu0 %755
    %757 = vrot.lane.b32.xlu0 %v717, 104
    %v758 = vpop.permute.xlu0 %757
    %759 = vrot.lane.b32.xlu0 %v722, 104
    %v760 = vpop.permute.xlu0 %759
    %761 = vrot.lane.b32.xlu0 %v727, 104
    %v762 = vpop.permute.xlu0 %761
    %763 = vrot.lane.b32.xlu0 %v732, 104
    %v764 = vpop.permute.xlu0 %763
    %765 = vrot.lane.b32.xlu0 %v737, 104
    %v766 = vpop.permute.xlu0 %765
    %767 = vrot.lane.b32.xlu0 %v742, 104
    %v768 = vpop.permute.xlu0 %767
    %v777 = vadd.f32 %v599, %v754
    %v778 = vadd.f32 %v600, %v756
    %v779 = vadd.f32 %v601, %v758
    %v780 = vadd.f32 %v602, %v760
    %v781 = vadd.f32 %v603, %v762
    %v782 = vadd.f32 %v604, %v764
    %v783 = vadd.f32 %v605, %v766
    %v784 = vadd.f32 %v606, %v768
    %vm785 = vcmask 64512
    %786 = vst.msk [vmem:[#allocation2] sm:$0xff] %vm785, %v777
    %788 = vrot.lane.b32.xlu0 %v777, 96
    %v789 = vpop.permute.xlu0 %788
    %s791 = scalar_lea.vmem [#allocation2], 64
    %792 = vst.msk [vmem:[%s791] sm:$0xff] %vm785, %v789
    %793 = vrot.lane.b32.xlu0 %v777, 64
    %v794 = vpop.permute.xlu0 %793
    %s796 = scalar_lea.vmem [#allocation2], 128
    %797 = vst.msk [vmem:[%s796] sm:$0xff] %vm785, %v794
    %s798 = scalar_lea.vmem [#allocation2], 8
    %799 = vst.msk [vmem:[%s798] sm:$0xff] %vm785, %v778
    %801 = vrot.lane.b32.xlu0 %v778, 96
    %v802 = vpop.permute.xlu0 %801
    %s804 = scalar_lea.vmem [#allocation2], 72
    %805 = vst.msk [vmem:[%s804] sm:$0xff] %vm785, %v802
    %806 = vrot.lane.b32.xlu0 %v778, 64
    %v807 = vpop.permute.xlu0 %806
    %s809 = scalar_lea.vmem [#allocation2], 136
    %810 = vst.msk [vmem:[%s809] sm:$0xff] %vm785, %v807
    %s811 = scalar_lea.vmem [#allocation2], 16
    %812 = vst.msk [vmem:[%s811] sm:$0xff] %vm785, %v779
    %814 = vrot.lane.b32.xlu0 %v779, 96
    %v815 = vpop.permute.xlu0 %814
    %s817 = scalar_lea.vmem [#allocation2], 80
    %818 = vst.msk [vmem:[%s817] sm:$0xff] %vm785, %v815
    %819 = vrot.lane.b32.xlu0 %v779, 64
    %v820 = vpop.permute.xlu0 %819
    %s822 = scalar_lea.vmem [#allocation2], 144
    %823 = vst.msk [vmem:[%s822] sm:$0xff] %vm785, %v820
    %s824 = scalar_lea.vmem [#allocation2], 24
    %825 = vst.msk [vmem:[%s824] sm:$0xff] %vm785, %v780
    %827 = vrot.lane.b32.xlu0 %v780, 96
    %v828 = vpop.permute.xlu0 %827
    %s830 = scalar_lea.vmem [#allocation2], 88
    %831 = vst.msk [vmem:[%s830] sm:$0xff] %vm785, %v828
    %832 = vrot.lane.b32.xlu0 %v780, 64
    %v833 = vpop.permute.xlu0 %832
    %s835 = scalar_lea.vmem [#allocation2], 152
    %836 = vst.msk [vmem:[%s835] sm:$0xff] %vm785, %v833
    %s837 = scalar_lea.vmem [#allocation2], 32
    %838 = vst.msk [vmem:[%s837] sm:$0xff] %vm785, %v781
    %840 = vrot.lane.b32.xlu0 %v781, 96
    %v841 = vpop.permute.xlu0 %840
    %s843 = scalar_lea.vmem [#allocation2], 96
    %844 = vst.msk [vmem:[%s843] sm:$0xff] %vm785, %v841
    %845 = vrot.lane.b32.xlu0 %v781, 64
    %v846 = vpop.permute.xlu0 %845
    %s848 = scalar_lea.vmem [#allocation2], 160
    %849 = vst.msk [vmem:[%s848] sm:$0xff] %vm785, %v846
    %s850 = scalar_lea.vmem [#allocation2], 40
    %851 = vst.msk [vmem:[%s850] sm:$0xff] %vm785, %v782
    %853 = vrot.lane.b32.xlu0 %v782, 96
    %v854 = vpop.permute.xlu0 %853
    %s856 = scalar_lea.vmem [#allocation2], 104
    %857 = vst.msk [vmem:[%s856] sm:$0xff] %vm785, %v854
    %858 = vrot.lane.b32.xlu0 %v782, 64
    %v859 = vpop.permute.xlu0 %858
    %s861 = scalar_lea.vmem [#allocation2], 168
    %862 = vst.msk [vmem:[%s861] sm:$0xff] %vm785, %v859
    %s863 = scalar_lea.vmem [#allocation2], 48
    %864 = vst.msk [vmem:[%s863] sm:$0xff] %vm785, %v783
    %866 = vrot.lane.b32.xlu0 %v783, 96
    %v867 = vpop.permute.xlu0 %866
    %s869 = scalar_lea.vmem [#allocation2], 112
    %870 = vst.msk [vmem:[%s869] sm:$0xff] %vm785, %v867
    %871 = vrot.lane.b32.xlu0 %v783, 64
    %v872 = vpop.permute.xlu0 %871
    %s874 = scalar_lea.vmem [#allocation2], 176
    %875 = vst.msk [vmem:[%s874] sm:$0xff] %vm785, %v872
    %s876 = scalar_lea.vmem [#allocation2], 56
    %877 = vst.msk [vmem:[%s876] sm:$0xff] %vm785, %v784
    %879 = vrot.lane.b32.xlu0 %v784, 96
    %v880 = vpop.permute.xlu0 %879
    %s882 = scalar_lea.vmem [#allocation2], 120
    %883 = vst.msk [vmem:[%s882] sm:$0xff] %vm785, %v880
    %884 = vrot.lane.b32.xlu0 %v784, 64
    %v885 = vpop.permute.xlu0 %884
    %s887 = scalar_lea.vmem [#allocation2], 184
    %888 = vst.msk [vmem:[%s887] sm:$0xff] %vm785, %v885
    %v889 = vld [vmem:[#allocation2] sm:$0xff]
    %v890 = vld [vmem:[#allocation2 + $0x8] sm:$0xff]
    %v891 = vld [vmem:[#allocation2 + $0x10] sm:$0xff]
    %v892 = vld [vmem:[#allocation2 + $0x18] sm:$0xff]
    %v893 = vld [vmem:[#allocation2 + $0x20] sm:$0xff]
    %v894 = vld [vmem:[#allocation2 + $0x28] sm:$0xff]
    %v895 = vld [vmem:[#allocation2 + $0x30] sm:$0xff]
    %v896 = vld [vmem:[#allocation2 + $0x38] sm:$0xff]
    %v897 = vld [vmem:[%s791] sm:$0xff]
    %v898 = vld [vmem:[%s791 + $0x8] sm:$0xff]
    %v899 = vld [vmem:[%s791 + $0x10] sm:$0xff]
    %v900 = vld [vmem:[%s791 + $0x18] sm:$0xff]
    %v901 = vld [vmem:[%s791 + $0x20] sm:$0xff]
    %v902 = vld [vmem:[%s791 + $0x28] sm:$0xff]
    %v903 = vld [vmem:[%s791 + $0x30] sm:$0xff]
    %v904 = vld [vmem:[%s791 + $0x38] sm:$0xff]
    %v905 = vld [vmem:[%s796] sm:$0xff]
    %v906 = vld [vmem:[%s796 + $0x8] sm:$0xff]
    %v907 = vld [vmem:[%s796 + $0x10] sm:$0xff]
    %v908 = vld [vmem:[%s796 + $0x18] sm:$0xff]
    %v909 = vld [vmem:[%s796 + $0x20] sm:$0xff]
    %v910 = vld [vmem:[%s796 + $0x28] sm:$0xff]
    %v911 = vld [vmem:[%s796 + $0x30] sm:$0xff]
    %v912 = vld [vmem:[%s796 + $0x38] sm:$0xff]
    %v914 = vsel %vm785, %v889, 0
    %v917 = vsel %vm785, %v897, 0
    %919 = vmatprep.subr.mxu0 0.0
    %920 = vmatpush1.xpose.msra.mxu0 %v917
    %921 = vmatprep.subr.mxu0 0.0
    %922 = vmatpush1.xpose.msra.mxu0 0.0
    %923 = vmatprep.subr.mxu0 0.0
    %924 = vmatpush1.xpose.msra.mxu0 0.0
    %925 = vmatprep.subr.mxu0 0.0
    %926 = vmatpush1.xpose.msra.mxu0 0.0
    %927 = vmatprep.subr.mxu0 0.0
    %928 = vmatpush1.xpose.msra.mxu0 0.0
    %929 = vmatprep.subr.mxu0 0.0
    %930 = vmatpush1.xpose.msra.mxu0 0.0
    %931 = vmatprep.subr.mxu0 0.0
    %932 = vmatpush1.xpose.msra.mxu0 0.0
    %933 = vmatprep.subr.mxu0 0.0
    %934 = vmatpush1.xpose.msra.mxu0 0.0
    %935 = vmatprep.subr.mxu0 0.0
    %936 = vmatpush1.xpose.msra.mxu0 0.0
    %937 = vmatprep.subr.mxu0 0.0
    %938 = vmatpush1.xpose.msra.mxu0 0.0
    %939 = vmatprep.subr.mxu0 0.0
    %940 = vmatpush1.xpose.msra.mxu0 0.0
    %941 = vmatprep.subr.mxu0 0.0
    %942 = vmatpush1.xpose.msra.mxu0 0.0
    %943 = vmatprep.subr.mxu0 0.0
    %944 = vmatpush1.xpose.msra.mxu0 0.0
    %945 = vmatprep.subr.mxu0 0.0
    %946 = vmatpush1.xpose.msra.mxu0 0.0
    %947 = vmatprep.subr.mxu0 0.0
    %948 = vmatpush1.xpose.msra.mxu0 0.0
    %949 = vmatprep.subr.mxu0 0.0
    %950 = vmatpush1.xpose.msra.mxu0 0.0
    %951 = vmatprep.subr.mxu0 0.0
    %952 = vmatpush1.xpose.msra.mxu0 0.0
    %953 = vmatprep.subr.mxu0 0.0
    %954 = vmatpush1.xpose.msra.mxu0 0.0
    %955 = vmatprep.subr.mxu0 0.0
    %956 = vmatpush1.xpose.msra.mxu0 0.0
    %957 = vmatprep.subr.mxu0 0.0
    %958 = vmatpush1.xpose.msra.mxu0 0.0
    %959 = vmatprep.subr.mxu0 0.0
    %960 = vmatpush1.xpose.msra.mxu0 0.0
    %961 = vmatprep.subr.mxu0 0.0
    %962 = vmatpush1.xpose.msra.mxu0 0.0
    %963 = vmatprep.subr.mxu0 0.0
    %964 = vmatpush1.xpose.msra.mxu0 0.0
    %965 = vmatprep.subr.mxu0 0.0
    %966 = vmatpush1.xpose.msra.mxu0 0.0
    %967 = vmatprep.subr.mxu0 0.0
    %968 = vmatpush1.xpose.msra.mxu0 0.0
    %969 = vmatprep.subr.mxu0 0.0
    %970 = vmatpush1.xpose.msra.mxu0 0.0
    %971 = vmatprep.subr.mxu0 0.0
    %972 = vmatpush1.xpose.msra.mxu0 0.0
    %973 = vmatprep.subr.mxu0 0.0
    %974 = vmatpush1.xpose.msra.mxu0 0.0
    %975 = vmatprep.subr.mxu0 0.0
    %976 = vmatpush1.xpose.msra.mxu0 0.0
    %977 = vmatprep.subr.mxu0 0.0
    %978 = vmatpush1.xpose.msra.mxu0 0.0
    %979 = vmatprep.subr.mxu0 0.0
    %980 = vmatpush1.xpose.msra.mxu0 0.0
    %981 = vmatprep.subr.mxu0 0.0
    %982 = vmatpush1.xpose.msra.mxu0 0.0
    %983 = vmatprep.mubr.f32.mxu0 0.0
    %984 = vmatmul.mubr.f32.gmra.mrb[0].mxu0 %v914
    %v985 = vpop.f32.mrb[0].mxu0
    %v986 = vadd.f32 0.0, %v985
    %v987 = vpop.f32.mrb[0].mxu0
    %988 = vdwg.mxu0
    %v990 = vsel %vm785, %v890, 0
    %v993 = vsel %vm785, %v898, 0
    %995 = vmatprep.subr.mxu0 0.0
    %996 = vmatpush1.xpose.msra.mxu0 %v993
    %997 = vmatprep.subr.mxu0 0.0
    %998 = vmatpush1.xpose.msra.mxu0 0.0
    %999 = vmatprep.subr.mxu0 0.0
    %1000 = vmatpush1.xpose.msra.mxu0 0.0
    %1001 = vmatprep.subr.mxu0 0.0
    %1002 = vmatpush1.xpose.msra.mxu0 0.0
    %1003 = vmatprep.subr.mxu0 0.0
    %1004 = vmatpush1.xpose.msra.mxu0 0.0
    %1005 = vmatprep.subr.mxu0 0.0
    %1006 = vmatpush1.xpose.msra.mxu0 0.0
    %1007 = vmatprep.subr.mxu0 0.0
    %1008 = vmatpush1.xpose.msra.mxu0 0.0
    %1009 = vmatprep.subr.mxu0 0.0
    %1010 = vmatpush1.xpose.msra.mxu0 0.0
    %1011 = vmatprep.subr.mxu0 0.0
    %1012 = vmatpush1.xpose.msra.mxu0 0.0
    %1013 = vmatprep.subr.mxu0 0.0
    %1014 = vmatpush1.xpose.msra.mxu0 0.0
    %1015 = vmatprep.subr.mxu0 0.0
    %1016 = vmatpush1.xpose.msra.mxu0 0.0
    %1017 = vmatprep.subr.mxu0 0.0
    %1018 = vmatpush1.xpose.msra.mxu0 0.0
    %1019 = vmatprep.subr.mxu0 0.0
    %1020 = vmatpush1.xpose.msra.mxu0 0.0
    %1021 = vmatprep.subr.mxu0 0.0
    %1022 = vmatpush1.xpose.msra.mxu0 0.0
    %1023 = vmatprep.subr.mxu0 0.0
    %1024 = vmatpush1.xpose.msra.mxu0 0.0
    %1025 = vmatprep.subr.mxu0 0.0
    %1026 = vmatpush1.xpose.msra.mxu0 0.0
    %1027 = vmatprep.subr.mxu0 0.0
    %1028 = vmatpush1.xpose.msra.mxu0 0.0
    %1029 = vmatprep.subr.mxu0 0.0
    %1030 = vmatpush1.xpose.msra.mxu0 0.0
    %1031 = vmatprep.subr.mxu0 0.0
    %1032 = vmatpush1.xpose.msra.mxu0 0.0
    %1033 = vmatprep.subr.mxu0 0.0
    %1034 = vmatpush1.xpose.msra.mxu0 0.0
    %1035 = vmatprep.subr.mxu0 0.0
    %1036 = vmatpush1.xpose.msra.mxu0 0.0
    %1037 = vmatprep.subr.mxu0 0.0
    %1038 = vmatpush1.xpose.msra.mxu0 0.0
    %1039 = vmatprep.subr.mxu0 0.0
    %1040 = vmatpush1.xpose.msra.mxu0 0.0
    %1041 = vmatprep.subr.mxu0 0.0
    %1042 = vmatpush1.xpose.msra.mxu0 0.0
    %1043 = vmatprep.subr.mxu0 0.0
    %1044 = vmatpush1.xpose.msra.mxu0 0.0
    %1045 = vmatprep.subr.mxu0 0.0
    %1046 = vmatpush1.xpose.msra.mxu0 0.0
    %1047 = vmatprep.subr.mxu0 0.0
    %1048 = vmatpush1.xpose.msra.mxu0 0.0
    %1049 = vmatprep.subr.mxu0 0.0
    %1050 = vmatpush1.xpose.msra.mxu0 0.0
    %1051 = vmatprep.subr.mxu0 0.0
    %1052 = vmatpush1.xpose.msra.mxu0 0.0
    %1053 = vmatprep.subr.mxu0 0.0
    %1054 = vmatpush1.xpose.msra.mxu0 0.0
    %1055 = vmatprep.subr.mxu0 0.0
    %1056 = vmatpush1.xpose.msra.mxu0 0.0
    %1057 = vmatprep.subr.mxu0 0.0
    %1058 = vmatpush1.xpose.msra.mxu0 0.0
    %1059 = vmatprep.mubr.f32.mxu0 0.0
    %1060 = vmatmul.mubr.f32.gmra.mrb[0].mxu0 %v990
    %v1061 = vpop.f32.mrb[0].mxu0
    %v1062 = vadd.f32 0.0, %v1061
    %v1063 = vpop.f32.mrb[0].mxu0
    %1064 = vdwg.mxu0
    %v1066 = vsel %vm785, %v891, 0
    %v1069 = vsel %vm785, %v899, 0
    %1071 = vmatprep.subr.mxu0 0.0
    %1072 = vmatpush1.xpose.msra.mxu0 %v1069
    %1073 = vmatprep.subr.mxu0 0.0
    %1074 = vmatpush1.xpose.msra.mxu0 0.0
    %1075 = vmatprep.subr.mxu0 0.0
    %1076 = vmatpush1.xpose.msra.mxu0 0.0
    %1077 = vmatprep.subr.mxu0 0.0
    %1078 = vmatpush1.xpose.msra.mxu0 0.0
    %1079 = vmatprep.subr.mxu0 0.0
    %1080 = vmatpush1.xpose.msra.mxu0 0.0
    %1081 = vmatprep.subr.mxu0 0.0
    %1082 = vmatpush1.xpose.msra.mxu0 0.0
    %1083 = vmatprep.subr.mxu0 0.0
    %1084 = vmatpush1.xpose.msra.mxu0 0.0
    %1085 = vmatprep.subr.mxu0 0.0
    %1086 = vmatpush1.xpose.msra.mxu0 0.0
    %1087 = vmatprep.subr.mxu0 0.0
    %1088 = vmatpush1.xpose.msra.mxu0 0.0
    %1089 = vmatprep.subr.mxu0 0.0
    %1090 = vmatpush1.xpose.msra.mxu0 0.0
    %1091 = vmatprep.subr.mxu0 0.0
    %1092 = vmatpush1.xpose.msra.mxu0 0.0
    %1093 = vmatprep.subr.mxu0 0.0
    %1094 = vmatpush1.xpose.msra.mxu0 0.0
    %1095 = vmatprep.subr.mxu0 0.0
    %1096 = vmatpush1.xpose.msra.mxu0 0.0
    %1097 = vmatprep.subr.mxu0 0.0
    %1098 = vmatpush1.xpose.msra.mxu0 0.0
    %1099 = vmatprep.subr.mxu0 0.0
    %1100 = vmatpush1.xpose.msra.mxu0 0.0
    %1101 = vmatprep.subr.mxu0 0.0
    %1102 = vmatpush1.xpose.msra.mxu0 0.0
    %1103 = vmatprep.subr.mxu0 0.0
    %1104 = vmatpush1.xpose.msra.mxu0 0.0
    %1105 = vmatprep.subr.mxu0 0.0
    %1106 = vmatpush1.xpose.msra.mxu0 0.0
    %1107 = vmatprep.subr.mxu0 0.0
    %1108 = vmatpush1.xpose.msra.mxu0 0.0
    %1109 = vmatprep.subr.mxu0 0.0
    %1110 = vmatpush1.xpose.msra.mxu0 0.0
    %1111 = vmatprep.subr.mxu0 0.0
    %1112 = vmatpush1.xpose.msra.mxu0 0.0
    %1113 = vmatprep.subr.mxu0 0.0
    %1114 = vmatpush1.xpose.msra.mxu0 0.0
    %1115 = vmatprep.subr.mxu0 0.0
    %1116 = vmatpush1.xpose.msra.mxu0 0.0
    %1117 = vmatprep.subr.mxu0 0.0
    %1118 = vmatpush1.xpose.msra.mxu0 0.0
    %1119 = vmatprep.subr.mxu0 0.0
    %1120 = vmatpush1.xpose.msra.mxu0 0.0
    %1121 = vmatprep.subr.mxu0 0.0
    %1122 = vmatpush1.xpose.msra.mxu0 0.0
    %1123 = vmatprep.subr.mxu0 0.0
    %1124 = vmatpush1.xpose.msra.mxu0 0.0
    %1125 = vmatprep.subr.mxu0 0.0
    %1126 = vmatpush1.xpose.msra.mxu0 0.0
    %1127 = vmatprep.subr.mxu0 0.0
    %1128 = vmatpush1.xpose.msra.mxu0 0.0
    %1129 = vmatprep.subr.mxu0 0.0
    %1130 = vmatpush1.xpose.msra.mxu0 0.0
    %1131 = vmatprep.subr.mxu0 0.0
    %1132 = vmatpush1.xpose.msra.mxu0 0.0
    %1133 = vmatprep.subr.mxu0 0.0
    %1134 = vmatpush1.xpose.msra.mxu0 0.0
    %1135 = vmatprep.mubr.f32.mxu0 0.0
    %1136 = vmatmul.mubr.f32.gmra.mrb[0].mxu0 %v1066
    %v1137 = vpop.f32.mrb[0].mxu0
    %v1138 = vadd.f32 0.0, %v1137
    %v1139 = vpop.f32.mrb[0].mxu0
    %1140 = vdwg.mxu0
    %v1142 = vsel %vm785, %v892, 0
    %v1145 = vsel %vm785, %v900, 0
    %1147 = vmatprep.subr.mxu0 0.0
    %1148 = vmatpush1.xpose.msra.mxu0 %v1145
    %1149 = vmatprep.subr.mxu0 0.0
    %1150 = vmatpush1.xpose.msra.mxu0 0.0
    %1151 = vmatprep.subr.mxu0 0.0
    %1152 = vmatpush1.xpose.msra.mxu0 0.0
    %1153 = vmatprep.subr.mxu0 0.0
    %1154 = vmatpush1.xpose.msra.mxu0 0.0
    %1155 = vmatprep.subr.mxu0 0.0
    %1156 = vmatpush1.xpose.msra.mxu0 0.0
    %1157 = vmatprep.subr.mxu0 0.0
    %1158 = vmatpush1.xpose.msra.mxu0 0.0
    %1159 = vmatprep.subr.mxu0 0.0
    %1160 = vmatpush1.xpose.msra.mxu0 0.0
    %1161 = vmatprep.subr.mxu0 0.0
    %1162 = vmatpush1.xpose.msra.mxu0 0.0
    %1163 = vmatprep.subr.mxu0 0.0
    %1164 = vmatpush1.xpose.msra.mxu0 0.0
    %1165 = vmatprep.subr.mxu0 0.0
    %1166 = vmatpush1.xpose.msra.mxu0 0.0
    %1167 = vmatprep.subr.mxu0 0.0
    %1168 = vmatpush1.xpose.msra.mxu0 0.0
    %1169 = vmatprep.subr.mxu0 0.0
    %1170 = vmatpush1.xpose.msra.mxu0 0.0
    %1171 = vmatprep.subr.mxu0 0.0
    %1172 = vmatpush1.xpose.msra.mxu0 0.0
    %1173 = vmatprep.subr.mxu0 0.0
    %1174 = vmatpush1.xpose.msra.mxu0 0.0
    %1175 = vmatprep.subr.mxu0 0.0
    %1176 = vmatpush1.xpose.msra.mxu0 0.0
    %1177 = vmatprep.subr.mxu0 0.0
    %1178 = vmatpush1.xpose.msra.mxu0 0.0
    %1179 = vmatprep.subr.mxu0 0.0
    %1180 = vmatpush1.xpose.msra.mxu0 0.0
    %1181 = vmatprep.subr.mxu0 0.0
    %1182 = vmatpush1.xpose.msra.mxu0 0.0
    %1183 = vmatprep.subr.mxu0 0.0
    %1184 = vmatpush1.xpose.msra.mxu0 0.0
    %1185 = vmatprep.subr.mxu0 0.0
    %1186 = vmatpush1.xpose.msra.mxu0 0.0
    %1187 = vmatprep.subr.mxu0 0.0
    %1188 = vmatpush1.xpose.msra.mxu0 0.0
    %1189 = vmatprep.subr.mxu0 0.0
    %1190 = vmatpush1.xpose.msra.mxu0 0.0
    %1191 = vmatprep.subr.mxu0 0.0
    %1192 = vmatpush1.xpose.msra.mxu0 0.0
    %1193 = vmatprep.subr.mxu0 0.0
    %1194 = vmatpush1.xpose.msra.mxu0 0.0
    %1195 = vmatprep.subr.mxu0 0.0
    %1196 = vmatpush1.xpose.msra.mxu0 0.0
    %1197 = vmatprep.subr.mxu0 0.0
    %1198 = vmatpush1.xpose.msra.mxu0 0.0
    %1199 = vmatprep.subr.mxu0 0.0
    %1200 = vmatpush1.xpose.msra.mxu0 0.0
    %1201 = vmatprep.subr.mxu0 0.0
    %1202 = vmatpush1.xpose.msra.mxu0 0.0
    %1203 = vmatprep.subr.mxu0 0.0
    %1204 = vmatpush1.xpose.msra.mxu0 0.0
    %1205 = vmatprep.subr.mxu0 0.0
    %1206 = vmatpush1.xpose.msra.mxu0 0.0
    %1207 = vmatprep.subr.mxu0 0.0
    %1208 = vmatpush1.xpose.msra.mxu0 0.0
    %1209 = vmatprep.subr.mxu0 0.0
    %1210 = vmatpush1.xpose.msra.mxu0 0.0
    %1211 = vmatprep.mubr.f32.mxu0 0.0
    %1212 = vmatmul.mubr.f32.gmra.mrb[0].mxu0 %v1142
    %v1213 = vpop.f32.mrb[0].mxu0
    %v1214 = vadd.f32 0.0, %v1213
    %v1215 = vpop.f32.mrb[0].mxu0
    %1216 = vdwg.mxu0
    %v1218 = vsel %vm785, %v893, 0
    %v1221 = vsel %vm785, %v901, 0
    %1223 = vmatprep.subr.mxu0 0.0
    %1224 = vmatpush1.xpose.msra.mxu0 %v1221
    %1225 = vmatprep.subr.mxu0 0.0
    %1226 = vmatpush1.xpose.msra.mxu0 0.0
    %1227 = vmatprep.subr.mxu0 0.0
    %1228 = vmatpush1.xpose.msra.mxu0 0.0
    %1229 = vmatprep.subr.mxu0 0.0
    %1230 = vmatpush1.xpose.msra.mxu0 0.0
    %1231 = vmatprep.subr.mxu0 0.0
    %1232 = vmatpush1.xpose.msra.mxu0 0.0
    %1233 = vmatprep.subr.mxu0 0.0
    %1234 = vmatpush1.xpose.msra.mxu0 0.0
    %1235 = vmatprep.subr.mxu0 0.0
    %1236 = vmatpush1.xpose.msra.mxu0 0.0
    %1237 = vmatprep.subr.mxu0 0.0
    %1238 = vmatpush1.xpose.msra.mxu0 0.0
    %1239 = vmatprep.subr.mxu0 0.0
    %1240 = vmatpush1.xpose.msra.mxu0 0.0
    %1241 = vmatprep.subr.mxu0 0.0
    %1242 = vmatpush1.xpose.msra.mxu0 0.0
    %1243 = vmatprep.subr.mxu0 0.0
    %1244 = vmatpush1.xpose.msra.mxu0 0.0
    %1245 = vmatprep.subr.mxu0 0.0
    %1246 = vmatpush1.xpose.msra.mxu0 0.0
    %1247 = vmatprep.subr.mxu0 0.0
    %1248 = vmatpush1.xpose.msra.mxu0 0.0
    %1249 = vmatprep.subr.mxu0 0.0
    %1250 = vmatpush1.xpose.msra.mxu0 0.0
    %1251 = vmatprep.subr.mxu0 0.0
    %1252 = vmatpush1.xpose.msra.mxu0 0.0
    %1253 = vmatprep.subr.mxu0 0.0
    %1254 = vmatpush1.xpose.msra.mxu0 0.0
    %1255 = vmatprep.subr.mxu0 0.0
    %1256 = vmatpush1.xpose.msra.mxu0 0.0
    %1257 = vmatprep.subr.mxu0 0.0
    %1258 = vmatpush1.xpose.msra.mxu0 0.0
    %1259 = vmatprep.subr.mxu0 0.0
    %1260 = vmatpush1.xpose.msra.mxu0 0.0
    %1261 = vmatprep.subr.mxu0 0.0
    %1262 = vmatpush1.xpose.msra.mxu0 0.0
    %1263 = vmatprep.subr.mxu0 0.0
    %1264 = vmatpush1.xpose.msra.mxu0 0.0
    %1265 = vmatprep.subr.mxu0 0.0
    %1266 = vmatpush1.xpose.msra.mxu0 0.0
    %1267 = vmatprep.subr.mxu0 0.0
    %1268 = vmatpush1.xpose.msra.mxu0 0.0
    %1269 = vmatprep.subr.mxu0 0.0
    %1270 = vmatpush1.xpose.msra.mxu0 0.0
    %1271 = vmatprep.subr.mxu0 0.0
    %1272 = vmatpush1.xpose.msra.mxu0 0.0
    %1273 = vmatprep.subr.mxu0 0.0
    %1274 = vmatpush1.xpose.msra.mxu0 0.0
    %1275 = vmatprep.subr.mxu0 0.0
    %1276 = vmatpush1.xpose.msra.mxu0 0.0
    %1277 = vmatprep.subr.mxu0 0.0
    %1278 = vmatpush1.xpose.msra.mxu0 0.0
    %1279 = vmatprep.subr.mxu0 0.0
    %1280 = vmatpush1.xpose.msra.mxu0 0.0
    %1281 = vmatprep.subr.mxu0 0.0
    %1282 = vmatpush1.xpose.msra.mxu0 0.0
    %1283 = vmatprep.subr.mxu0 0.0
    %1284 = vmatpush1.xpose.msra.mxu0 0.0
    %1285 = vmatprep.subr.mxu0 0.0
    %1286 = vmatpush1.xpose.msra.mxu0 0.0
    %1287 = vmatprep.mubr.f32.mxu0 0.0
    %1288 = vmatmul.mubr.f32.gmra.mrb[0].mxu0 %v1218
    %v1289 = vpop.f32.mrb[0].mxu0
    %v1290 = vadd.f32 0.0, %v1289
    %v1291 = vpop.f32.mrb[0].mxu0
    %1292 = vdwg.mxu0
    %v1294 = vsel %vm785, %v894, 0
    %v1297 = vsel %vm785, %v902, 0
    %1299 = vmatprep.subr.mxu0 0.0
    %1300 = vmatpush1.xpose.msra.mxu0 %v1297
    %1301 = vmatprep.subr.mxu0 0.0
    %1302 = vmatpush1.xpose.msra.mxu0 0.0
    %1303 = vmatprep.subr.mxu0 0.0
    %1304 = vmatpush1.xpose.msra.mxu0 0.0
    %1305 = vmatprep.subr.mxu0 0.0
    %1306 = vmatpush1.xpose.msra.mxu0 0.0
    %1307 = vmatprep.subr.mxu0 0.0
    %1308 = vmatpush1.xpose.msra.mxu0 0.0
    %1309 = vmatprep.subr.mxu0 0.0
    %1310 = vmatpush1.xpose.msra.mxu0 0.0
    %1311 = vmatprep.subr.mxu0 0.0
    %1312 = vmatpush1.xpose.msra.mxu0 0.0
    %1313 = vmatprep.subr.mxu0 0.0
    %1314 = vmatpush1.xpose.msra.mxu0 0.0
    %1315 = vmatprep.subr.mxu0 0.0
    %1316 = vmatpush1.xpose.msra.mxu0 0.0
    %1317 = vmatprep.subr.mxu0 0.0
    %1318 = vmatpush1.xpose.msra.mxu0 0.0
    %1319 = vmatprep.subr.mxu0 0.0
    %1320 = vmatpush1.xpose.msra.mxu0 0.0
    %1321 = vmatprep.subr.mxu0 0.0
    %1322 = vmatpush1.xpose.msra.mxu0 0.0
    %1323 = vmatprep.subr.mxu0 0.0
    %1324 = vmatpush1.xpose.msra.mxu0 0.0
    %1325 = vmatprep.subr.mxu0 0.0
    %1326 = vmatpush1.xpose.msra.mxu0 0.0
    %1327 = vmatprep.subr.mxu0 0.0
    %1328 = vmatpush1.xpose.msra.mxu0 0.0
    %1329 = vmatprep.subr.mxu0 0.0
    %1330 = vmatpush1.xpose.msra.mxu0 0.0
    %1331 = vmatprep.subr.mxu0 0.0
    %1332 = vmatpush1.xpose.msra.mxu0 0.0
    %1333 = vmatprep.subr.mxu0 0.0
    %1334 = vmatpush1.xpose.msra.mxu0 0.0
    %1335 = vmatprep.subr.mxu0 0.0
    %1336 = vmatpush1.xpose.msra.mxu0 0.0
    %1337 = vmatprep.subr.mxu0 0.0
    %1338 = vmatpush1.xpose.msra.mxu0 0.0
    %1339 = vmatprep.subr.mxu0 0.0
    %1340 = vmatpush1.xpose.msra.mxu0 0.0
    %1341 = vmatprep.subr.mxu0 0.0
    %1342 = vmatpush1.xpose.msra.mxu0 0.0
    %1343 = vmatprep.subr.mxu0 0.0
    %1344 = vmatpush1.xpose.msra.mxu0 0.0
    %1345 = vmatprep.subr.mxu0 0.0
    %1346 = vmatpush1.xpose.msra.mxu0 0.0
    %1347 = vmatprep.subr.mxu0 0.0
    %1348 = vmatpush1.xpose.msra.mxu0 0.0
    %1349 = vmatprep.subr.mxu0 0.0
    %1350 = vmatpush1.xpose.msra.mxu0 0.0
    %1351 = vmatprep.subr.mxu0 0.0
    %1352 = vmatpush1.xpose.msra.mxu0 0.0
    %1353 = vmatprep.subr.mxu0 0.0
    %1354 = vmatpush1.xpose.msra.mxu0 0.0
    %1355 = vmatprep.subr.mxu0 0.0
    %1356 = vmatpush1.xpose.msra.mxu0 0.0
    %1357 = vmatprep.subr.mxu0 0.0
    %1358 = vmatpush1.xpose.msra.mxu0 0.0
    %1359 = vmatprep.subr.mxu0 0.0
    %1360 = vmatpush1.xpose.msra.mxu0 0.0
    %1361 = vmatprep.subr.mxu0 0.0
    %1362 = vmatpush1.xpose.msra.mxu0 0.0
    %1363 = vmatprep.mubr.f32.mxu0 0.0
    %1364 = vmatmul.mubr.f32.gmra.mrb[0].mxu0 %v1294
    %v1365 = vpop.f32.mrb[0].mxu0
    %v1366 = vadd.f32 0.0, %v1365
    %v1367 = vpop.f32.mrb[0].mxu0
    %1368 = vdwg.mxu0
    %v1370 = vsel %vm785, %v895, 0
    %v1373 = vsel %vm785, %v903, 0
    %1375 = vmatprep.subr.mxu0 0.0
    %1376 = vmatpush1.xpose.msra.mxu0 %v1373
    %1377 = vmatprep.subr.mxu0 0.0
    %1378 = vmatpush1.xpose.msra.mxu0 0.0
    %1379 = vmatprep.subr.mxu0 0.0
    %1380 = vmatpush1.xpose.msra.mxu0 0.0
    %1381 = vmatprep.subr.mxu0 0.0
    %1382 = vmatpush1.xpose.msra.mxu0 0.0
    %1383 = vmatprep.subr.mxu0 0.0
    %1384 = vmatpush1.xpose.msra.mxu0 0.0
    %1385 = vmatprep.subr.mxu0 0.0
    %1386 = vmatpush1.xpose.msra.mxu0 0.0
    %1387 = vmatprep.subr.mxu0 0.0
    %1388 = vmatpush1.xpose.msra.mxu0 0.0
    %1389 = vmatprep.subr.mxu0 0.0
    %1390 = vmatpush1.xpose.msra.mxu0 0.0
    %1391 = vmatprep.subr.mxu0 0.0
    %1392 = vmatpush1.xpose.msra.mxu0 0.0
    %1393 = vmatprep.subr.mxu0 0.0
    %1394 = vmatpush1.xpose.msra.mxu0 0.0
    %1395 = vmatprep.subr.mxu0 0.0
    %1396 = vmatpush1.xpose.msra.mxu0 0.0
    %1397 = vmatprep.subr.mxu0 0.0
    %1398 = vmatpush1.xpose.msra.mxu0 0.0
    %1399 = vmatprep.subr.mxu0 0.0
    %1400 = vmatpush1.xpose.msra.mxu0 0.0
    %1401 = vmatprep.subr.mxu0 0.0
    %1402 = vmatpush1.xpose.msra.mxu0 0.0
    %1403 = vmatprep.subr.mxu0 0.0
    %1404 = vmatpush1.xpose.msra.mxu0 0.0
    %1405 = vmatprep.subr.mxu0 0.0
    %1406 = vmatpush1.xpose.msra.mxu0 0.0
    %1407 = vmatprep.subr.mxu0 0.0
    %1408 = vmatpush1.xpose.msra.mxu0 0.0
    %1409 = vmatprep.subr.mxu0 0.0
    %1410 = vmatpush1.xpose.msra.mxu0 0.0
    %1411 = vmatprep.subr.mxu0 0.0
    %1412 = vmatpush1.xpose.msra.mxu0 0.0
    %1413 = vmatprep.subr.mxu0 0.0
    %1414 = vmatpush1.xpose.msra.mxu0 0.0
    %1415 = vmatprep.subr.mxu0 0.0
    %1416 = vmatpush1.xpose.msra.mxu0 0.0
    %1417 = vmatprep.subr.mxu0 0.0
    %1418 = vmatpush1.xpose.msra.mxu0 0.0
    %1419 = vmatprep.subr.mxu0 0.0
    %1420 = vmatpush1.xpose.msra.mxu0 0.0
    %1421 = vmatprep.subr.mxu0 0.0
    %1422 = vmatpush1.xpose.msra.mxu0 0.0
    %1423 = vmatprep.subr.mxu0 0.0
    %1424 = vmatpush1.xpose.msra.mxu0 0.0
    %1425 = vmatprep.subr.mxu0 0.0
    %1426 = vmatpush1.xpose.msra.mxu0 0.0
    %1427 = vmatprep.subr.mxu0 0.0
    %1428 = vmatpush1.xpose.msra.mxu0 0.0
    %1429 = vmatprep.subr.mxu0 0.0
    %1430 = vmatpush1.xpose.msra.mxu0 0.0
    %1431 = vmatprep.subr.mxu0 0.0
    %1432 = vmatpush1.xpose.msra.mxu0 0.0
    %1433 = vmatprep.subr.mxu0 0.0
    %1434 = vmatpush1.xpose.msra.mxu0 0.0
    %1435 = vmatprep.subr.mxu0 0.0
    %1436 = vmatpush1.xpose.msra.mxu0 0.0
    %1437 = vmatprep.subr.mxu0 0.0
    %1438 = vmatpush1.xpose.msra.mxu0 0.0
    %1439 = vmatprep.mubr.f32.mxu0 0.0
    %1440 = vmatmul.mubr.f32.gmra.mrb[0].mxu0 %v1370
    %v1441 = vpop.f32.mrb[0].mxu0
    %v1442 = vadd.f32 0.0, %v1441
    %v1443 = vpop.f32.mrb[0].mxu0
    %1444 = vdwg.mxu0
    %v1446 = vsel %vm785, %v896, 0
    %v1449 = vsel %vm785, %v904, 0
    %1451 = vmatprep.subr.mxu0 0.0
    %1452 = vmatpush1.xpose.msra.mxu0 %v1449
    %1453 = vmatprep.subr.mxu0 0.0
    %1454 = vmatpush1.xpose.msra.mxu0 0.0
    %1455 = vmatprep.subr.mxu0 0.0
    %1456 = vmatpush1.xpose.msra.mxu0 0.0
    %1457 = vmatprep.subr.mxu0 0.0
    %1458 = vmatpush1.xpose.msra.mxu0 0.0
    %1459 = vmatprep.subr.mxu0 0.0
    %1460 = vmatpush1.xpose.msra.mxu0 0.0
    %1461 = vmatprep.subr.mxu0 0.0
    %1462 = vmatpush1.xpose.msra.mxu0 0.0
    %1463 = vmatprep.subr.mxu0 0.0
    %1464 = vmatpush1.xpose.msra.mxu0 0.0
    %1465 = vmatprep.subr.mxu0 0.0
    %1466 = vmatpush1.xpose.msra.mxu0 0.0
    %1467 = vmatprep.subr.mxu0 0.0
    %1468 = vmatpush1.xpose.msra.mxu0 0.0
    %1469 = vmatprep.subr.mxu0 0.0
    %1470 = vmatpush1.xpose.msra.mxu0 0.0
    %1471 = vmatprep.subr.mxu0 0.0
    %1472 = vmatpush1.xpose.msra.mxu0 0.0
    %1473 = vmatprep.subr.mxu0 0.0
    %1474 = vmatpush1.xpose.msra.mxu0 0.0
    %1475 = vmatprep.subr.mxu0 0.0
    %1476 = vmatpush1.xpose.msra.mxu0 0.0
    %1477 = vmatprep.subr.mxu0 0.0
    %1478 = vmatpush1.xpose.msra.mxu0 0.0
    %1479 = vmatprep.subr.mxu0 0.0
    %1480 = vmatpush1.xpose.msra.mxu0 0.0
    %1481 = vmatprep.subr.mxu0 0.0
    %1482 = vmatpush1.xpose.msra.mxu0 0.0
    %1483 = vmatprep.subr.mxu0 0.0
    %1484 = vmatpush1.xpose.msra.mxu0 0.0
    %1485 = vmatprep.subr.mxu0 0.0
    %1486 = vmatpush1.xpose.msra.mxu0 0.0
    %1487 = vmatprep.subr.mxu0 0.0
    %1488 = vmatpush1.xpose.msra.mxu0 0.0
    %1489 = vmatprep.subr.mxu0 0.0
    %1490 = vmatpush1.xpose.msra.mxu0 0.0
    %1491 = vmatprep.subr.mxu0 0.0
    %1492 = vmatpush1.xpose.msra.mxu0 0.0
    %1493 = vmatprep.subr.mxu0 0.0
    %1494 = vmatpush1.xpose.msra.mxu0 0.0
    %1495 = vmatprep.subr.mxu0 0.0
    %1496 = vmatpush1.xpose.msra.mxu0 0.0
    %1497 = vmatprep.subr.mxu0 0.0
    %1498 = vmatpush1.xpose.msra.mxu0 0.0
    %1499 = vmatprep.subr.mxu0 0.0
    %1500 = vmatpush1.xpose.msra.mxu0 0.0
    %1501 = vmatprep.subr.mxu0 0.0
    %1502 = vmatpush1.xpose.msra.mxu0 0.0
    %1503 = vmatprep.subr.mxu0 0.0
    %1504 = vmatpush1.xpose.msra.mxu0 0.0
    %1505 = vmatprep.subr.mxu0 0.0
    %1506 = vmatpush1.xpose.msra.mxu0 0.0
    %1507 = vmatprep.subr.mxu0 0.0
    %1508 = vmatpush1.xpose.msra.mxu0 0.0
    %1509 = vmatprep.subr.mxu0 0.0
    %1510 = vmatpush1.xpose.msra.mxu0 0.0
    %1511 = vmatprep.subr.mxu0 0.0
    %1512 = vmatpush1.xpose.msra.mxu0 0.0
    %1513 = vmatprep.subr.mxu0 0.0
    %1514 = vmatpush1.xpose.msra.mxu0 0.0
    %1515 = vmatprep.mubr.f32.mxu0 0.0
    %1516 = vmatmul.mubr.f32.gmra.mrb[0].mxu0 %v1446
    %v1517 = vpop.f32.mrb[0].mxu0
    %v1518 = vadd.f32 0.0, %v1517
    %v1519 = vpop.f32.mrb[0].mxu0
    %1520 = vdwg.mxu0
    %v1521 = vmul.f32 %v986, 0.17677669
    %v1522 = vmul.f32 %v1062, 0.17677669
    %v1523 = vmul.f32 %v1138, 0.17677669
    %v1524 = vmul.f32 %v1214, 0.17677669
    %v1525 = vmul.f32 %v1290, 0.17677669
    %v1526 = vmul.f32 %v1366, 0.17677669
    %v1527 = vmul.f32 %v1442, 0.17677669
    %v1528 = vmul.f32 %v1518, 0.17677669
    %v1529 = vld [vmem:[%s4] sm:$0xff]
    %v1530 = vld [vmem:[%s4 + $0x8] sm:$0xff]
    %v1531 = vld [vmem:[%s4 + $0x10] sm:$0xff]
    %v1532 = vld [vmem:[%s4 + $0x18] sm:$0xff]
    %v1533 = vld [vmem:[%s4 + $0x20] sm:$0xff]
    %v1534 = vld [vmem:[%s4 + $0x28] sm:$0xff]
    %v1535 = vld [vmem:[%s4 + $0x30] sm:$0xff]
    %v1536 = vld [vmem:[%s4 + $0x38] sm:$0xff]
    %v1537 = vld [vmem:[%s4 + $0x40] sm:$0xff]
    %v1538 = vld [vmem:[%s4 + $0x48] sm:$0xff]
    %v1539 = vld [vmem:[%s4 + $0x50] sm:$0xff]
    %v1540 = vld [vmem:[%s4 + $0x58] sm:$0xff]
    %v1541 = vld [vmem:[%s4 + $0x60] sm:$0xff]
    %v1542 = vld [vmem:[%s4 + $0x68] sm:$0xff]
    %v1543 = vld [vmem:[%s4 + $0x70] sm:$0xff]
    %v1544 = vld [vmem:[%s4 + $0x78] sm:$0xff]
    %v1545 = vld [vmem:[%s4 + $0x80] sm:$0xff]
    %v1546 = vld [vmem:[%s4 + $0x88] sm:$0xff]
    %v1547 = vld [vmem:[%s4 + $0x90] sm:$0xff]
    %v1548 = vld [vmem:[%s4 + $0x98] sm:$0xff]
    %v1549 = vld [vmem:[%s4 + $0xa0] sm:$0xff]
    %v1550 = vld [vmem:[%s4 + $0xa8] sm:$0xff]
    %v1551 = vld [vmem:[%s4 + $0xb0] sm:$0xff]
    %v1552 = vld [vmem:[%s4 + $0xb8] sm:$0xff]
    %v1553 = vld [vmem:[%s4 + $0xc0] sm:$0xff]
    %v1554 = vld [vmem:[%s4 + $0xc8] sm:$0xff]
    %v1555 = vld [vmem:[%s4 + $0xd0] sm:$0xff]
    %v1556 = vld [vmem:[%s4 + $0xd8] sm:$0xff]
    %v1557 = vld [vmem:[%s4 + $0xe0] sm:$0xff]
    %v1558 = vld [vmem:[%s4 + $0xe8] sm:$0xff]
    %v1559 = vld [vmem:[%s4 + $0xf0] sm:$0xff]
    %v1560 = vld [vmem:[%s4 + $0xf8] sm:$0xff]
    %v1561 = vld [vmem:[%s4 + $0x100] sm:$0xff]
    %v1562 = vld [vmem:[%s4 + $0x108] sm:$0xff]
    %v1563 = vld [vmem:[%s4 + $0x110] sm:$0xff]
    %v1564 = vld [vmem:[%s4 + $0x118] sm:$0xff]
    %v1565 = vld [vmem:[%s4 + $0x120] sm:$0xff]
    %v1566 = vld [vmem:[%s4 + $0x128] sm:$0xff]
    %v1567 = vld [vmem:[%s4 + $0x130] sm:$0xff]
    %v1568 = vld [vmem:[%s4 + $0x138] sm:$0xff]
    %v1569 = vld [vmem:[%s4 + $0x140] sm:$0xff]
    %v1570 = vld [vmem:[%s4 + $0x148] sm:$0xff]
    %v1571 = vld [vmem:[%s4 + $0x150] sm:$0xff]
    %v1572 = vld [vmem:[%s4 + $0x158] sm:$0xff]
    %v1573 = vld [vmem:[%s4 + $0x160] sm:$0xff]
    %v1574 = vld [vmem:[%s4 + $0x168] sm:$0xff]
    %v1575 = vld [vmem:[%s4 + $0x170] sm:$0xff]
    %v1576 = vld [vmem:[%s4 + $0x178] sm:$0xff]
    %v1577 = vld [vmem:[%s4 + $0x180] sm:$0xff]
    %v1578 = vld [vmem:[%s4 + $0x188] sm:$0xff]
    %v1579 = vld [vmem:[%s4 + $0x190] sm:$0xff]
    %v1580 = vld [vmem:[%s4 + $0x198] sm:$0xff]
    %v1581 = vld [vmem:[%s4 + $0x1a0] sm:$0xff]
    %v1582 = vld [vmem:[%s4 + $0x1a8] sm:$0xff]
    %v1583 = vld [vmem:[%s4 + $0x1b0] sm:$0xff]
    %v1584 = vld [vmem:[%s4 + $0x1b8] sm:$0xff]
    %v1585 = vld [vmem:[%s4 + $0x1c0] sm:$0xff]
    %v1586 = vld [vmem:[%s4 + $0x1c8] sm:$0xff]
    %v1587 = vld [vmem:[%s4 + $0x1d0] sm:$0xff]
    %v1588 = vld [vmem:[%s4 + $0x1d8] sm:$0xff]
    %v1589 = vld [vmem:[%s4 + $0x1e0] sm:$0xff]
    %v1590 = vld [vmem:[%s4 + $0x1e8] sm:$0xff]
    %v1591 = vld [vmem:[%s4 + $0x1f0] sm:$0xff]
    %v1592 = vld [vmem:[%s4 + $0x1f8] sm:$0xff]
    %v1593 = vsel %vm785, %v1521, -inf
    %v1594 = vsel %vm785, %v1522, -inf
    %v1595 = vsel %vm785, %v1523, -inf
    %v1596 = vsel %vm785, %v1524, -inf
    %v1597 = vmax.f32 %v1593, %v1594
    %v1598 = vmax.f32 %v1595, %v1596
    %v1599 = vmax.f32 %v1597, %v1598
    %v1600 = vsub.f32 %v1521, %v1599
    %v1601 = vsub.f32 %v1522, %v1599
    %v1602 = vsub.f32 %v1523, %v1599
    %v1603 = vsub.f32 %v1524, %v1599
    %v1604 = vmul.f32 %v1600, 1.442695
    %v1605 = vpow.pop %v1604
    %v1606 = vmul.f32 %v1601, 1.442695
    %v1607 = vpow.pop %v1606
    %v1608 = vmul.f32 %v1602, 1.442695
    %v1609 = vpow.pop %v1608
    %v1610 = vmul.f32 %v1603, 1.442695
    %v1611 = vpow.pop %v1610
    %v1612 = vsel %vm785, %v1605, 0.0
    %v1613 = vsel %vm785, %v1607, 0.0
    %v1614 = vadd.f32 %v1612, %v1613
    %v1615 = vsel %vm785, %v1609, 0.0
    %v1616 = vadd.f32 %v1614, %v1615
    %v1617 = vsel %vm785, %v1611, 0.0
    %v1618 = vadd.f32 %v1616, %v1617
    %v1619 = vrcp.pop %v1618
    %v1620 = vmul.f32 %v1605, %v1619
    %v1621 = vmul.f32 %v1607, %v1619
    %v1622 = vmul.f32 %v1609, %v1619
    %v1623 = vmul.f32 %v1611, %v1619
    %v1625 = vsel %vm785, %v1620, 0
    %1627 = vmatprep.subr.mxu0 0.0
    %1628 = vmatpush1.msra.mxu0 %v905
    %1629 = vmatprep.subr.mxu0 0.0
    %1630 = vmatpush1.msra.mxu0 0.0
    %1631 = vmatprep.subr.mxu0 0.0
    %1632 = vmatpush1.msra.mxu0 0.0
    %1633 = vmatprep.subr.mxu0 0.0
    %1634 = vmatpush1.msra.mxu0 0.0
    %1635 = vmatprep.subr.mxu0 0.0
    %1636 = vmatpush1.msra.mxu0 0.0
    %1637 = vmatprep.subr.mxu0 0.0
    %1638 = vmatpush1.msra.mxu0 0.0
    %1639 = vmatprep.subr.mxu0 0.0
    %1640 = vmatpush1.msra.mxu0 0.0
    %1641 = vmatprep.subr.mxu0 0.0
    %1642 = vmatpush1.msra.mxu0 0.0
    %1643 = vmatprep.subr.mxu0 0.0
    %1644 = vmatpush1.msra.mxu0 0.0
    %1645 = vmatprep.subr.mxu0 0.0
    %1646 = vmatpush1.msra.mxu0 0.0
    %1647 = vmatprep.subr.mxu0 0.0
    %1648 = vmatpush1.msra.mxu0 0.0
    %1649 = vmatprep.subr.mxu0 0.0
    %1650 = vmatpush1.msra.mxu0 0.0
    %1651 = vmatprep.subr.mxu0 0.0
    %1652 = vmatpush1.msra.mxu0 0.0
    %1653 = vmatprep.subr.mxu0 0.0
    %1654 = vmatpush1.msra.mxu0 0.0
    %1655 = vmatprep.subr.mxu0 0.0
    %1656 = vmatpush1.msra.mxu0 0.0
    %1657 = vmatprep.subr.mxu0 0.0
    %1658 = vmatpush1.msra.mxu0 0.0
    %1659 = vmatprep.subr.mxu0 0.0
    %1660 = vmatpush1.msra.mxu0 0.0
    %1661 = vmatprep.subr.mxu0 0.0
    %1662 = vmatpush1.msra.mxu0 0.0
    %1663 = vmatprep.subr.mxu0 0.0
    %1664 = vmatpush1.msra.mxu0 0.0
    %1665 = vmatprep.subr.mxu0 0.0
    %1666 = vmatpush1.msra.mxu0 0.0
    %1667 = vmatprep.subr.mxu0 0.0
    %1668 = vmatpush1.msra.mxu0 0.0
    %1669 = vmatprep.subr.mxu0 0.0
    %1670 = vmatpush1.msra.mxu0 0.0
    %1671 = vmatprep.subr.mxu0 0.0
    %1672 = vmatpush1.msra.mxu0 0.0
    %1673 = vmatprep.subr.mxu0 0.0
    %1674 = vmatpush1.msra.mxu0 0.0
    %1675 = vmatprep.subr.mxu0 0.0
    %1676 = vmatpush1.msra.mxu0 0.0
    %1677 = vmatprep.subr.mxu0 0.0
    %1678 = vmatpush1.msra.mxu0 0.0
    %1679 = vmatprep.subr.mxu0 0.0
    %1680 = vmatpush1.msra.mxu0 0.0
    %1681 = vmatprep.subr.mxu0 0.0
    %1682 = vmatpush1.msra.mxu0 0.0
    %1683 = vmatprep.subr.mxu0 0.0
    %1684 = vmatpush1.msra.mxu0 0.0
    %1685 = vmatprep.subr.mxu0 0.0
    %1686 = vmatpush1.msra.mxu0 0.0
    %1687 = vmatprep.subr.mxu0 0.0
    %1688 = vmatpush1.msra.mxu0 0.0
    %1689 = vmatprep.subr.mxu0 0.0
    %1690 = vmatpush1.msra.mxu0 0.0
    %1691 = vmatprep.mubr.f32.mxu0 0.0
    %1692 = vmatmul.mubr.f32.gmra.mrb[0].mxu0 %v1625
    %v1693 = vpop.f32.mrb[0].mxu0
    %v1694 = vadd.f32 0.0, %v1693
    %v1695 = vpop.f32.mrb[0].mxu0
    %1696 = vdwg.mxu0
    %v1698 = vsel %vm785, %v1621, 0
    %1700 = vmatprep.subr.mxu0 0.0
    %1701 = vmatpush1.msra.mxu0 %v906
    %1702 = vmatprep.subr.mxu0 0.0
    %1703 = vmatpush1.msra.mxu0 0.0
    %1704 = vmatprep.subr.mxu0 0.0
    %1705 = vmatpush1.msra.mxu0 0.0
    %1706 = vmatprep.subr.mxu0 0.0
    %1707 = vmatpush1.msra.mxu0 0.0
    %1708 = vmatprep.subr.mxu0 0.0
    %1709 = vmatpush1.msra.mxu0 0.0
    %1710 = vmatprep.subr.mxu0 0.0
    %1711 = vmatpush1.msra.mxu0 0.0
    %1712 = vmatprep.subr.mxu0 0.0
    %1713 = vmatpush1.msra.mxu0 0.0
    %1714 = vmatprep.subr.mxu0 0.0
    %1715 = vmatpush1.msra.mxu0 0.0
    %1716 = vmatprep.subr.mxu0 0.0
    %1717 = vmatpush1.msra.mxu0 0.0
    %1718 = vmatprep.subr.mxu0 0.0
    %1719 = vmatpush1.msra.mxu0 0.0
    %1720 = vmatprep.subr.mxu0 0.0
    %1721 = vmatpush1.msra.mxu0 0.0
    %1722 = vmatprep.subr.mxu0 0.0
    %1723 = vmatpush1.msra.mxu0 0.0
    %1724 = vmatprep.subr.mxu0 0.0
    %1725 = vmatpush1.msra.mxu0 0.0
    %1726 = vmatprep.subr.mxu0 0.0
    %1727 = vmatpush1.msra.mxu0 0.0
    %1728 = vmatprep.subr.mxu0 0.0
    %1729 = vmatpush1.msra.mxu0 0.0
    %1730 = vmatprep.subr.mxu0 0.0
    %1731 = vmatpush1.msra.mxu0 0.0
    %1732 = vmatprep.subr.mxu0 0.0
    %1733 = vmatpush1.msra.mxu0 0.0
    %1734 = vmatprep.subr.mxu0 0.0
    %1735 = vmatpush1.msra.mxu0 0.0
    %1736 = vmatprep.subr.mxu0 0.0
    %1737 = vmatpush1.msra.mxu0 0.0
    %1738 = vmatprep.subr.mxu0 0.0
    %1739 = vmatpush1.msra.mxu0 0.0
    %1740 = vmatprep.subr.mxu0 0.0
    %1741 = vmatpush1.msra.mxu0 0.0
    %1742 = vmatprep.subr.mxu0 0.0
    %1743 = vmatpush1.msra.mxu0 0.0
    %1744 = vmatprep.subr.mxu0 0.0
    %1745 = vmatpush1.msra.mxu0 0.0
    %1746 = vmatprep.subr.mxu0 0.0
    %1747 = vmatpush1.msra.mxu0 0.0
    %1748 = vmatprep.subr.mxu0 0.0
    %1749 = vmatpush1.msra.mxu0 0.0
    %1750 = vmatprep.subr.mxu0 0.0
    %1751 = vmatpush1.msra.mxu0 0.0
    %1752 = vmatprep.subr.mxu0 0.0
    %1753 = vmatpush1.msra.mxu0 0.0
    %1754 = vmatprep.subr.mxu0 0.0
    %1755 = vmatpush1.msra.mxu0 0.0
    %1756 = vmatprep.subr.mxu0 0.0
    %1757 = vmatpush1.msra.mxu0 0.0
    %1758 = vmatprep.subr.mxu0 0.0
    %1759 = vmatpush1.msra.mxu0 0.0
    %1760 = vmatprep.subr.mxu0 0.0
    %1761 = vmatpush1.msra.mxu0 0.0
    %1762 = vmatprep.subr.mxu0 0.0
    %1763 = vmatpush1.msra.mxu0 0.0
    %1764 = vmatprep.mubr.f32.mxu0 0.0
    %1765 = vmatmul.mubr.f32.gmra.mrb[0].mxu0 %v1698
    %v1766 = vpop.f32.mrb[0].mxu0
    %v1767 = vadd.f32 0.0, %v1766
    %v1768 = vpop.f32.mrb[0].mxu0
    %1769 = vdwg.mxu0
    %v1771 = vsel %vm785, %v1622, 0
    %1773 = vmatprep.subr.mxu0 0.0
    %1774 = vmatpush1.msra.mxu0 %v907
    %1775 = vmatprep.subr.mxu0 0.0
    %1776 = vmatpush1.msra.mxu0 0.0
    %1777 = vmatprep.subr.mxu0 0.0
    %1778 = vmatpush1.msra.mxu0 0.0
    %1779 = vmatprep.subr.mxu0 0.0
    %1780 = vmatpush1.msra.mxu0 0.0
    %1781 = vmatprep.subr.mxu0 0.0
    %1782 = vmatpush1.msra.mxu0 0.0
    %1783 = vmatprep.subr.mxu0 0.0
    %1784 = vmatpush1.msra.mxu0 0.0
    %1785 = vmatprep.subr.mxu0 0.0
    %1786 = vmatpush1.msra.mxu0 0.0
    %1787 = vmatprep.subr.mxu0 0.0
    %1788 = vmatpush1.msra.mxu0 0.0
    %1789 = vmatprep.subr.mxu0 0.0
    %1790 = vmatpush1.msra.mxu0 0.0
    %1791 = vmatprep.subr.mxu0 0.0
    %1792 = vmatpush1.msra.mxu0 0.0
    %1793 = vmatprep.subr.mxu0 0.0
    %1794 = vmatpush1.msra.mxu0 0.0
    %1795 = vmatprep.subr.mxu0 0.0
    %1796 = vmatpush1.msra.mxu0 0.0
    %1797 = vmatprep.subr.mxu0 0.0
    %1798 = vmatpush1.msra.mxu0 0.0
    %1799 = vmatprep.subr.mxu0 0.0
    %1800 = vmatpush1.msra.mxu0 0.0
    %1801 = vmatprep.subr.mxu0 0.0
    %1802 = vmatpush1.msra.mxu0 0.0
    %1803 = vmatprep.subr.mxu0 0.0
    %1804 = vmatpush1.msra.mxu0 0.0
    %1805 = vmatprep.subr.mxu0 0.0
    %1806 = vmatpush1.msra.mxu0 0.0
    %1807 = vmatprep.subr.mxu0 0.0
    %1808 = vmatpush1.msra.mxu0 0.0
    %1809 = vmatprep.subr.mxu0 0.0
    %1810 = vmatpush1.msra.mxu0 0.0
    %1811 = vmatprep.subr.mxu0 0.0
    %1812 = vmatpush1.msra.mxu0 0.0
    %1813 = vmatprep.subr.mxu0 0.0
    %1814 = vmatpush1.msra.mxu0 0.0
    %1815 = vmatprep.subr.mxu0 0.0
    %1816 = vmatpush1.msra.mxu0 0.0
    %1817 = vmatprep.subr.mxu0 0.0
    %1818 = vmatpush1.msra.mxu0 0.0
    %1819 = vmatprep.subr.mxu0 0.0
    %1820 = vmatpush1.msra.mxu0 0.0
    %1821 = vmatprep.subr.mxu0 0.0
    %1822 = vmatpush1.msra.mxu0 0.0
    %1823 = vmatprep.subr.mxu0 0.0
    %1824 = vmatpush1.msra.mxu0 0.0
    %1825 = vmatprep.subr.mxu0 0.0
    %1826 = vmatpush1.msra.mxu0 0.0
    %1827 = vmatprep.subr.mxu0 0.0
    %1828 = vmatpush1.msra.mxu0 0.0
    %1829 = vmatprep.subr.mxu0 0.0
    %1830 = vmatpush1.msra.mxu0 0.0
    %1831 = vmatprep.subr.mxu0 0.0
    %1832 = vmatpush1.msra.mxu0 0.0
    %1833 = vmatprep.subr.mxu0 0.0
    %1834 = vmatpush1.msra.mxu0 0.0
    %1835 = vmatprep.subr.mxu0 0.0
    %1836 = vmatpush1.msra.mxu0 0.0
    %1837 = vmatprep.mubr.f32.mxu0 0.0
    %1838 = vmatmul.mubr.f32.gmra.mrb[0].mxu0 %v1771
    %v1839 = vpop.f32.mrb[0].mxu0
    %v1840 = vadd.f32 0.0, %v1839
    %v1841 = vpop.f32.mrb[0].mxu0
    %1842 = vdwg.mxu0
    %v1844 = vsel %vm785, %v1623, 0
    %1846 = vmatprep.subr.mxu0 0.0
    %1847 = vmatpush1.msra.mxu0 %v908
    %1848 = vmatprep.subr.mxu0 0.0
    %1849 = vmatpush1.msra.mxu0 0.0
    %1850 = vmatprep.subr.mxu0 0.0
    %1851 = vmatpush1.msra.mxu0 0.0
    %1852 = vmatprep.subr.mxu0 0.0
    %1853 = vmatpush1.msra.mxu0 0.0
    %1854 = vmatprep.subr.mxu0 0.0
    %1855 = vmatpush1.msra.mxu0 0.0
    %1856 = vmatprep.subr.mxu0 0.0
    %1857 = vmatpush1.msra.mxu0 0.0
    %1858 = vmatprep.subr.mxu0 0.0
    %1859 = vmatpush1.msra.mxu0 0.0
    %1860 = vmatprep.subr.mxu0 0.0
    %1861 = vmatpush1.msra.mxu0 0.0
    %1862 = vmatprep.subr.mxu0 0.0
    %1863 = vmatpush1.msra.mxu0 0.0
    %1864 = vmatprep.subr.mxu0 0.0
    %1865 = vmatpush1.msra.mxu0 0.0
    %1866 = vmatprep.subr.mxu0 0.0
    %1867 = vmatpush1.msra.mxu0 0.0
    %1868 = vmatprep.subr.mxu0 0.0
    %1869 = vmatpush1.msra.mxu0 0.0
    %1870 = vmatprep.subr.mxu0 0.0
    %1871 = vmatpush1.msra.mxu0 0.0
    %1872 = vmatprep.subr.mxu0 0.0
    %1873 = vmatpush1.msra.mxu0 0.0
    %1874 = vmatprep.subr.mxu0 0.0
    %1875 = vmatpush1.msra.mxu0 0.0
    %1876 = vmatprep.subr.mxu0 0.0
    %1877 = vmatpush1.msra.mxu0 0.0
    %1878 = vmatprep.subr.mxu0 0.0
    %1879 = vmatpush1.msra.mxu0 0.0
    %1880 = vmatprep.subr.mxu0 0.0
    %1881 = vmatpush1.msra.mxu0 0.0
    %1882 = vmatprep.subr.mxu0 0.0
    %1883 = vmatpush1.msra.mxu0 0.0
    %1884 = vmatprep.subr.mxu0 0.0
    %1885 = vmatpush1.msra.mxu0 0.0
    %1886 = vmatprep.subr.mxu0 0.0
    %1887 = vmatpush1.msra.mxu0 0.0
    %1888 = vmatprep.subr.mxu0 0.0
    %1889 = vmatpush1.msra.mxu0 0.0
    %1890 = vmatprep.subr.mxu0 0.0
    %1891 = vmatpush1.msra.mxu0 0.0
    %1892 = vmatprep.subr.mxu0 0.0
    %1893 = vmatpush1.msra.mxu0 0.0
    %1894 = vmatprep.subr.mxu0 0.0
    %1895 = vmatpush1.msra.mxu0 0.0
    %1896 = vmatprep.subr.mxu0 0.0
    %1897 = vmatpush1.msra.mxu0 0.0
    %1898 = vmatprep.subr.mxu0 0.0
    %1899 = vmatpush1.msra.mxu0 0.0
    %1900 = vmatprep.subr.mxu0 0.0
    %1901 = vmatpush1.msra.mxu0 0.0
    %1902 = vmatprep.subr.mxu0 0.0
    %1903 = vmatpush1.msra.mxu0 0.0
    %1904 = vmatprep.subr.mxu0 0.0
    %1905 = vmatpush1.msra.mxu0 0.0
    %1906 = vmatprep.subr.mxu0 0.0
    %1907 = vmatpush1.msra.mxu0 0.0
    %1908 = vmatprep.subr.mxu0 0.0
    %1909 = vmatpush1.msra.mxu0 0.0
    %1910 = vmatprep.mubr.f32.mxu0 0.0
    %1911 = vmatmul.mubr.f32.gmra.mrb[0].mxu0 %v1844
    %v1912 = vpop.f32.mrb[0].mxu0
    %v1913 = vadd.f32 0.0, %v1912
    %v1914 = vpop.f32.mrb[0].mxu0
    %1915 = vdwg.mxu0
    %v1917 = vsel %vm785, %v1529, 0
    %v1920 = vsel %vm785, %v1530, 0
    %1922 = vmatprep.subr.mxu0 0.0
    %1923 = vmatpush1.msra.mxu0 %v1694
    %1924 = vmatprep.subr.mxu0 0.0
    %1925 = vmatpush1.msra.mxu0 0.0
    %1926 = vmatprep.subr.mxu0 0.0
    %1927 = vmatpush1.msra.mxu0 0.0
    %1928 = vmatprep.subr.mxu0 0.0
    %1929 = vmatpush1.msra.mxu0 0.0
    %1930 = vmatprep.subr.mxu0 0.0
    %1931 = vmatpush1.msra.mxu0 0.0
    %1932 = vmatprep.subr.mxu0 0.0
    %1933 = vmatpush1.msra.mxu0 0.0
    %1934 = vmatprep.subr.mxu0 0.0
    %1935 = vmatpush1.msra.mxu0 0.0
    %1936 = vmatprep.subr.mxu0 0.0
    %1937 = vmatpush1.msra.mxu0 0.0
    %1938 = vmatprep.subr.mxu0 0.0
    %1939 = vmatpush1.msra.mxu0 0.0
    %1940 = vmatprep.subr.mxu0 0.0
    %1941 = vmatpush1.msra.mxu0 0.0
    %1942 = vmatprep.subr.mxu0 0.0
    %1943 = vmatpush1.msra.mxu0 0.0
    %1944 = vmatprep.subr.mxu0 0.0
    %1945 = vmatpush1.msra.mxu0 0.0
    %1946 = vmatprep.subr.mxu0 0.0
    %1947 = vmatpush1.msra.mxu0 0.0
    %1948 = vmatprep.subr.mxu0 0.0
    %1949 = vmatpush1.msra.mxu0 0.0
    %1950 = vmatprep.subr.mxu0 0.0
    %1951 = vmatpush1.msra.mxu0 0.0
    %1952 = vmatprep.subr.mxu0 0.0
    %1953 = vmatpush1.msra.mxu0 0.0
    %1954 = vmatprep.subr.mxu0 0.0
    %1955 = vmatpush1.msra.mxu0 0.0
    %1956 = vmatprep.subr.mxu0 0.0
    %1957 = vmatpush1.msra.mxu0 0.0
    %1958 = vmatprep.subr.mxu0 0.0
    %1959 = vmatpush1.msra.mxu0 0.0
    %1960 = vmatprep.subr.mxu0 0.0
    %1961 = vmatpush1.msra.mxu0 0.0
    %1962 = vmatprep.subr.mxu0 0.0
    %1963 = vmatpush1.msra.mxu0 0.0
    %1964 = vmatprep.subr.mxu0 0.0
    %1965 = vmatpush1.msra.mxu0 0.0
    %1966 = vmatprep.subr.mxu0 0.0
    %1967 = vmatpush1.msra.mxu0 0.0
    %1968 = vmatprep.subr.mxu0 0.0
    %1969 = vmatpush1.msra.mxu0 0.0
    %1970 = vmatprep.subr.mxu0 0.0
    %1971 = vmatpush1.msra.mxu0 0.0
    %1972 = vmatprep.subr.mxu0 0.0
    %1973 = vmatpush1.msra.mxu0 0.0
    %1974 = vmatprep.subr.mxu0 0.0
    %1975 = vmatpush1.msra.mxu0 0.0
    %1976 = vmatprep.subr.mxu0 0.0
    %1977 = vmatpush1.msra.mxu0 0.0
    %1978 = vmatprep.subr.mxu0 0.0
    %1979 = vmatpush1.msra.mxu0 0.0
    %1980 = vmatprep.subr.mxu0 0.0
    %1981 = vmatpush1.msra.mxu0 0.0
    %1982 = vmatprep.subr.mxu0 0.0
    %1983 = vmatpush1.msra.mxu0 0.0
    %1984 = vmatprep.subr.mxu0 0.0
    %1985 = vmatpush1.msra.mxu0 0.0
    %1986 = vmatprep.mubr.f32.mxu0 0.0
    %1987 = vmatmul.mubr.f32.gmra.mrb[0].mxu0 %v1917
    %v1988 = vpop.f32.mrb[0].mxu0
    %v1989 = vadd.f32 0.0, %v1988
    %v1990 = vpop.f32.mrb[0].mxu0
    %1991 = vmatprep.mubr.f32.mxu0 0.0
    %1992 = vmatmul.mubr.f32.gmra.mrb[0].mxu0 %v1920
    %v1993 = vpop.f32.mrb[0].mxu0
    %v1994 = vadd.f32 0.0, %v1993
    %v1995 = vpop.f32.mrb[0].mxu0
    %1996 = vdwg.mxu0
    %v1998 = vsel %vm785, %v1531, 0
    %v2001 = vsel %vm785, %v1532, 0
    %2003 = vmatprep.subr.mxu0 0.0
    %2004 = vmatpush1.msra.mxu0 %v1767
    %2005 = vmatprep.subr.mxu0 0.0
    %2006 = vmatpush1.msra.mxu0 0.0
    %2007 = vmatprep.subr.mxu0 0.0
    %2008 = vmatpush1.msra.mxu0 0.0
    %2009 = vmatprep.subr.mxu0 0.0
    %2010 = vmatpush1.msra.mxu0 0.0
    %2011 = vmatprep.subr.mxu0 0.0
    %2012 = vmatpush1.msra.mxu0 0.0
    %2013 = vmatprep.subr.mxu0 0.0
    %2014 = vmatpush1.msra.mxu0 0.0
    %2015 = vmatprep.subr.mxu0 0.0
    %2016 = vmatpush1.msra.mxu0 0.0
    %2017 = vmatprep.subr.mxu0 0.0
    %2018 = vmatpush1.msra.mxu0 0.0
    %2019 = vmatprep.subr.mxu0 0.0
    %2020 = vmatpush1.msra.mxu0 0.0
    %2021 = vmatprep.subr.mxu0 0.0
    %2022 = vmatpush1.msra.mxu0 0.0
    %2023 = vmatprep.subr.mxu0 0.0
    %2024 = vmatpush1.msra.mxu0 0.0
    %2025 = vmatprep.subr.mxu0 0.0
    %2026 = vmatpush1.msra.mxu0 0.0
    %2027 = vmatprep.subr.mxu0 0.0
    %2028 = vmatpush1.msra.mxu0 0.0
    %2029 = vmatprep.subr.mxu0 0.0
    %2030 = vmatpush1.msra.mxu0 0.0
    %2031 = vmatprep.subr.mxu0 0.0
    %2032 = vmatpush1.msra.mxu0 0.0
    %2033 = vmatprep.subr.mxu0 0.0
    %2034 = vmatpush1.msra.mxu0 0.0
    %2035 = vmatprep.subr.mxu0 0.0
    %2036 = vmatpush1.msra.mxu0 0.0
    %2037 = vmatprep.subr.mxu0 0.0
    %2038 = vmatpush1.msra.mxu0 0.0
    %2039 = vmatprep.subr.mxu0 0.0
    %2040 = vmatpush1.msra.mxu0 0.0
    %2041 = vmatprep.subr.mxu0 0.0
    %2042 = vmatpush1.msra.mxu0 0.0
    %2043 = vmatprep.subr.mxu0 0.0
    %2044 = vmatpush1.msra.mxu0 0.0
    %2045 = vmatprep.subr.mxu0 0.0
    %2046 = vmatpush1.msra.mxu0 0.0
    %2047 = vmatprep.subr.mxu0 0.0
    %2048 = vmatpush1.msra.mxu0 0.0
    %2049 = vmatprep.subr.mxu0 0.0
    %2050 = vmatpush1.msra.mxu0 0.0
    %2051 = vmatprep.subr.mxu0 0.0
    %2052 = vmatpush1.msra.mxu0 0.0
    %2053 = vmatprep.subr.mxu0 0.0
    %2054 = vmatpush1.msra.mxu0 0.0
    %2055 = vmatprep.subr.mxu0 0.0
    %2056 = vmatpush1.msra.mxu0 0.0
    %2057 = vmatprep.subr.mxu0 0.0
    %2058 = vmatpush1.msra.mxu0 0.0
    %2059 = vmatprep.subr.mxu0 0.0
    %2060 = vmatpush1.msra.mxu0 0.0
    %2061 = vmatprep.subr.mxu0 0.0
    %2062 = vmatpush1.msra.mxu0 0.0
    %2063 = vmatprep.subr.mxu0 0.0
    %2064 = vmatpush1.msra.mxu0 0.0
    %2065 = vmatprep.subr.mxu0 0.0
    %2066 = vmatpush1.msra.mxu0 0.0
    %2067 = vmatprep.mubr.f32.mxu0 0.0
    %2068 = vmatmul.mubr.f32.gmra.mrb[0].mxu0 %v1998
    %v2069 = vpop.f32.mrb[0].mxu0
    %v2070 = vadd.f32 0.0, %v2069
    %v2071 = vpop.f32.mrb[0].mxu0
    %2072 = vmatprep.mubr.f32.mxu0 0.0
    %2073 = vmatmul.mubr.f32.gmra.mrb[0].mxu0 %v2001
    %v2074 = vpop.f32.mrb[0].mxu0
    %v2075 = vadd.f32 0.0, %v2074
    %v2076 = vpop.f32.mrb[0].mxu0
    %2077 = vdwg.mxu0
    %v2079 = vsel %vm785, %v1533, 0
    %v2082 = vsel %vm785, %v1534, 0
    %2084 = vmatprep.subr.mxu0 0.0
    %2085 = vmatpush1.msra.mxu0 %v1840
    %2086 = vmatprep.subr.mxu0 0.0
    %2087 = vmatpush1.msra.mxu0 0.0
    %2088 = vmatprep.subr.mxu0 0.0
    %2089 = vmatpush1.msra.mxu0 0.0
    %2090 = vmatprep.subr.mxu0 0.0
    %2091 = vmatpush1.msra.mxu0 0.0
    %2092 = vmatprep.subr.mxu0 0.0
    %2093 = vmatpush1.msra.mxu0 0.0
    %2094 = vmatprep.subr.mxu0 0.0
    %2095 = vmatpush1.msra.mxu0 0.0
    %2096 = vmatprep.subr.mxu0 0.0
    %2097 = vmatpush1.msra.mxu0 0.0
    %2098 = vmatprep.subr.mxu0 0.0
    %2099 = vmatpush1.msra.mxu0 0.0
    %2100 = vmatprep.subr.mxu0 0.0
    %2101 = vmatpush1.msra.mxu0 0.0
    %2102 = vmatprep.subr.mxu0 0.0
    %2103 = vmatpush1.msra.mxu0 0.0
    %2104 = vmatprep.subr.mxu0 0.0
    %2105 = vmatpush1.msra.mxu0 0.0
    %2106 = vmatprep.subr.mxu0 0.0
    %2107 = vmatpush1.msra.mxu0 0.0
    %2108 = vmatprep.subr.mxu0 0.0
    %2109 = vmatpush1.msra.mxu0 0.0
    %2110 = vmatprep.subr.mxu0 0.0
    %2111 = vmatpush1.msra.mxu0 0.0
    %2112 = vmatprep.subr.mxu0 0.0
    %2113 = vmatpush1.msra.mxu0 0.0
    %2114 = vmatprep.subr.mxu0 0.0
    %2115 = vmatpush1.msra.mxu0 0.0
    %2116 = vmatprep.subr.mxu0 0.0
    %2117 = vmatpush1.msra.mxu0 0.0
    %2118 = vmatprep.subr.mxu0 0.0
    %2119 = vmatpush1.msra.mxu0 0.0
    %2120 = vmatprep.subr.mxu0 0.0
    %2121 = vmatpush1.msra.mxu0 0.0
    %2122 = vmatprep.subr.mxu0 0.0
    %2123 = vmatpush1.msra.mxu0 0.0
    %2124 = vmatprep.subr.mxu0 0.0
    %2125 = vmatpush1.msra.mxu0 0.0
    %2126 = vmatprep.subr.mxu0 0.0
    %2127 = vmatpush1.msra.mxu0 0.0
    %2128 = vmatprep.subr.mxu0 0.0
    %2129 = vmatpush1.msra.mxu0 0.0
    %2130 = vmatprep.subr.mxu0 0.0
    %2131 = vmatpush1.msra.mxu0 0.0
    %2132 = vmatprep.subr.mxu0 0.0
    %2133 = vmatpush1.msra.mxu0 0.0
    %2134 = vmatprep.subr.mxu0 0.0
    %2135 = vmatpush1.msra.mxu0 0.0
    %2136 = vmatprep.subr.mxu0 0.0
    %2137 = vmatpush1.msra.mxu0 0.0
    %2138 = vmatprep.subr.mxu0 0.0
    %2139 = vmatpush1.msra.mxu0 0.0
    %2140 = vmatprep.subr.mxu0 0.0
    %2141 = vmatpush1.msra.mxu0 0.0
    %2142 = vmatprep.subr.mxu0 0.0
    %2143 = vmatpush1.msra.mxu0 0.0
    %2144 = vmatprep.subr.mxu0 0.0
    %2145 = vmatpush1.msra.mxu0 0.0
    %2146 = vmatprep.subr.mxu0 0.0
    %2147 = vmatpush1.msra.mxu0 0.0
    %2148 = vmatprep.mubr.f32.mxu0 0.0
    %2149 = vmatmul.mubr.f32.gmra.mrb[0].mxu0 %v2079
    %v2150 = vpop.f32.mrb[0].mxu0
    %v2151 = vadd.f32 0.0, %v2150
    %v2152 = vpop.f32.mrb[0].mxu0
    %2153 = vmatprep.mubr.f32.mxu0 0.0
    %2154 = vmatmul.mubr.f32.gmra.mrb[0].mxu0 %v2082
    %v2155 = vpop.f32.mrb[0].mxu0
    %v2156 = vadd.f32 0.0, %v2155
    %v2157 = vpop.f32.mrb[0].mxu0
    %2158 = vdwg.mxu0
    %v2160 = vsel %vm785, %v1535, 0
    %v2163 = vsel %vm785, %v1536, 0
    %2165 = vmatprep.subr.mxu0 0.0
    %2166 = vmatpush1.msra.mxu0 %v1913
    %2167 = vmatprep.subr.mxu0 0.0
    %2168 = vmatpush1.msra.mxu0 0.0
    %2169 = vmatprep.subr.mxu0 0.0
    %2170 = vmatpush1.msra.mxu0 0.0
    %2171 = vmatprep.subr.mxu0 0.0
    %2172 = vmatpush1.msra.mxu0 0.0
    %2173 = vmatprep.subr.mxu0 0.0
    %2174 = vmatpush1.msra.mxu0 0.0
    %2175 = vmatprep.subr.mxu0 0.0
    %2176 = vmatpush1.msra.mxu0 0.0
    %2177 = vmatprep.subr.mxu0 0.0
    %2178 = vmatpush1.msra.mxu0 0.0
    %2179 = vmatprep.subr.mxu0 0.0
    %2180 = vmatpush1.msra.mxu0 0.0
    %2181 = vmatprep.subr.mxu0 0.0
    %2182 = vmatpush1.msra.mxu0 0.0
    %2183 = vmatprep.subr.mxu0 0.0
    %2184 = vmatpush1.msra.mxu0 0.0
    %2185 = vmatprep.subr.mxu0 0.0
    %2186 = vmatpush1.msra.mxu0 0.0
    %2187 = vmatprep.subr.mxu0 0.0
    %2188 = vmatpush1.msra.mxu0 0.0
    %2189 = vmatprep.subr.mxu0 0.0
    %2190 = vmatpush1.msra.mxu0 0.0
    %2191 = vmatprep.subr.mxu0 0.0
    %2192 = vmatpush1.msra.mxu0 0.0
    %2193 = vmatprep.subr.mxu0 0.0
    %2194 = vmatpush1.msra.mxu0 0.0
    %2195 = vmatprep.subr.mxu0 0.0
    %2196 = vmatpush1.msra.mxu0 0.0
    %2197 = vmatprep.subr.mxu0 0.0
    %2198 = vmatpush1.msra.mxu0 0.0
    %2199 = vmatprep.subr.mxu0 0.0
    %2200 = vmatpush1.msra.mxu0 0.0
    %2201 = vmatprep.subr.mxu0 0.0
    %2202 = vmatpush1.msra.mxu0 0.0
    %2203 = vmatprep.subr.mxu0 0.0
    %2204 = vmatpush1.msra.mxu0 0.0
    %2205 = vmatprep.subr.mxu0 0.0
    %2206 = vmatpush1.msra.mxu0 0.0
    %2207 = vmatprep.subr.mxu0 0.0
    %2208 = vmatpush1.msra.mxu0 0.0
    %2209 = vmatprep.subr.mxu0 0.0
    %2210 = vmatpush1.msra.mxu0 0.0
    %2211 = vmatprep.subr.mxu0 0.0
    %2212 = vmatpush1.msra.mxu0 0.0
    %2213 = vmatprep.subr.mxu0 0.0
    %2214 = vmatpush1.msra.mxu0 0.0
    %2215 = vmatprep.subr.mxu0 0.0
    %2216 = vmatpush1.msra.mxu0 0.0
    %2217 = vmatprep.subr.mxu0 0.0
    %2218 = vmatpush1.msra.mxu0 0.0
    %2219 = vmatprep.subr.mxu0 0.0
    %2220 = vmatpush1.msra.mxu0 0.0
    %2221 = vmatprep.subr.mxu0 0.0
    %2222 = vmatpush1.msra.mxu0 0.0
    %2223 = vmatprep.subr.mxu0 0.0
    %2224 = vmatpush1.msra.mxu0 0.0
    %2225 = vmatprep.subr.mxu0 0.0
    %2226 = vmatpush1.msra.mxu0 0.0
    %2227 = vmatprep.subr.mxu0 0.0
    %2228 = vmatpush1.msra.mxu0 0.0
    %2229 = vmatprep.mubr.f32.mxu0 0.0
    %2230 = vmatmul.mubr.f32.gmra.mrb[0].mxu0 %v2160
    %v2231 = vpop.f32.mrb[0].mxu0
    %v2232 = vadd.f32 0.0, %v2231
    %v2233 = vpop.f32.mrb[0].mxu0
    %2234 = vmatprep.mubr.f32.mxu0 0.0
    %2235 = vmatmul.mubr.f32.gmra.mrb[0].mxu0 %v2163
    %v2236 = vpop.f32.mrb[0].mxu0
    %v2237 = vadd.f32 0.0, %v2236
    %v2238 = vpop.f32.mrb[0].mxu0
    %2239 = vdwg.mxu0
    %v2240 = vsel %vm785, %v1989, 0.0
    %v2241 = vsel %vm785, %v2070, 0.0
    %v2242 = vadd.f32 %v2240, %v2241
    %v2243 = vsel %vm785, %v2151, 0.0
    %v2244 = vadd.f32 %v2242, %v2243
    %v2245 = vsel %vm785, %v2232, 0.0
    %v2246 = vadd.f32 %v2244, %v2245
    %v2247 = vsel %vm785, %v1994, 0.0
    %v2248 = vsel %vm785, %v2075, 0.0
    %v2249 = vadd.f32 %v2247, %v2248
    %v2250 = vsel %vm785, %v2156, 0.0
    %v2251 = vadd.f32 %v2249, %v2250
    %v2252 = vsel %vm785, %v2237, 0.0
    %v2253 = vadd.f32 %v2251, %v2252
    %v2255 = vsel %vm785, %v1545, 0
    %v2258 = vsel %vm785, %v1546, 0
    %2260 = vmatprep.subr.mxu0 0.0
    %2261 = vmatpush1.msra.mxu0 %v1694
    %2262 = vmatprep.subr.mxu0 0.0
    %2263 = vmatpush1.msra.mxu0 0.0
    %2264 = vmatprep.subr.mxu0 0.0
    %2265 = vmatpush1.msra.mxu0 0.0
    %2266 = vmatprep.subr.mxu0 0.0
    %2267 = vmatpush1.msra.mxu0 0.0
    %2268 = vmatprep.subr.mxu0 0.0
    %2269 = vmatpush1.msra.mxu0 0.0
    %2270 = vmatprep.subr.mxu0 0.0
    %2271 = vmatpush1.msra.mxu0 0.0
    %2272 = vmatprep.subr.mxu0 0.0
    %2273 = vmatpush1.msra.mxu0 0.0
    %2274 = vmatprep.subr.mxu0 0.0
    %2275 = vmatpush1.msra.mxu0 0.0
    %2276 = vmatprep.subr.mxu0 0.0
    %2277 = vmatpush1.msra.mxu0 0.0
    %2278 = vmatprep.subr.mxu0 0.0
    %2279 = vmatpush1.msra.mxu0 0.0
    %2280 = vmatprep.subr.mxu0 0.0
    %2281 = vmatpush1.msra.mxu0 0.0
    %2282 = vmatprep.subr.mxu0 0.0
    %2283 = vmatpush1.msra.mxu0 0.0
    %2284 = vmatprep.subr.mxu0 0.0
    %2285 = vmatpush1.msra.mxu0 0.0
    %2286 = vmatprep.subr.mxu0 0.0
    %2287 = vmatpush1.msra.mxu0 0.0
    %2288 = vmatprep.subr.mxu0 0.0
    %2289 = vmatpush1.msra.mxu0 0.0
    %2290 = vmatprep.subr.mxu0 0.0
    %2291 = vmatpush1.msra.mxu0 0.0
    %2292 = vmatprep.subr.mxu0 0.0
    %2293 = vmatpush1.msra.mxu0 0.0
    %2294 = vmatprep.subr.mxu0 0.0
    %2295 = vmatpush1.msra.mxu0 0.0
    %2296 = vmatprep.subr.mxu0 0.0
    %2297 = vmatpush1.msra.mxu0 0.0
    %2298 = vmatprep.subr.mxu0 0.0
    %2299 = vmatpush1.msra.mxu0 0.0
    %2300 = vmatprep.subr.mxu0 0.0
    %2301 = vmatpush1.msra.mxu0 0.0
    %2302 = vmatprep.subr.mxu0 0.0
    %2303 = vmatpush1.msra.mxu0 0.0
    %2304 = vmatprep.subr.mxu0 0.0
    %2305 = vmatpush1.msra.mxu0 0.0
    %2306 = vmatprep.subr.mxu0 0.0
    %2307 = vmatpush1.msra.mxu0 0.0
    %2308 = vmatprep.subr.mxu0 0.0
    %2309 = vmatpush1.msra.mxu0 0.0
    %2310 = vmatprep.subr.mxu0 0.0
    %2311 = vmatpush1.msra.mxu0 0.0
    %2312 = vmatprep.subr.mxu0 0.0
    %2313 = vmatpush1.msra.mxu0 0.0
    %2314 = vmatprep.subr.mxu0 0.0
    %2315 = vmatpush1.msra.mxu0 0.0
    %2316 = vmatprep.subr.mxu0 0.0
    %2317 = vmatpush1.msra.mxu0 0.0
    %2318 = vmatprep.subr.mxu0 0.0
    %2319 = vmatpush1.msra.mxu0 0.0
    %2320 = vmatprep.subr.mxu0 0.0
    %2321 = vmatpush1.msra.mxu0 0.0
    %2322 = vmatprep.subr.mxu0 0.0
    %2323 = vmatpush1.msra.mxu0 0.0
    %2324 = vmatprep.mubr.f32.mxu0 0.0
    %2325 = vmatmul.mubr.f32.gmra.mrb[0].mxu0 %v2255
    %v2326 = vpop.f32.mrb[0].mxu0
    %v2327 = vadd.f32 0.0, %v2326
    %v2328 = vpop.f32.mrb[0].mxu0
    %2329 = vmatprep.mubr.f32.mxu0 0.0
    %2330 = vmatmul.mubr.f32.gmra.mrb[0].mxu0 %v2258
    %v2331 = vpop.f32.mrb[0].mxu0
    %v2332 = vadd.f32 0.0, %v2331
    %v2333 = vpop.f32.mrb[0].mxu0
    %2334 = vdwg.mxu0
    %v2336 = vsel %vm785, %v1547, 0
    %v2339 = vsel %vm785, %v1548, 0
    %2341 = vmatprep.subr.mxu0 0.0
    %2342 = vmatpush1.msra.mxu0 %v1767
    %2343 = vmatprep.subr.mxu0 0.0
    %2344 = vmatpush1.msra.mxu0 0.0
    %2345 = vmatprep.subr.mxu0 0.0
    %2346 = vmatpush1.msra.mxu0 0.0
    %2347 = vmatprep.subr.mxu0 0.0
    %2348 = vmatpush1.msra.mxu0 0.0
    %2349 = vmatprep.subr.mxu0 0.0
    %2350 = vmatpush1.msra.mxu0 0.0
    %2351 = vmatprep.subr.mxu0 0.0
    %2352 = vmatpush1.msra.mxu0 0.0
    %2353 = vmatprep.subr.mxu0 0.0
    %2354 = vmatpush1.msra.mxu0 0.0
    %2355 = vmatprep.subr.mxu0 0.0
    %2356 = vmatpush1.msra.mxu0 0.0
    %2357 = vmatprep.subr.mxu0 0.0
    %2358 = vmatpush1.msra.mxu0 0.0
    %2359 = vmatprep.subr.mxu0 0.0
    %2360 = vmatpush1.msra.mxu0 0.0
    %2361 = vmatprep.subr.mxu0 0.0
    %2362 = vmatpush1.msra.mxu0 0.0
    %2363 = vmatprep.subr.mxu0 0.0
    %2364 = vmatpush1.msra.mxu0 0.0
    %2365 = vmatprep.subr.mxu0 0.0
    %2366 = vmatpush1.msra.mxu0 0.0
    %2367 = vmatprep.subr.mxu0 0.0
    %2368 = vmatpush1.msra.mxu0 0.0
    %2369 = vmatprep.subr.mxu0 0.0
    %2370 = vmatpush1.msra.mxu0 0.0
    %2371 = vmatprep.subr.mxu0 0.0
    %2372 = vmatpush1.msra.mxu0 0.0
    %2373 = vmatprep.subr.mxu0 0.0
    %2374 = vmatpush1.msra.mxu0 0.0
    %2375 = vmatprep.subr.mxu0 0.0
    %2376 = vmatpush1.msra.mxu0 0.0
    %2377 = vmatprep.subr.mxu0 0.0
    %2378 = vmatpush1.msra.mxu0 0.0
    %2379 = vmatprep.subr.mxu0 0.0
    %2380 = vmatpush1.msra.mxu0 0.0
    %2381 = vmatprep.subr.mxu0 0.0
    %2382 = vmatpush1.msra.mxu0 0.0
    %2383 = vmatprep.subr.mxu0 0.0
    %2384 = vmatpush1.msra.mxu0 0.0
    %2385 = vmatprep.subr.mxu0 0.0
    %2386 = vmatpush1.msra.mxu0 0.0
    %2387 = vmatprep.subr.mxu0 0.0
    %2388 = vmatpush1.msra.mxu0 0.0
    %2389 = vmatprep.subr.mxu0 0.0
    %2390 = vmatpush1.msra.mxu0 0.0
    %2391 = vmatprep.subr.mxu0 0.0
    %2392 = vmatpush1.msra.mxu0 0.0
    %2393 = vmatprep.subr.mxu0 0.0
    %2394 = vmatpush1.msra.mxu0 0.0
    %2395 = vmatprep.subr.mxu0 0.0
    %2396 = vmatpush1.msra.mxu0 0.0
    %2397 = vmatprep.subr.mxu0 0.0
    %2398 = vmatpush1.msra.mxu0 0.0
    %2399 = vmatprep.subr.mxu0 0.0
    %2400 = vmatpush1.msra.mxu0 0.0
    %2401 = vmatprep.subr.mxu0 0.0
    %2402 = vmatpush1.msra.mxu0 0.0
    %2403 = vmatprep.subr.mxu0 0.0
    %2404 = vmatpush1.msra.mxu0 0.0
    %2405 = vmatprep.mubr.f32.mxu0 0.0
    %2406 = vmatmul.mubr.f32.gmra.mrb[0].mxu0 %v2336
    %v2407 = vpop.f32.mrb[0].mxu0
    %v2408 = vadd.f32 0.0, %v2407
    %v2409 = vpop.f32.mrb[0].mxu0
    %2410 = vmatprep.mubr.f32.mxu0 0.0
    %2411 = vmatmul.mubr.f32.gmra.mrb[0].mxu0 %v2339
    %v2412 = vpop.f32.mrb[0].mxu0
    %v2413 = vadd.f32 0.0, %v2412
    %v2414 = vpop.f32.mrb[0].mxu0
    %2415 = vdwg.mxu0
    %v2417 = vsel %vm785, %v1549, 0
    %v2420 = vsel %vm785, %v1550, 0
    %2422 = vmatprep.subr.mxu0 0.0
    %2423 = vmatpush1.msra.mxu0 %v1840
    %2424 = vmatprep.subr.mxu0 0.0
    %2425 = vmatpush1.msra.mxu0 0.0
    %2426 = vmatprep.subr.mxu0 0.0
    %2427 = vmatpush1.msra.mxu0 0.0
    %2428 = vmatprep.subr.mxu0 0.0
    %2429 = vmatpush1.msra.mxu0 0.0
    %2430 = vmatprep.subr.mxu0 0.0
    %2431 = vmatpush1.msra.mxu0 0.0
    %2432 = vmatprep.subr.mxu0 0.0
    %2433 = vmatpush1.msra.mxu0 0.0
    %2434 = vmatprep.subr.mxu0 0.0
    %2435 = vmatpush1.msra.mxu0 0.0
    %2436 = vmatprep.subr.mxu0 0.0
    %2437 = vmatpush1.msra.mxu0 0.0
    %2438 = vmatprep.subr.mxu0 0.0
    %2439 = vmatpush1.msra.mxu0 0.0
    %2440 = vmatprep.subr.mxu0 0.0
    %2441 = vmatpush1.msra.mxu0 0.0
    %2442 = vmatprep.subr.mxu0 0.0
    %2443 = vmatpush1.msra.mxu0 0.0
    %2444 = vmatprep.subr.mxu0 0.0
    %2445 = vmatpush1.msra.mxu0 0.0
    %2446 = vmatprep.subr.mxu0 0.0
    %2447 = vmatpush1.msra.mxu0 0.0
    %2448 = vmatprep.subr.mxu0 0.0
    %2449 = vmatpush1.msra.mxu0 0.0
    %2450 = vmatprep.subr.mxu0 0.0
    %2451 = vmatpush1.msra.mxu0 0.0
    %2452 = vmatprep.subr.mxu0 0.0
    %2453 = vmatpush1.msra.mxu0 0.0
    %2454 = vmatprep.subr.mxu0 0.0
    %2455 = vmatpush1.msra.mxu0 0.0
    %2456 = vmatprep.subr.mxu0 0.0
    %2457 = vmatpush1.msra.mxu0 0.0
    %2458 = vmatprep.subr.mxu0 0.0
    %2459 = vmatpush1.msra.mxu0 0.0
    %2460 = vmatprep.subr.mxu0 0.0
    %2461 = vmatpush1.msra.mxu0 0.0
    %2462 = vmatprep.subr.mxu0 0.0
    %2463 = vmatpush1.msra.mxu0 0.0
    %2464 = vmatprep.subr.mxu0 0.0
    %2465 = vmatpush1.msra.mxu0 0.0
    %2466 = vmatprep.subr.mxu0 0.0
    %2467 = vmatpush1.msra.mxu0 0.0
    %2468 = vmatprep.subr.mxu0 0.0
    %2469 = vmatpush1.msra.mxu0 0.0
    %2470 = vmatprep.subr.mxu0 0.0
    %2471 = vmatpush1.msra.mxu0 0.0
    %2472 = vmatprep.subr.mxu0 0.0
    %2473 = vmatpush1.msra.mxu0 0.0
    %2474 = vmatprep.subr.mxu0 0.0
    %2475 = vmatpush1.msra.mxu0 0.0
    %2476 = vmatprep.subr.mxu0 0.0
    %2477 = vmatpush1.msra.mxu0 0.0
    %2478 = vmatprep.subr.mxu0 0.0
    %2479 = vmatpush1.msra.mxu0 0.0
    %2480 = vmatprep.subr.mxu0 0.0
    %2481 = vmatpush1.msra.mxu0 0.0
    %2482 = vmatprep.subr.mxu0 0.0
    %2483 = vmatpush1.msra.mxu0 0.0
    %2484 = vmatprep.subr.mxu0 0.0
    %2485 = vmatpush1.msra.mxu0 0.0
    %2486 = vmatprep.mubr.f32.mxu0 0.0
    %2487 = vmatmul.mubr.f32.gmra.mrb[0].mxu0 %v2417
    %v2488 = vpop.f32.mrb[0].mxu0
    %v2489 = vadd.f32 0.0, %v2488
    %v2490 = vpop.f32.mrb[0].mxu0
    %2491 = vmatprep.mubr.f32.mxu0 0.0
    %2492 = vmatmul.mubr.f32.gmra.mrb[0].mxu0 %v2420
    %v2493 = vpop.f32.mrb[0].mxu0
    %v2494 = vadd.f32 0.0, %v2493
    %v2495 = vpop.f32.mrb[0].mxu0
    %2496 = vdwg.mxu0
    %v2498 = vsel %vm785, %v1551, 0
    %v2501 = vsel %vm785, %v1552, 0
    %2503 = vmatprep.subr.mxu0 0.0
    %2504 = vmatpush1.msra.mxu0 %v1913
    %2505 = vmatprep.subr.mxu0 0.0
    %2506 = vmatpush1.msra.mxu0 0.0
    %2507 = vmatprep.subr.mxu0 0.0
    %2508 = vmatpush1.msra.mxu0 0.0
    %2509 = vmatprep.subr.mxu0 0.0
    %2510 = vmatpush1.msra.mxu0 0.0
    %2511 = vmatprep.subr.mxu0 0.0
    %2512 = vmatpush1.msra.mxu0 0.0
    %2513 = vmatprep.subr.mxu0 0.0
    %2514 = vmatpush1.msra.mxu0 0.0
    %2515 = vmatprep.subr.mxu0 0.0
    %2516 = vmatpush1.msra.mxu0 0.0
    %2517 = vmatprep.subr.mxu0 0.0
    %2518 = vmatpush1.msra.mxu0 0.0
    %2519 = vmatprep.subr.mxu0 0.0
    %2520 = vmatpush1.msra.mxu0 0.0
    %2521 = vmatprep.subr.mxu0 0.0
    %2522 = vmatpush1.msra.mxu0 0.0
    %2523 = vmatprep.subr.mxu0 0.0
    %2524 = vmatpush1.msra.mxu0 0.0
    %2525 = vmatprep.subr.mxu0 0.0
    %2526 = vmatpush1.msra.mxu0 0.0
    %2527 = vmatprep.subr.mxu0 0.0
    %2528 = vmatpush1.msra.mxu0 0.0
    %2529 = vmatprep.subr.mxu0 0.0
    %2530 = vmatpush1.msra.mxu0 0.0
    %2531 = vmatprep.subr.mxu0 0.0
    %2532 = vmatpush1.msra.mxu0 0.0
    %2533 = vmatprep.subr.mxu0 0.0
    %2534 = vmatpush1.msra.mxu0 0.0
    %2535 = vmatprep.subr.mxu0 0.0
    %2536 = vmatpush1.msra.mxu0 0.0
    %2537 = vmatprep.subr.mxu0 0.0
    %2538 = vmatpush1.msra.mxu0 0.0
    %2539 = vmatprep.subr.mxu0 0.0
    %2540 = vmatpush1.msra.mxu0 0.0
    %2541 = vmatprep.subr.mxu0 0.0
    %2542 = vmatpush1.msra.mxu0 0.0
    %2543 = vmatprep.subr.mxu0 0.0
    %2544 = vmatpush1.msra.mxu0 0.0
    %2545 = vmatprep.subr.mxu0 0.0
    %2546 = vmatpush1.msra.mxu0 0.0
    %2547 = vmatprep.subr.mxu0 0.0
    %2548 = vmatpush1.msra.mxu0 0.0
    %2549 = vmatprep.subr.mxu0 0.0
    %2550 = vmatpush1.msra.mxu0 0.0
    %2551 = vmatprep.subr.mxu0 0.0
    %2552 = vmatpush1.msra.mxu0 0.0
    %2553 = vmatprep.subr.mxu0 0.0
    %2554 = vmatpush1.msra.mxu0 0.0
    %2555 = vmatprep.subr.mxu0 0.0
    %2556 = vmatpush1.msra.mxu0 0.0
    %2557 = vmatprep.subr.mxu0 0.0
    %2558 = vmatpush1.msra.mxu0 0.0
    %2559 = vmatprep.subr.mxu0 0.0
    %2560 = vmatpush1.msra.mxu0 0.0
    %2561 = vmatprep.subr.mxu0 0.0
    %2562 = vmatpush1.msra.mxu0 0.0
    %2563 = vmatprep.subr.mxu0 0.0
    %2564 = vmatpush1.msra.mxu0 0.0
    %2565 = vmatprep.subr.mxu0 0.0
    %2566 = vmatpush1.msra.mxu0 0.0
    %2567 = vmatprep.mubr.f32.mxu0 0.0
    %2568 = vmatmul.mubr.f32.gmra.mrb[0].mxu0 %v2498
    %v2569 = vpop.f32.mrb[0].mxu0
    %v2570 = vadd.f32 0.0, %v2569
    %v2571 = vpop.f32.mrb[0].mxu0
    %2572 = vmatprep.mubr.f32.mxu0 0.0
    %2573 = vmatmul.mubr.f32.gmra.mrb[0].mxu0 %v2501
    %v2574 = vpop.f32.mrb[0].mxu0
    %v2575 = vadd.f32 0.0, %v2574
    %v2576 = vpop.f32.mrb[0].mxu0
    %2577 = vdwg.mxu0
    %v2578 = vsel %vm785, %v2327, 0.0
    %v2579 = vsel %vm785, %v2408, 0.0
    %v2580 = vadd.f32 %v2578, %v2579
    %v2581 = vsel %vm785, %v2489, 0.0
    %v2582 = vadd.f32 %v2580, %v2581
    %v2583 = vsel %vm785, %v2570, 0.0
    %v2584 = vadd.f32 %v2582, %v2583
    %v2585 = vsel %vm785, %v2332, 0.0
    %v2586 = vsel %vm785, %v2413, 0.0
    %v2587 = vadd.f32 %v2585, %v2586
    %v2588 = vsel %vm785, %v2494, 0.0
    %v2589 = vadd.f32 %v2587, %v2588
    %v2590 = vsel %vm785, %v2575, 0.0
    %v2591 = vadd.f32 %v2589, %v2590
    %v2593 = vsel %vm785, %v1561, 0
    %v2596 = vsel %vm785, %v1562, 0
    %2598 = vmatprep.subr.mxu0 0.0
    %2599 = vmatpush1.msra.mxu0 %v1694
    %2600 = vmatprep.subr.mxu0 0.0
    %2601 = vmatpush1.msra.mxu0 0.0
    %2602 = vmatprep.subr.mxu0 0.0
    %2603 = vmatpush1.msra.mxu0 0.0
    %2604 = vmatprep.subr.mxu0 0.0
    %2605 = vmatpush1.msra.mxu0 0.0
    %2606 = vmatprep.subr.mxu0 0.0
    %2607 = vmatpush1.msra.mxu0 0.0
    %2608 = vmatprep.subr.mxu0 0.0
    %2609 = vmatpush1.msra.mxu0 0.0
    %2610 = vmatprep.subr.mxu0 0.0
    %2611 = vmatpush1.msra.mxu0 0.0
    %2612 = vmatprep.subr.mxu0 0.0
    %2613 = vmatpush1.msra.mxu0 0.0
    %2614 = vmatprep.subr.mxu0 0.0
    %2615 = vmatpush1.msra.mxu0 0.0
    %2616 = vmatprep.subr.mxu0 0.0
    %2617 = vmatpush1.msra.mxu0 0.0
    %2618 = vmatprep.subr.mxu0 0.0
    %2619 = vmatpush1.msra.mxu0 0.0
    %2620 = vmatprep.subr.mxu0 0.0
    %2621 = vmatpush1.msra.mxu0 0.0
    %2622 = vmatprep.subr.mxu0 0.0
    %2623 = vmatpush1.msra.mxu0 0.0
    %2624 = vmatprep.subr.mxu0 0.0
    %2625 = vmatpush1.msra.mxu0 0.0
    %2626 = vmatprep.subr.mxu0 0.0
    %2627 = vmatpush1.msra.mxu0 0.0
    %2628 = vmatprep.subr.mxu0 0.0
    %2629 = vmatpush1.msra.mxu0 0.0
    %2630 = vmatprep.subr.mxu0 0.0
    %2631 = vmatpush1.msra.mxu0 0.0
    %2632 = vmatprep.subr.mxu0 0.0
    %2633 = vmatpush1.msra.mxu0 0.0
    %2634 = vmatprep.subr.mxu0 0.0
    %2635 = vmatpush1.msra.mxu0 0.0
    %2636 = vmatprep.subr.mxu0 0.0
    %2637 = vmatpush1.msra.mxu0 0.0
    %2638 = vmatprep.subr.mxu0 0.0
    %2639 = vmatpush1.msra.mxu0 0.0
    %2640 = vmatprep.subr.mxu0 0.0
    %2641 = vmatpush1.msra.mxu0 0.0
    %2642 = vmatprep.subr.mxu0 0.0
    %2643 = vmatpush1.msra.mxu0 0.0
    %2644 = vmatprep.subr.mxu0 0.0
    %2645 = vmatpush1.msra.mxu0 0.0
    %2646 = vmatprep.subr.mxu0 0.0
    %2647 = vmatpush1.msra.mxu0 0.0
    %2648 = vmatprep.subr.mxu0 0.0
    %2649 = vmatpush1.msra.mxu0 0.0
    %2650 = vmatprep.subr.mxu0 0.0
    %2651 = vmatpush1.msra.mxu0 0.0
    %2652 = vmatprep.subr.mxu0 0.0
    %2653 = vmatpush1.msra.mxu0 0.0
    %2654 = vmatprep.subr.mxu0 0.0
    %2655 = vmatpush1.msra.mxu0 0.0
    %2656 = vmatprep.subr.mxu0 0.0
    %2657 = vmatpush1.msra.mxu0 0.0
    %2658 = vmatprep.subr.mxu0 0.0
    %2659 = vmatpush1.msra.mxu0 0.0
    %2660 = vmatprep.subr.mxu0 0.0
    %2661 = vmatpush1.msra.mxu0 0.0
    %2662 = vmatprep.mubr.f32.mxu0 0.0
    %2663 = vmatmul.mubr.f32.gmra.mrb[0].mxu0 %v2593
    %v2664 = vpop.f32.mrb[0].mxu0
    %v2665 = vadd.f32 0.0, %v2664
    %v2666 = vpop.f32.mrb[0].mxu0
    %2667 = vmatprep.mubr.f32.mxu0 0.0
    %2668 = vmatmul.mubr.f32.gmra.mrb[0].mxu0 %v2596
    %v2669 = vpop.f32.mrb[0].mxu0
    %v2670 = vadd.f32 0.0, %v2669
    %v2671 = vpop.f32.mrb[0].mxu0
    %2672 = vdwg.mxu0
    %v2674 = vsel %vm785, %v1563, 0
    %v2677 = vsel %vm785, %v1564, 0
    %2679 = vmatprep.subr.mxu0 0.0
    %2680 = vmatpush1.msra.mxu0 %v1767
    %2681 = vmatprep.subr.mxu0 0.0
    %2682 = vmatpush1.msra.mxu0 0.0
    %2683 = vmatprep.subr.mxu0 0.0
    %2684 = vmatpush1.msra.mxu0 0.0
    %2685 = vmatprep.subr.mxu0 0.0
    %2686 = vmatpush1.msra.mxu0 0.0
    %2687 = vmatprep.subr.mxu0 0.0
    %2688 = vmatpush1.msra.mxu0 0.0
    %2689 = vmatprep.subr.mxu0 0.0
    %2690 = vmatpush1.msra.mxu0 0.0
    %2691 = vmatprep.subr.mxu0 0.0
    %2692 = vmatpush1.msra.mxu0 0.0
    %2693 = vmatprep.subr.mxu0 0.0
    %2694 = vmatpush1.msra.mxu0 0.0
    %2695 = vmatprep.subr.mxu0 0.0
    %2696 = vmatpush1.msra.mxu0 0.0
    %2697 = vmatprep.subr.mxu0 0.0
    %2698 = vmatpush1.msra.mxu0 0.0
    %2699 = vmatprep.subr.mxu0 0.0
    %2700 = vmatpush1.msra.mxu0 0.0
    %2701 = vmatprep.subr.mxu0 0.0
    %2702 = vmatpush1.msra.mxu0 0.0
    %2703 = vmatprep.subr.mxu0 0.0
    %2704 = vmatpush1.msra.mxu0 0.0
    %2705 = vmatprep.subr.mxu0 0.0
    %2706 = vmatpush1.msra.mxu0 0.0
    %2707 = vmatprep.subr.mxu0 0.0
    %2708 = vmatpush1.msra.mxu0 0.0
    %2709 = vmatprep.subr.mxu0 0.0
    %2710 = vmatpush1.msra.mxu0 0.0
    %2711 = vmatprep.subr.mxu0 0.0
    %2712 = vmatpush1.msra.mxu0 0.0
    %2713 = vmatprep.subr.mxu0 0.0
    %2714 = vmatpush1.msra.mxu0 0.0
    %2715 = vmatprep.subr.mxu0 0.0
    %2716 = vmatpush1.msra.mxu0 0.0
    %2717 = vmatprep.subr.mxu0 0.0
    %2718 = vmatpush1.msra.mxu0 0.0
    %2719 = vmatprep.subr.mxu0 0.0
    %2720 = vmatpush1.msra.mxu0 0.0
    %2721 = vmatprep.subr.mxu0 0.0
    %2722 = vmatpush1.msra.mxu0 0.0
    %2723 = vmatprep.subr.mxu0 0.0
    %2724 = vmatpush1.msra.mxu0 0.0
    %2725 = vmatprep.subr.mxu0 0.0
    %2726 = vmatpush1.msra.mxu0 0.0
    %2727 = vmatprep.subr.mxu0 0.0
    %2728 = vmatpush1.msra.mxu0 0.0
    %2729 = vmatprep.subr.mxu0 0.0
    %2730 = vmatpush1.msra.mxu0 0.0
    %2731 = vmatprep.subr.mxu0 0.0
    %2732 = vmatpush1.msra.mxu0 0.0
    %2733 = vmatprep.subr.mxu0 0.0
    %2734 = vmatpush1.msra.mxu0 0.0
    %2735 = vmatprep.subr.mxu0 0.0
    %2736 = vmatpush1.msra.mxu0 0.0
    %2737 = vmatprep.subr.mxu0 0.0
    %2738 = vmatpush1.msra.mxu0 0.0
    %2739 = vmatprep.subr.mxu0 0.0
    %2740 = vmatpush1.msra.mxu0 0.0
    %2741 = vmatprep.subr.mxu0 0.0
    %2742 = vmatpush1.msra.mxu0 0.0
    %2743 = vmatprep.mubr.f32.mxu0 0.0
    %2744 = vmatmul.mubr.f32.gmra.mrb[0].mxu0 %v2674
    %v2745 = vpop.f32.mrb[0].mxu0
    %v2746 = vadd.f32 0.0, %v2745
    %v2747 = vpop.f32.mrb[0].mxu0
    %2748 = vmatprep.mubr.f32.mxu0 0.0
    %2749 = vmatmul.mubr.f32.gmra.mrb[0].mxu0 %v2677
    %v2750 = vpop.f32.mrb[0].mxu0
    %v2751 = vadd.f32 0.0, %v2750
    %v2752 = vpop.f32.mrb[0].mxu0
    %2753 = vdwg.mxu0
    %v2755 = vsel %vm785, %v1565, 0
    %v2758 = vsel %vm785, %v1566, 0
    %2760 = vmatprep.subr.mxu0 0.0
    %2761 = vmatpush1.msra.mxu0 %v1840
    %2762 = vmatprep.subr.mxu0 0.0
    %2763 = vmatpush1.msra.mxu0 0.0
    %2764 = vmatprep.subr.mxu0 0.0
    %2765 = vmatpush1.msra.mxu0 0.0
    %2766 = vmatprep.subr.mxu0 0.0
    %2767 = vmatpush1.msra.mxu0 0.0
    %2768 = vmatprep.subr.mxu0 0.0
    %2769 = vmatpush1.msra.mxu0 0.0
    %2770 = vmatprep.subr.mxu0 0.0
    %2771 = vmatpush1.msra.mxu0 0.0
    %2772 = vmatprep.subr.mxu0 0.0
    %2773 = vmatpush1.msra.mxu0 0.0
    %2774 = vmatprep.subr.mxu0 0.0
    %2775 = vmatpush1.msra.mxu0 0.0
    %2776 = vmatprep.subr.mxu0 0.0
    %2777 = vmatpush1.msra.mxu0 0.0
    %2778 = vmatprep.subr.mxu0 0.0
    %2779 = vmatpush1.msra.mxu0 0.0
    %2780 = vmatprep.subr.mxu0 0.0
    %2781 = vmatpush1.msra.mxu0 0.0
    %2782 = vmatprep.subr.mxu0 0.0
    %2783 = vmatpush1.msra.mxu0 0.0
    %2784 = vmatprep.subr.mxu0 0.0
    %2785 = vmatpush1.msra.mxu0 0.0
    %2786 = vmatprep.subr.mxu0 0.0
    %2787 = vmatpush1.msra.mxu0 0.0
    %2788 = vmatprep.subr.mxu0 0.0
    %2789 = vmatpush1.msra.mxu0 0.0
    %2790 = vmatprep.subr.mxu0 0.0
    %2791 = vmatpush1.msra.mxu0 0.0
    %2792 = vmatprep.subr.mxu0 0.0
    %2793 = vmatpush1.msra.mxu0 0.0
    %2794 = vmatprep.subr.mxu0 0.0
    %2795 = vmatpush1.msra.mxu0 0.0
    %2796 = vmatprep.subr.mxu0 0.0
    %2797 = vmatpush1.msra.mxu0 0.0
    %2798 = vmatprep.subr.mxu0 0.0
    %2799 = vmatpush1.msra.mxu0 0.0
    %2800 = vmatprep.subr.mxu0 0.0
    %2801 = vmatpush1.msra.mxu0 0.0
    %2802 = vmatprep.subr.mxu0 0.0
    %2803 = vmatpush1.msra.mxu0 0.0
    %2804 = vmatprep.subr.mxu0 0.0
    %2805 = vmatpush1.msra.mxu0 0.0
    %2806 = vmatprep.subr.mxu0 0.0
    %2807 = vmatpush1.msra.mxu0 0.0
    %2808 = vmatprep.subr.mxu0 0.0
    %2809 = vmatpush1.msra.mxu0 0.0
    %2810 = vmatprep.subr.mxu0 0.0
    %2811 = vmatpush1.msra.mxu0 0.0
    %2812 = vmatprep.subr.mxu0 0.0
    %2813 = vmatpush1.msra.mxu0 0.0
    %2814 = vmatprep.subr.mxu0 0.0
    %2815 = vmatpush1.msra.mxu0 0.0
    %2816 = vmatprep.subr.mxu0 0.0
    %2817 = vmatpush1.msra.mxu0 0.0
    %2818 = vmatprep.subr.mxu0 0.0
    %2819 = vmatpush1.msra.mxu0 0.0
    %2820 = vmatprep.subr.mxu0 0.0
    %2821 = vmatpush1.msra.mxu0 0.0
    %2822 = vmatprep.subr.mxu0 0.0
    %2823 = vmatpush1.msra.mxu0 0.0
    %2824 = vmatprep.mubr.f32.mxu0 0.0
    %2825 = vmatmul.mubr.f32.gmra.mrb[0].mxu0 %v2755
    %v2826 = vpop.f32.mrb[0].mxu0
    %v2827 = vadd.f32 0.0, %v2826
    %v2828 = vpop.f32.mrb[0].mxu0
    %2829 = vmatprep.mubr.f32.mxu0 0.0
    %2830 = vmatmul.mubr.f32.gmra.mrb[0].mxu0 %v2758
    %v2831 = vpop.f32.mrb[0].mxu0
    %v2832 = vadd.f32 0.0, %v2831
    %v2833 = vpop.f32.mrb[0].mxu0
    %2834 = vdwg.mxu0
    %v2836 = vsel %vm785, %v1567, 0
    %v2839 = vsel %vm785, %v1568, 0
    %2841 = vmatprep.subr.mxu0 0.0
    %2842 = vmatpush1.msra.mxu0 %v1913
    %2843 = vmatprep.subr.mxu0 0.0
    %2844 = vmatpush1.msra.mxu0 0.0
    %2845 = vmatprep.subr.mxu0 0.0
    %2846 = vmatpush1.msra.mxu0 0.0
    %2847 = vmatprep.subr.mxu0 0.0
    %2848 = vmatpush1.msra.mxu0 0.0
    %2849 = vmatprep.subr.mxu0 0.0
    %2850 = vmatpush1.msra.mxu0 0.0
    %2851 = vmatprep.subr.mxu0 0.0
    %2852 = vmatpush1.msra.mxu0 0.0
    %2853 = vmatprep.subr.mxu0 0.0
    %2854 = vmatpush1.msra.mxu0 0.0
    %2855 = vmatprep.subr.mxu0 0.0
    %2856 = vmatpush1.msra.mxu0 0.0
    %2857 = vmatprep.subr.mxu0 0.0
    %2858 = vmatpush1.msra.mxu0 0.0
    %2859 = vmatprep.subr.mxu0 0.0
    %2860 = vmatpush1.msra.mxu0 0.0
    %2861 = vmatprep.subr.mxu0 0.0
    %2862 = vmatpush1.msra.mxu0 0.0
    %2863 = vmatprep.subr.mxu0 0.0
    %2864 = vmatpush1.msra.mxu0 0.0
    %2865 = vmatprep.subr.mxu0 0.0
    %2866 = vmatpush1.msra.mxu0 0.0
    %2867 = vmatprep.subr.mxu0 0.0
    %2868 = vmatpush1.msra.mxu0 0.0
    %2869 = vmatprep.subr.mxu0 0.0
    %2870 = vmatpush1.msra.mxu0 0.0
    %2871 = vmatprep.subr.mxu0 0.0
    %2872 = vmatpush1.msra.mxu0 0.0
    %2873 = vmatprep.subr.mxu0 0.0
    %2874 = vmatpush1.msra.mxu0 0.0
    %2875 = vmatprep.subr.mxu0 0.0
    %2876 = vmatpush1.msra.mxu0 0.0
    %2877 = vmatprep.subr.mxu0 0.0
    %2878 = vmatpush1.msra.mxu0 0.0
    %2879 = vmatprep.subr.mxu0 0.0
    %2880 = vmatpush1.msra.mxu0 0.0
    %2881 = vmatprep.subr.mxu0 0.0
    %2882 = vmatpush1.msra.mxu0 0.0
    %2883 = vmatprep.subr.mxu0 0.0
    %2884 = vmatpush1.msra.mxu0 0.0
    %2885 = vmatprep.subr.mxu0 0.0
    %2886 = vmatpush1.msra.mxu0 0.0
    %2887 = vmatprep.subr.mxu0 0.0
    %2888 = vmatpush1.msra.mxu0 0.0
    %2889 = vmatprep.subr.mxu0 0.0
    %2890 = vmatpush1.msra.mxu0 0.0
    %2891 = vmatprep.subr.mxu0 0.0
    %2892 = vmatpush1.msra.mxu0 0.0
    %2893 = vmatprep.subr.mxu0 0.0
    %2894 = vmatpush1.msra.mxu0 0.0
    %2895 = vmatprep.subr.mxu0 0.0
    %2896 = vmatpush1.msra.mxu0 0.0
    %2897 = vmatprep.subr.mxu0 0.0
    %2898 = vmatpush1.msra.mxu0 0.0
    %2899 = vmatprep.subr.mxu0 0.0
    %2900 = vmatpush1.msra.mxu0 0.0
    %2901 = vmatprep.subr.mxu0 0.0
    %2902 = vmatpush1.msra.mxu0 0.0
    %2903 = vmatprep.subr.mxu0 0.0
    %2904 = vmatpush1.msra.mxu0 0.0
    %2905 = vmatprep.mubr.f32.mxu0 0.0
    %2906 = vmatmul.mubr.f32.gmra.mrb[0].mxu0 %v2836
    %v2907 = vpop.f32.mrb[0].mxu0
    %v2908 = vadd.f32 0.0, %v2907
    %v2909 = vpop.f32.mrb[0].mxu0
    %2910 = vmatprep.mubr.f32.mxu0 0.0
    %2911 = vmatmul.mubr.f32.gmra.mrb[0].mxu0 %v2839
    %v2912 = vpop.f32.mrb[0].mxu0
    %v2913 = vadd.f32 0.0, %v2912
    %v2914 = vpop.f32.mrb[0].mxu0
    %2915 = vdwg.mxu0
    %v2916 = vsel %vm785, %v2665, 0.0
    %v2917 = vsel %vm785, %v2746, 0.0
    %v2918 = vadd.f32 %v2916, %v2917
    %v2919 = vsel %vm785, %v2827, 0.0
    %v2920 = vadd.f32 %v2918, %v2919
    %v2921 = vsel %vm785, %v2908, 0.0
    %v2922 = vadd.f32 %v2920, %v2921
    %v2923 = vsel %vm785, %v2670, 0.0
    %v2924 = vsel %vm785, %v2751, 0.0
    %v2925 = vadd.f32 %v2923, %v2924
    %v2926 = vsel %vm785, %v2832, 0.0
    %v2927 = vadd.f32 %v2925, %v2926
    %v2928 = vsel %vm785, %v2913, 0.0
    %v2929 = vadd.f32 %v2927, %v2928
    %v2931 = vsel %vm785, %v1577, 0
    %v2934 = vsel %vm785, %v1578, 0
    %2936 = vmatprep.subr.mxu0 0.0
    %2937 = vmatpush1.msra.mxu0 %v1694
    %2938 = vmatprep.subr.mxu0 0.0
    %2939 = vmatpush1.msra.mxu0 0.0
    %2940 = vmatprep.subr.mxu0 0.0
    %2941 = vmatpush1.msra.mxu0 0.0
    %2942 = vmatprep.subr.mxu0 0.0
    %2943 = vmatpush1.msra.mxu0 0.0
    %2944 = vmatprep.subr.mxu0 0.0
    %2945 = vmatpush1.msra.mxu0 0.0
    %2946 = vmatprep.subr.mxu0 0.0
    %2947 = vmatpush1.msra.mxu0 0.0
    %2948 = vmatprep.subr.mxu0 0.0
    %2949 = vmatpush1.msra.mxu0 0.0
    %2950 = vmatprep.subr.mxu0 0.0
    %2951 = vmatpush1.msra.mxu0 0.0
    %2952 = vmatprep.subr.mxu0 0.0
    %2953 = vmatpush1.msra.mxu0 0.0
    %2954 = vmatprep.subr.mxu0 0.0
    %2955 = vmatpush1.msra.mxu0 0.0
    %2956 = vmatprep.subr.mxu0 0.0
    %2957 = vmatpush1.msra.mxu0 0.0
    %2958 = vmatprep.subr.mxu0 0.0
    %2959 = vmatpush1.msra.mxu0 0.0
    %2960 = vmatprep.subr.mxu0 0.0
    %2961 = vmatpush1.msra.mxu0 0.0
    %2962 = vmatprep.subr.mxu0 0.0
    %2963 = vmatpush1.msra.mxu0 0.0
    %2964 = vmatprep.subr.mxu0 0.0
    %2965 = vmatpush1.msra.mxu0 0.0
    %2966 = vmatprep.subr.mxu0 0.0
    %2967 = vmatpush1.msra.mxu0 0.0
    %2968 = vmatprep.subr.mxu0 0.0
    %2969 = vmatpush1.msra.mxu0 0.0
    %2970 = vmatprep.subr.mxu0 0.0
    %2971 = vmatpush1.msra.mxu0 0.0
    %2972 = vmatprep.subr.mxu0 0.0
    %2973 = vmatpush1.msra.mxu0 0.0
    %2974 = vmatprep.subr.mxu0 0.0
    %2975 = vmatpush1.msra.mxu0 0.0
    %2976 = vmatprep.subr.mxu0 0.0
    %2977 = vmatpush1.msra.mxu0 0.0
    %2978 = vmatprep.subr.mxu0 0.0
    %2979 = vmatpush1.msra.mxu0 0.0
    %2980 = vmatprep.subr.mxu0 0.0
    %2981 = vmatpush1.msra.mxu0 0.0
    %2982 = vmatprep.subr.mxu0 0.0
    %2983 = vmatpush1.msra.mxu0 0.0
    %2984 = vmatprep.subr.mxu0 0.0
    %2985 = vmatpush1.msra.mxu0 0.0
    %2986 = vmatprep.subr.mxu0 0.0
    %2987 = vmatpush1.msra.mxu0 0.0
    %2988 = vmatprep.subr.mxu0 0.0
    %2989 = vmatpush1.msra.mxu0 0.0
    %2990 = vmatprep.subr.mxu0 0.0
    %2991 = vmatpush1.msra.mxu0 0.0
    %2992 = vmatprep.subr.mxu0 0.0
    %2993 = vmatpush1.msra.mxu0 0.0
    %2994 = vmatprep.subr.mxu0 0.0
    %2995 = vmatpush1.msra.mxu0 0.0
    %2996 = vmatprep.subr.mxu0 0.0
    %2997 = vmatpush1.msra.mxu0 0.0
    %2998 = vmatprep.subr.mxu0 0.0
    %2999 = vmatpush1.msra.mxu0 0.0
    %3000 = vmatprep.mubr.f32.mxu0 0.0
    %3001 = vmatmul.mubr.f32.gmra.mrb[0].mxu0 %v2931
    %v3002 = vpop.f32.mrb[0].mxu0
    %v3003 = vadd.f32 0.0, %v3002
    %v3004 = vpop.f32.mrb[0].mxu0
    %3005 = vmatprep.mubr.f32.mxu0 0.0
    %3006 = vmatmul.mubr.f32.gmra.mrb[0].mxu0 %v2934
    %v3007 = vpop.f32.mrb[0].mxu0
    %v3008 = vadd.f32 0.0, %v3007
    %v3009 = vpop.f32.mrb[0].mxu0
    %3010 = vdwg.mxu0
    %v3012 = vsel %vm785, %v1579, 0
    %v3015 = vsel %vm785, %v1580, 0
    %3017 = vmatprep.subr.mxu0 0.0
    %3018 = vmatpush1.msra.mxu0 %v1767
    %3019 = vmatprep.subr.mxu0 0.0
    %3020 = vmatpush1.msra.mxu0 0.0
    %3021 = vmatprep.subr.mxu0 0.0
    %3022 = vmatpush1.msra.mxu0 0.0
    %3023 = vmatprep.subr.mxu0 0.0
    %3024 = vmatpush1.msra.mxu0 0.0
    %3025 = vmatprep.subr.mxu0 0.0
    %3026 = vmatpush1.msra.mxu0 0.0
    %3027 = vmatprep.subr.mxu0 0.0
    %3028 = vmatpush1.msra.mxu0 0.0
    %3029 = vmatprep.subr.mxu0 0.0
    %3030 = vmatpush1.msra.mxu0 0.0
    %3031 = vmatprep.subr.mxu0 0.0
    %3032 = vmatpush1.msra.mxu0 0.0
    %3033 = vmatprep.subr.mxu0 0.0
    %3034 = vmatpush1.msra.mxu0 0.0
    %3035 = vmatprep.subr.mxu0 0.0
    %3036 = vmatpush1.msra.mxu0 0.0
    %3037 = vmatprep.subr.mxu0 0.0
    %3038 = vmatpush1.msra.mxu0 0.0
    %3039 = vmatprep.subr.mxu0 0.0
    %3040 = vmatpush1.msra.mxu0 0.0
    %3041 = vmatprep.subr.mxu0 0.0
    %3042 = vmatpush1.msra.mxu0 0.0
    %3043 = vmatprep.subr.mxu0 0.0
    %3044 = vmatpush1.msra.mxu0 0.0
    %3045 = vmatprep.subr.mxu0 0.0
    %3046 = vmatpush1.msra.mxu0 0.0
    %3047 = vmatprep.subr.mxu0 0.0
    %3048 = vmatpush1.msra.mxu0 0.0
    %3049 = vmatprep.subr.mxu0 0.0
    %3050 = vmatpush1.msra.mxu0 0.0
    %3051 = vmatprep.subr.mxu0 0.0
    %3052 = vmatpush1.msra.mxu0 0.0
    %3053 = vmatprep.subr.mxu0 0.0
    %3054 = vmatpush1.msra.mxu0 0.0
    %3055 = vmatprep.subr.mxu0 0.0
    %3056 = vmatpush1.msra.mxu0 0.0
    %3057 = vmatprep.subr.mxu0 0.0
    %3058 = vmatpush1.msra.mxu0 0.0
    %3059 = vmatprep.subr.mxu0 0.0
    %3060 = vmatpush1.msra.mxu0 0.0
    %3061 = vmatprep.subr.mxu0 0.0
    %3062 = vmatpush1.msra.mxu0 0.0
    %3063 = vmatprep.subr.mxu0 0.0
    %3064 = vmatpush1.msra.mxu0 0.0
    %3065 = vmatprep.subr.mxu0 0.0
    %3066 = vmatpush1.msra.mxu0 0.0
    %3067 = vmatprep.subr.mxu0 0.0
    %3068 = vmatpush1.msra.mxu0 0.0
    %3069 = vmatprep.subr.mxu0 0.0
    %3070 = vmatpush1.msra.mxu0 0.0
    %3071 = vmatprep.subr.mxu0 0.0
    %3072 = vmatpush1.msra.mxu0 0.0
    %3073 = vmatprep.subr.mxu0 0.0
    %3074 = vmatpush1.msra.mxu0 0.0
    %3075 = vmatprep.subr.mxu0 0.0
    %3076 = vmatpush1.msra.mxu0 0.0
    %3077 = vmatprep.subr.mxu0 0.0
    %3078 = vmatpush1.msra.mxu0 0.0
    %3079 = vmatprep.subr.mxu0 0.0
    %3080 = vmatpush1.msra.mxu0 0.0
    %3081 = vmatprep.mubr.f32.mxu0 0.0
    %3082 = vmatmul.mubr.f32.gmra.mrb[0].mxu0 %v3012
    %v3083 = vpop.f32.mrb[0].mxu0
    %v3084 = vadd.f32 0.0, %v3083
    %v3085 = vpop.f32.mrb[0].mxu0
    %3086 = vmatprep.mubr.f32.mxu0 0.0
    %3087 = vmatmul.mubr.f32.gmra.mrb[0].mxu0 %v3015
    %v3088 = vpop.f32.mrb[0].mxu0
    %v3089 = vadd.f32 0.0, %v3088
    %v3090 = vpop.f32.mrb[0].mxu0
    %3091 = vdwg.mxu0
    %v3093 = vsel %vm785, %v1581, 0
    %v3096 = vsel %vm785, %v1582, 0
    %3098 = vmatprep.subr.mxu0 0.0
    %3099 = vmatpush1.msra.mxu0 %v1840
    %3100 = vmatprep.subr.mxu0 0.0
    %3101 = vmatpush1.msra.mxu0 0.0
    %3102 = vmatprep.subr.mxu0 0.0
    %3103 = vmatpush1.msra.mxu0 0.0
    %3104 = vmatprep.subr.mxu0 0.0
    %3105 = vmatpush1.msra.mxu0 0.0
    %3106 = vmatprep.subr.mxu0 0.0
    %3107 = vmatpush1.msra.mxu0 0.0
    %3108 = vmatprep.subr.mxu0 0.0
    %3109 = vmatpush1.msra.mxu0 0.0
    %3110 = vmatprep.subr.mxu0 0.0
    %3111 = vmatpush1.msra.mxu0 0.0
    %3112 = vmatprep.subr.mxu0 0.0
    %3113 = vmatpush1.msra.mxu0 0.0
    %3114 = vmatprep.subr.mxu0 0.0
    %3115 = vmatpush1.msra.mxu0 0.0
    %3116 = vmatprep.subr.mxu0 0.0
    %3117 = vmatpush1.msra.mxu0 0.0
    %3118 = vmatprep.subr.mxu0 0.0
    %3119 = vmatpush1.msra.mxu0 0.0
    %3120 = vmatprep.subr.mxu0 0.0
    %3121 = vmatpush1.msra.mxu0 0.0
    %3122 = vmatprep.subr.mxu0 0.0
    %3123 = vmatpush1.msra.mxu0 0.0
    %3124 = vmatprep.subr.mxu0 0.0
    %3125 = vmatpush1.msra.mxu0 0.0
    %3126 = vmatprep.subr.mxu0 0.0
    %3127 = vmatpush1.msra.mxu0 0.0
    %3128 = vmatprep.subr.mxu0 0.0
    %3129 = vmatpush1.msra.mxu0 0.0
    %3130 = vmatprep.subr.mxu0 0.0
    %3131 = vmatpush1.msra.mxu0 0.0
    %3132 = vmatprep.subr.mxu0 0.0
    %3133 = vmatpush1.msra.mxu0 0.0
    %3134 = vmatprep.subr.mxu0 0.0
    %3135 = vmatpush1.msra.mxu0 0.0
    %3136 = vmatprep.subr.mxu0 0.0
    %3137 = vmatpush1.msra.mxu0 0.0
    %3138 = vmatprep.subr.mxu0 0.0
    %3139 = vmatpush1.msra.mxu0 0.0
    %3140 = vmatprep.subr.mxu0 0.0
    %3141 = vmatpush1.msra.mxu0 0.0
    %3142 = vmatprep.subr.mxu0 0.0
    %3143 = vmatpush1.msra.mxu0 0.0
    %3144 = vmatprep.subr.mxu0 0.0
    %3145 = vmatpush1.msra.mxu0 0.0
    %3146 = vmatprep.subr.mxu0 0.0
    %3147 = vmatpush1.msra.mxu0 0.0
    %3148 = vmatprep.subr.mxu0 0.0
    %3149 = vmatpush1.msra.mxu0 0.0
    %3150 = vmatprep.subr.mxu0 0.0
    %3151 = vmatpush1.msra.mxu0 0.0
    %3152 = vmatprep.subr.mxu0 0.0
    %3153 = vmatpush1.msra.mxu0 0.0
    %3154 = vmatprep.subr.mxu0 0.0
    %3155 = vmatpush1.msra.mxu0 0.0
    %3156 = vmatprep.subr.mxu0 0.0
    %3157 = vmatpush1.msra.mxu0 0.0
    %3158 = vmatprep.subr.mxu0 0.0
    %3159 = vmatpush1.msra.mxu0 0.0
    %3160 = vmatprep.subr.mxu0 0.0
    %3161 = vmatpush1.msra.mxu0 0.0
    %3162 = vmatprep.mubr.f32.mxu0 0.0
    %3163 = vmatmul.mubr.f32.gmra.mrb[0].mxu0 %v3093
    %v3164 = vpop.f32.mrb[0].mxu0
    %v3165 = vadd.f32 0.0, %v3164
    %v3166 = vpop.f32.mrb[0].mxu0
    %3167 = vmatprep.mubr.f32.mxu0 0.0
    %3168 = vmatmul.mubr.f32.gmra.mrb[0].mxu0 %v3096
    %v3169 = vpop.f32.mrb[0].mxu0
    %v3170 = vadd.f32 0.0, %v3169
    %v3171 = vpop.f32.mrb[0].mxu0
    %3172 = vdwg.mxu0
    %v3174 = vsel %vm785, %v1583, 0
    %v3177 = vsel %vm785, %v1584, 0
    %3179 = vmatprep.subr.mxu0 0.0
    %3180 = vmatpush1.msra.mxu0 %v1913
    %3181 = vmatprep.subr.mxu0 0.0
    %3182 = vmatpush1.msra.mxu0 0.0
    %3183 = vmatprep.subr.mxu0 0.0
    %3184 = vmatpush1.msra.mxu0 0.0
    %3185 = vmatprep.subr.mxu0 0.0
    %3186 = vmatpush1.msra.mxu0 0.0
    %3187 = vmatprep.subr.mxu0 0.0
    %3188 = vmatpush1.msra.mxu0 0.0
    %3189 = vmatprep.subr.mxu0 0.0
    %3190 = vmatpush1.msra.mxu0 0.0
    %3191 = vmatprep.subr.mxu0 0.0
    %3192 = vmatpush1.msra.mxu0 0.0
    %3193 = vmatprep.subr.mxu0 0.0
    %3194 = vmatpush1.msra.mxu0 0.0
    %3195 = vmatprep.subr.mxu0 0.0
    %3196 = vmatpush1.msra.mxu0 0.0
    %3197 = vmatprep.subr.mxu0 0.0
    %3198 = vmatpush1.msra.mxu0 0.0
    %3199 = vmatprep.subr.mxu0 0.0
    %3200 = vmatpush1.msra.mxu0 0.0
    %3201 = vmatprep.subr.mxu0 0.0
    %3202 = vmatpush1.msra.mxu0 0.0
    %3203 = vmatprep.subr.mxu0 0.0
    %3204 = vmatpush1.msra.mxu0 0.0
    %3205 = vmatprep.subr.mxu0 0.0
    %3206 = vmatpush1.msra.mxu0 0.0
    %3207 = vmatprep.subr.mxu0 0.0
    %3208 = vmatpush1.msra.mxu0 0.0
    %3209 = vmatprep.subr.mxu0 0.0
    %3210 = vmatpush1.msra.mxu0 0.0
    %3211 = vmatprep.subr.mxu0 0.0
    %3212 = vmatpush1.msra.mxu0 0.0
    %3213 = vmatprep.subr.mxu0 0.0
    %3214 = vmatpush1.msra.mxu0 0.0
    %3215 = vmatprep.subr.mxu0 0.0
    %3216 = vmatpush1.msra.mxu0 0.0
    %3217 = vmatprep.subr.mxu0 0.0
    %3218 = vmatpush1.msra.mxu0 0.0
    %3219 = vmatprep.subr.mxu0 0.0
    %3220 = vmatpush1.msra.mxu0 0.0
    %3221 = vmatprep.subr.mxu0 0.0
    %3222 = vmatpush1.msra.mxu0 0.0
    %3223 = vmatprep.subr.mxu0 0.0
    %3224 = vmatpush1.msra.mxu0 0.0
    %3225 = vmatprep.subr.mxu0 0.0
    %3226 = vmatpush1.msra.mxu0 0.0
    %3227 = vmatprep.subr.mxu0 0.0
    %3228 = vmatpush1.msra.mxu0 0.0
    %3229 = vmatprep.subr.mxu0 0.0
    %3230 = vmatpush1.msra.mxu0 0.0
    %3231 = vmatprep.subr.mxu0 0.0
    %3232 = vmatpush1.msra.mxu0 0.0
    %3233 = vmatprep.subr.mxu0 0.0
    %3234 = vmatpush1.msra.mxu0 0.0
    %3235 = vmatprep.subr.mxu0 0.0
    %3236 = vmatpush1.msra.mxu0 0.0
    %3237 = vmatprep.subr.mxu0 0.0
    %3238 = vmatpush1.msra.mxu0 0.0
    %3239 = vmatprep.subr.mxu0 0.0
    %3240 = vmatpush1.msra.mxu0 0.0
    %3241 = vmatprep.subr.mxu0 0.0
    %3242 = vmatpush1.msra.mxu0 0.0
    %3243 = vmatprep.mubr.f32.mxu0 0.0
    %3244 = vmatmul.mubr.f32.gmra.mrb[0].mxu0 %v3174
    %v3245 = vpop.f32.mrb[0].mxu0
    %v3246 = vadd.f32 0.0, %v3245
    %v3247 = vpop.f32.mrb[0].mxu0
    %3248 = vmatprep.mubr.f32.mxu0 0.0
    %3249 = vmatmul.mubr.f32.gmra.mrb[0].mxu0 %v3177
    %v3250 = vpop.f32.mrb[0].mxu0
    %v3251 = vadd.f32 0.0, %v3250
    %v3252 = vpop.f32.mrb[0].mxu0
    %3253 = vdwg.mxu0
    %v3254 = vsel %vm785, %v3003, 0.0
    %v3255 = vsel %vm785, %v3084, 0.0
    %v3256 = vadd.f32 %v3254, %v3255
    %v3257 = vsel %vm785, %v3165, 0.0
    %v3258 = vadd.f32 %v3256, %v3257
    %v3259 = vsel %vm785, %v3246, 0.0
    %v3260 = vadd.f32 %v3258, %v3259
    %v3261 = vsel %vm785, %v3008, 0.0
    %v3262 = vsel %vm785, %v3089, 0.0
    %v3263 = vadd.f32 %v3261, %v3262
    %v3264 = vsel %vm785, %v3170, 0.0
    %v3265 = vadd.f32 %v3263, %v3264
    %v3266 = vsel %vm785, %v3251, 0.0
    %v3267 = vadd.f32 %v3265, %v3266
    %v3268 = vsel %vm785, %v1525, -inf
    %v3269 = vsel %vm785, %v1526, -inf
    %v3270 = vsel %vm785, %v1527, -inf
    %v3271 = vsel %vm785, %v1528, -inf
    %v3272 = vmax.f32 %v3268, %v3269
    %v3273 = vmax.f32 %v3270, %v3271
    %v3274 = vmax.f32 %v3272, %v3273
    %v3275 = vsub.f32 %v1525, %v3274
    %v3276 = vsub.f32 %v1526, %v3274
    %v3277 = vsub.f32 %v1527, %v3274
    %v3278 = vsub.f32 %v1528, %v3274
    %v3279 = vmul.f32 %v3275, 1.442695
    %v3280 = vpow.pop %v3279
    %v3281 = vmul.f32 %v3276, 1.442695
    %v3282 = vpow.pop %v3281
    %v3283 = vmul.f32 %v3277, 1.442695
    %v3284 = vpow.pop %v3283
    %v3285 = vmul.f32 %v3278, 1.442695
    %v3286 = vpow.pop %v3285
    %v3287 = vsel %vm785, %v3280, 0.0
    %v3288 = vsel %vm785, %v3282, 0.0
    %v3289 = vadd.f32 %v3287, %v3288
    %v3290 = vsel %vm785, %v3284, 0.0
    %v3291 = vadd.f32 %v3289, %v3290
    %v3292 = vsel %vm785, %v3286, 0.0
    %v3293 = vadd.f32 %v3291, %v3292
    %v3294 = vrcp.pop %v3293
    %v3295 = vmul.f32 %v3280, %v3294
    %v3296 = vmul.f32 %v3282, %v3294
    %v3297 = vmul.f32 %v3284, %v3294
    %v3298 = vmul.f32 %v3286, %v3294
    %v3300 = vsel %vm785, %v3295, 0
    %3302 = vmatprep.subr.mxu0 0.0
    %3303 = vmatpush1.msra.mxu0 %v909
    %3304 = vmatprep.subr.mxu0 0.0
    %3305 = vmatpush1.msra.mxu0 0.0
    %3306 = vmatprep.subr.mxu0 0.0
    %3307 = vmatpush1.msra.mxu0 0.0
    %3308 = vmatprep.subr.mxu0 0.0
    %3309 = vmatpush1.msra.mxu0 0.0
    %3310 = vmatprep.subr.mxu0 0.0
    %3311 = vmatpush1.msra.mxu0 0.0
    %3312 = vmatprep.subr.mxu0 0.0
    %3313 = vmatpush1.msra.mxu0 0.0
    %3314 = vmatprep.subr.mxu0 0.0
    %3315 = vmatpush1.msra.mxu0 0.0
    %3316 = vmatprep.subr.mxu0 0.0
    %3317 = vmatpush1.msra.mxu0 0.0
    %3318 = vmatprep.subr.mxu0 0.0
    %3319 = vmatpush1.msra.mxu0 0.0
    %3320 = vmatprep.subr.mxu0 0.0
    %3321 = vmatpush1.msra.mxu0 0.0
    %3322 = vmatprep.subr.mxu0 0.0
    %3323 = vmatpush1.msra.mxu0 0.0
    %3324 = vmatprep.subr.mxu0 0.0
    %3325 = vmatpush1.msra.mxu0 0.0
    %3326 = vmatprep.subr.mxu0 0.0
    %3327 = vmatpush1.msra.mxu0 0.0
    %3328 = vmatprep.subr.mxu0 0.0
    %3329 = vmatpush1.msra.mxu0 0.0
    %3330 = vmatprep.subr.mxu0 0.0
    %3331 = vmatpush1.msra.mxu0 0.0
    %3332 = vmatprep.subr.mxu0 0.0
    %3333 = vmatpush1.msra.mxu0 0.0
    %3334 = vmatprep.subr.mxu0 0.0
    %3335 = vmatpush1.msra.mxu0 0.0
    %3336 = vmatprep.subr.mxu0 0.0
    %3337 = vmatpush1.msra.mxu0 0.0
    %3338 = vmatprep.subr.mxu0 0.0
    %3339 = vmatpush1.msra.mxu0 0.0
    %3340 = vmatprep.subr.mxu0 0.0
    %3341 = vmatpush1.msra.mxu0 0.0
    %3342 = vmatprep.subr.mxu0 0.0
    %3343 = vmatpush1.msra.mxu0 0.0
    %3344 = vmatprep.subr.mxu0 0.0
    %3345 = vmatpush1.msra.mxu0 0.0
    %3346 = vmatprep.subr.mxu0 0.0
    %3347 = vmatpush1.msra.mxu0 0.0
    %3348 = vmatprep.subr.mxu0 0.0
    %3349 = vmatpush1.msra.mxu0 0.0
    %3350 = vmatprep.subr.mxu0 0.0
    %3351 = vmatpush1.msra.mxu0 0.0
    %3352 = vmatprep.subr.mxu0 0.0
    %3353 = vmatpush1.msra.mxu0 0.0
    %3354 = vmatprep.subr.mxu0 0.0
    %3355 = vmatpush1.msra.mxu0 0.0
    %3356 = vmatprep.subr.mxu0 0.0
    %3357 = vmatpush1.msra.mxu0 0.0
    %3358 = vmatprep.subr.mxu0 0.0
    %3359 = vmatpush1.msra.mxu0 0.0
    %3360 = vmatprep.subr.mxu0 0.0
    %3361 = vmatpush1.msra.mxu0 0.0
    %3362 = vmatprep.subr.mxu0 0.0
    %3363 = vmatpush1.msra.mxu0 0.0
    %3364 = vmatprep.subr.mxu0 0.0
    %3365 = vmatpush1.msra.mxu0 0.0
    %3366 = vmatprep.mubr.f32.mxu0 0.0
    %3367 = vmatmul.mubr.f32.gmra.mrb[0].mxu0 %v3300
    %v3368 = vpop.f32.mrb[0].mxu0
    %v3369 = vadd.f32 0.0, %v3368
    %v3370 = vpop.f32.mrb[0].mxu0
    %3371 = vdwg.mxu0
    %v3373 = vsel %vm785, %v3296, 0
    %3375 = vmatprep.subr.mxu0 0.0
    %3376 = vmatpush1.msra.mxu0 %v910
    %3377 = vmatprep.subr.mxu0 0.0
    %3378 = vmatpush1.msra.mxu0 0.0
    %3379 = vmatprep.subr.mxu0 0.0
    %3380 = vmatpush1.msra.mxu0 0.0
    %3381 = vmatprep.subr.mxu0 0.0
    %3382 = vmatpush1.msra.mxu0 0.0
    %3383 = vmatprep.subr.mxu0 0.0
    %3384 = vmatpush1.msra.mxu0 0.0
    %3385 = vmatprep.subr.mxu0 0.0
    %3386 = vmatpush1.msra.mxu0 0.0
    %3387 = vmatprep.subr.mxu0 0.0
    %3388 = vmatpush1.msra.mxu0 0.0
    %3389 = vmatprep.subr.mxu0 0.0
    %3390 = vmatpush1.msra.mxu0 0.0
    %3391 = vmatprep.subr.mxu0 0.0
    %3392 = vmatpush1.msra.mxu0 0.0
    %3393 = vmatprep.subr.mxu0 0.0
    %3394 = vmatpush1.msra.mxu0 0.0
    %3395 = vmatprep.subr.mxu0 0.0
    %3396 = vmatpush1.msra.mxu0 0.0
    %3397 = vmatprep.subr.mxu0 0.0
    %3398 = vmatpush1.msra.mxu0 0.0
    %3399 = vmatprep.subr.mxu0 0.0
    %3400 = vmatpush1.msra.mxu0 0.0
    %3401 = vmatprep.subr.mxu0 0.0
    %3402 = vmatpush1.msra.mxu0 0.0
    %3403 = vmatprep.subr.mxu0 0.0
    %3404 = vmatpush1.msra.mxu0 0.0
    %3405 = vmatprep.subr.mxu0 0.0
    %3406 = vmatpush1.msra.mxu0 0.0
    %3407 = vmatprep.subr.mxu0 0.0
    %3408 = vmatpush1.msra.mxu0 0.0
    %3409 = vmatprep.subr.mxu0 0.0
    %3410 = vmatpush1.msra.mxu0 0.0
    %3411 = vmatprep.subr.mxu0 0.0
    %3412 = vmatpush1.msra.mxu0 0.0
    %3413 = vmatprep.subr.mxu0 0.0
    %3414 = vmatpush1.msra.mxu0 0.0
    %3415 = vmatprep.subr.mxu0 0.0
    %3416 = vmatpush1.msra.mxu0 0.0
    %3417 = vmatprep.subr.mxu0 0.0
    %3418 = vmatpush1.msra.mxu0 0.0
    %3419 = vmatprep.subr.mxu0 0.0
    %3420 = vmatpush1.msra.mxu0 0.0
    %3421 = vmatprep.subr.mxu0 0.0
    %3422 = vmatpush1.msra.mxu0 0.0
    %3423 = vmatprep.subr.mxu0 0.0
    %3424 = vmatpush1.msra.mxu0 0.0
    %3425 = vmatprep.subr.mxu0 0.0
    %3426 = vmatpush1.msra.mxu0 0.0
    %3427 = vmatprep.subr.mxu0 0.0
    %3428 = vmatpush1.msra.mxu0 0.0
    %3429 = vmatprep.subr.mxu0 0.0
    %3430 = vmatpush1.msra.mxu0 0.0
    %3431 = vmatprep.subr.mxu0 0.0
    %3432 = vmatpush1.msra.mxu0 0.0
    %3433 = vmatprep.subr.mxu0 0.0
    %3434 = vmatpush1.msra.mxu0 0.0
    %3435 = vmatprep.subr.mxu0 0.0
    %3436 = vmatpush1.msra.mxu0 0.0
    %3437 = vmatprep.subr.mxu0 0.0
    %3438 = vmatpush1.msra.mxu0 0.0
    %3439 = vmatprep.mubr.f32.mxu0 0.0
    %3440 = vmatmul.mubr.f32.gmra.mrb[0].mxu0 %v3373
    %v3441 = vpop.f32.mrb[0].mxu0
    %v3442 = vadd.f32 0.0, %v3441
    %v3443 = vpop.f32.mrb[0].mxu0
    %3444 = vdwg.mxu0
    %v3446 = vsel %vm785, %v3297, 0
    %3448 = vmatprep.subr.mxu0 0.0
    %3449 = vmatpush1.msra.mxu0 %v911
    %3450 = vmatprep.subr.mxu0 0.0
    %3451 = vmatpush1.msra.mxu0 0.0
    %3452 = vmatprep.subr.mxu0 0.0
    %3453 = vmatpush1.msra.mxu0 0.0
    %3454 = vmatprep.subr.mxu0 0.0
    %3455 = vmatpush1.msra.mxu0 0.0
    %3456 = vmatprep.subr.mxu0 0.0
    %3457 = vmatpush1.msra.mxu0 0.0
    %3458 = vmatprep.subr.mxu0 0.0
    %3459 = vmatpush1.msra.mxu0 0.0
    %3460 = vmatprep.subr.mxu0 0.0
    %3461 = vmatpush1.msra.mxu0 0.0
    %3462 = vmatprep.subr.mxu0 0.0
    %3463 = vmatpush1.msra.mxu0 0.0
    %3464 = vmatprep.subr.mxu0 0.0
    %3465 = vmatpush1.msra.mxu0 0.0
    %3466 = vmatprep.subr.mxu0 0.0
    %3467 = vmatpush1.msra.mxu0 0.0
    %3468 = vmatprep.subr.mxu0 0.0
    %3469 = vmatpush1.msra.mxu0 0.0
    %3470 = vmatprep.subr.mxu0 0.0
    %3471 = vmatpush1.msra.mxu0 0.0
    %3472 = vmatprep.subr.mxu0 0.0
    %3473 = vmatpush1.msra.mxu0 0.0
    %3474 = vmatprep.subr.mxu0 0.0
    %3475 = vmatpush1.msra.mxu0 0.0
    %3476 = vmatprep.subr.mxu0 0.0
    %3477 = vmatpush1.msra.mxu0 0.0
    %3478 = vmatprep.subr.mxu0 0.0
    %3479 = vmatpush1.msra.mxu0 0.0
    %3480 = vmatprep.subr.mxu0 0.0
    %3481 = vmatpush1.msra.mxu0 0.0
    %3482 = vmatprep.subr.mxu0 0.0
    %3483 = vmatpush1.msra.mxu0 0.0
    %3484 = vmatprep.subr.mxu0 0.0
    %3485 = vmatpush1.msra.mxu0 0.0
    %3486 = vmatprep.subr.mxu0 0.0
    %3487 = vmatpush1.msra.mxu0 0.0
    %3488 = vmatprep.subr.mxu0 0.0
    %3489 = vmatpush1.msra.mxu0 0.0
    %3490 = vmatprep.subr.mxu0 0.0
    %3491 = vmatpush1.msra.mxu0 0.0
    %3492 = vmatprep.subr.mxu0 0.0
    %3493 = vmatpush1.msra.mxu0 0.0
    %3494 = vmatprep.subr.mxu0 0.0
    %3495 = vmatpush1.msra.mxu0 0.0
    %3496 = vmatprep.subr.mxu0 0.0
    %3497 = vmatpush1.msra.mxu0 0.0
    %3498 = vmatprep.subr.mxu0 0.0
    %3499 = vmatpush1.msra.mxu0 0.0
    %3500 = vmatprep.subr.mxu0 0.0
    %3501 = vmatpush1.msra.mxu0 0.0
    %3502 = vmatprep.subr.mxu0 0.0
    %3503 = vmatpush1.msra.mxu0 0.0
    %3504 = vmatprep.subr.mxu0 0.0
    %3505 = vmatpush1.msra.mxu0 0.0
    %3506 = vmatprep.subr.mxu0 0.0
    %3507 = vmatpush1.msra.mxu0 0.0
    %3508 = vmatprep.subr.mxu0 0.0
    %3509 = vmatpush1.msra.mxu0 0.0
    %3510 = vmatprep.subr.mxu0 0.0
    %3511 = vmatpush1.msra.mxu0 0.0
    %3512 = vmatprep.mubr.f32.mxu0 0.0
    %3513 = vmatmul.mubr.f32.gmra.mrb[0].mxu0 %v3446
    %v3514 = vpop.f32.mrb[0].mxu0
    %v3515 = vadd.f32 0.0, %v3514
    %v3516 = vpop.f32.mrb[0].mxu0
    %3517 = vdwg.mxu0
    %v3519 = vsel %vm785, %v3298, 0
    %3521 = vmatprep.subr.mxu0 0.0
    %3522 = vmatpush1.msra.mxu0 %v912
    %3523 = vmatprep.subr.mxu0 0.0
    %3524 = vmatpush1.msra.mxu0 0.0
    %3525 = vmatprep.subr.mxu0 0.0
    %3526 = vmatpush1.msra.mxu0 0.0
    %3527 = vmatprep.subr.mxu0 0.0
    %3528 = vmatpush1.msra.mxu0 0.0
    %3529 = vmatprep.subr.mxu0 0.0
    %3530 = vmatpush1.msra.mxu0 0.0
    %3531 = vmatprep.subr.mxu0 0.0
    %3532 = vmatpush1.msra.mxu0 0.0
    %3533 = vmatprep.subr.mxu0 0.0
    %3534 = vmatpush1.msra.mxu0 0.0
    %3535 = vmatprep.subr.mxu0 0.0
    %3536 = vmatpush1.msra.mxu0 0.0
    %3537 = vmatprep.subr.mxu0 0.0
    %3538 = vmatpush1.msra.mxu0 0.0
    %3539 = vmatprep.subr.mxu0 0.0
    %3540 = vmatpush1.msra.mxu0 0.0
    %3541 = vmatprep.subr.mxu0 0.0
    %3542 = vmatpush1.msra.mxu0 0.0
    %3543 = vmatprep.subr.mxu0 0.0
    %3544 = vmatpush1.msra.mxu0 0.0
    %3545 = vmatprep.subr.mxu0 0.0
    %3546 = vmatpush1.msra.mxu0 0.0
    %3547 = vmatprep.subr.mxu0 0.0
    %3548 = vmatpush1.msra.mxu0 0.0
    %3549 = vmatprep.subr.mxu0 0.0
    %3550 = vmatpush1.msra.mxu0 0.0
    %3551 = vmatprep.subr.mxu0 0.0
    %3552 = vmatpush1.msra.mxu0 0.0
    %3553 = vmatprep.subr.mxu0 0.0
    %3554 = vmatpush1.msra.mxu0 0.0
    %3555 = vmatprep.subr.mxu0 0.0
    %3556 = vmatpush1.msra.mxu0 0.0
    %3557 = vmatprep.subr.mxu0 0.0
    %3558 = vmatpush1.msra.mxu0 0.0
    %3559 = vmatprep.subr.mxu0 0.0
    %3560 = vmatpush1.msra.mxu0 0.0
    %3561 = vmatprep.subr.mxu0 0.0
    %3562 = vmatpush1.msra.mxu0 0.0
    %3563 = vmatprep.subr.mxu0 0.0
    %3564 = vmatpush1.msra.mxu0 0.0
    %3565 = vmatprep.subr.mxu0 0.0
    %3566 = vmatpush1.msra.mxu0 0.0
    %3567 = vmatprep.subr.mxu0 0.0
    %3568 = vmatpush1.msra.mxu0 0.0
    %3569 = vmatprep.subr.mxu0 0.0
    %3570 = vmatpush1.msra.mxu0 0.0
    %3571 = vmatprep.subr.mxu0 0.0
    %3572 = vmatpush1.msra.mxu0 0.0
    %3573 = vmatprep.subr.mxu0 0.0
    %3574 = vmatpush1.msra.mxu0 0.0
    %3575 = vmatprep.subr.mxu0 0.0
    %3576 = vmatpush1.msra.mxu0 0.0
    %3577 = vmatprep.subr.mxu0 0.0
    %3578 = vmatpush1.msra.mxu0 0.0
    %3579 = vmatprep.subr.mxu0 0.0
    %3580 = vmatpush1.msra.mxu0 0.0
    %3581 = vmatprep.subr.mxu0 0.0
    %3582 = vmatpush1.msra.mxu0 0.0
    %3583 = vmatprep.subr.mxu0 0.0
    %3584 = vmatpush1.msra.mxu0 0.0
    %3585 = vmatprep.mubr.f32.mxu0 0.0
    %3586 = vmatmul.mubr.f32.gmra.mrb[0].mxu0 %v3519
    %v3587 = vpop.f32.mrb[0].mxu0
    %v3588 = vadd.f32 0.0, %v3587
    %v3589 = vpop.f32.mrb[0].mxu0
    %3590 = vdwg.mxu0
    %v3592 = vsel %vm785, %v1537, 0
    %v3595 = vsel %vm785, %v1538, 0
    %3597 = vmatprep.subr.mxu0 0.0
    %3598 = vmatpush1.msra.mxu0 %v3369
    %3599 = vmatprep.subr.mxu0 0.0
    %3600 = vmatpush1.msra.mxu0 0.0
    %3601 = vmatprep.subr.mxu0 0.0
    %3602 = vmatpush1.msra.mxu0 0.0
    %3603 = vmatprep.subr.mxu0 0.0
    %3604 = vmatpush1.msra.mxu0 0.0
    %3605 = vmatprep.subr.mxu0 0.0
    %3606 = vmatpush1.msra.mxu0 0.0
    %3607 = vmatprep.subr.mxu0 0.0
    %3608 = vmatpush1.msra.mxu0 0.0
    %3609 = vmatprep.subr.mxu0 0.0
    %3610 = vmatpush1.msra.mxu0 0.0
    %3611 = vmatprep.subr.mxu0 0.0
    %3612 = vmatpush1.msra.mxu0 0.0
    %3613 = vmatprep.subr.mxu0 0.0
    %3614 = vmatpush1.msra.mxu0 0.0
    %3615 = vmatprep.subr.mxu0 0.0
    %3616 = vmatpush1.msra.mxu0 0.0
    %3617 = vmatprep.subr.mxu0 0.0
    %3618 = vmatpush1.msra.mxu0 0.0
    %3619 = vmatprep.subr.mxu0 0.0
    %3620 = vmatpush1.msra.mxu0 0.0
    %3621 = vmatprep.subr.mxu0 0.0
    %3622 = vmatpush1.msra.mxu0 0.0
    %3623 = vmatprep.subr.mxu0 0.0
    %3624 = vmatpush1.msra.mxu0 0.0
    %3625 = vmatprep.subr.mxu0 0.0
    %3626 = vmatpush1.msra.mxu0 0.0
    %3627 = vmatprep.subr.mxu0 0.0
    %3628 = vmatpush1.msra.mxu0 0.0
    %3629 = vmatprep.subr.mxu0 0.0
    %3630 = vmatpush1.msra.mxu0 0.0
    %3631 = vmatprep.subr.mxu0 0.0
    %3632 = vmatpush1.msra.mxu0 0.0
    %3633 = vmatprep.subr.mxu0 0.0
    %3634 = vmatpush1.msra.mxu0 0.0
    %3635 = vmatprep.subr.mxu0 0.0
    %3636 = vmatpush1.msra.mxu0 0.0
    %3637 = vmatprep.subr.mxu0 0.0
    %3638 = vmatpush1.msra.mxu0 0.0
    %3639 = vmatprep.subr.mxu0 0.0
    %3640 = vmatpush1.msra.mxu0 0.0
    %3641 = vmatprep.subr.mxu0 0.0
    %3642 = vmatpush1.msra.mxu0 0.0
    %3643 = vmatprep.subr.mxu0 0.0
    %3644 = vmatpush1.msra.mxu0 0.0
    %3645 = vmatprep.subr.mxu0 0.0
    %3646 = vmatpush1.msra.mxu0 0.0
    %3647 = vmatprep.subr.mxu0 0.0
    %3648 = vmatpush1.msra.mxu0 0.0
    %3649 = vmatprep.subr.mxu0 0.0
    %3650 = vmatpush1.msra.mxu0 0.0
    %3651 = vmatprep.subr.mxu0 0.0
    %3652 = vmatpush1.msra.mxu0 0.0
    %3653 = vmatprep.subr.mxu0 0.0
    %3654 = vmatpush1.msra.mxu0 0.0
    %3655 = vmatprep.subr.mxu0 0.0
    %3656 = vmatpush1.msra.mxu0 0.0
    %3657 = vmatprep.subr.mxu0 0.0
    %3658 = vmatpush1.msra.mxu0 0.0
    %3659 = vmatprep.subr.mxu0 0.0
    %3660 = vmatpush1.msra.mxu0 0.0
    %3661 = vmatprep.mubr.f32.mxu0 0.0
    %3662 = vmatmul.mubr.f32.gmra.mrb[0].mxu0 %v3592
    %v3663 = vpop.f32.mrb[0].mxu0
    %v3664 = vadd.f32 0.0, %v3663
    %v3665 = vpop.f32.mrb[0].mxu0
    %3666 = vmatprep.mubr.f32.mxu0 0.0
    %3667 = vmatmul.mubr.f32.gmra.mrb[0].mxu0 %v3595
    %v3668 = vpop.f32.mrb[0].mxu0
    %v3669 = vadd.f32 0.0, %v3668
    %v3670 = vpop.f32.mrb[0].mxu0
    %3671 = vdwg.mxu0
    %v3673 = vsel %vm785, %v1539, 0
    %v3676 = vsel %vm785, %v1540, 0
    %3678 = vmatprep.subr.mxu0 0.0
    %3679 = vmatpush1.msra.mxu0 %v3442
    %3680 = vmatprep.subr.mxu0 0.0
    %3681 = vmatpush1.msra.mxu0 0.0
    %3682 = vmatprep.subr.mxu0 0.0
    %3683 = vmatpush1.msra.mxu0 0.0
    %3684 = vmatprep.subr.mxu0 0.0
    %3685 = vmatpush1.msra.mxu0 0.0
    %3686 = vmatprep.subr.mxu0 0.0
    %3687 = vmatpush1.msra.mxu0 0.0
    %3688 = vmatprep.subr.mxu0 0.0
    %3689 = vmatpush1.msra.mxu0 0.0
    %3690 = vmatprep.subr.mxu0 0.0
    %3691 = vmatpush1.msra.mxu0 0.0
    %3692 = vmatprep.subr.mxu0 0.0
    %3693 = vmatpush1.msra.mxu0 0.0
    %3694 = vmatprep.subr.mxu0 0.0
    %3695 = vmatpush1.msra.mxu0 0.0
    %3696 = vmatprep.subr.mxu0 0.0
    %3697 = vmatpush1.msra.mxu0 0.0
    %3698 = vmatprep.subr.mxu0 0.0
    %3699 = vmatpush1.msra.mxu0 0.0
    %3700 = vmatprep.subr.mxu0 0.0
    %3701 = vmatpush1.msra.mxu0 0.0
    %3702 = vmatprep.subr.mxu0 0.0
    %3703 = vmatpush1.msra.mxu0 0.0
    %3704 = vmatprep.subr.mxu0 0.0
    %3705 = vmatpush1.msra.mxu0 0.0
    %3706 = vmatprep.subr.mxu0 0.0
    %3707 = vmatpush1.msra.mxu0 0.0
    %3708 = vmatprep.subr.mxu0 0.0
    %3709 = vmatpush1.msra.mxu0 0.0
    %3710 = vmatprep.subr.mxu0 0.0
    %3711 = vmatpush1.msra.mxu0 0.0
    %3712 = vmatprep.subr.mxu0 0.0
    %3713 = vmatpush1.msra.mxu0 0.0
    %3714 = vmatprep.subr.mxu0 0.0
    %3715 = vmatpush1.msra.mxu0 0.0
    %3716 = vmatprep.subr.mxu0 0.0
    %3717 = vmatpush1.msra.mxu0 0.0
    %3718 = vmatprep.subr.mxu0 0.0
    %3719 = vmatpush1.msra.mxu0 0.0
    %3720 = vmatprep.subr.mxu0 0.0
    %3721 = vmatpush1.msra.mxu0 0.0
    %3722 = vmatprep.subr.mxu0 0.0
    %3723 = vmatpush1.msra.mxu0 0.0
    %3724 = vmatprep.subr.mxu0 0.0
    %3725 = vmatpush1.msra.mxu0 0.0
    %3726 = vmatprep.subr.mxu0 0.0
    %3727 = vmatpush1.msra.mxu0 0.0
    %3728 = vmatprep.subr.mxu0 0.0
    %3729 = vmatpush1.msra.mxu0 0.0
    %3730 = vmatprep.subr.mxu0 0.0
    %3731 = vmatpush1.msra.mxu0 0.0
    %3732 = vmatprep.subr.mxu0 0.0
    %3733 = vmatpush1.msra.mxu0 0.0
    %3734 = vmatprep.subr.mxu0 0.0
    %3735 = vmatpush1.msra.mxu0 0.0
    %3736 = vmatprep.subr.mxu0 0.0
    %3737 = vmatpush1.msra.mxu0 0.0
    %3738 = vmatprep.subr.mxu0 0.0
    %3739 = vmatpush1.msra.mxu0 0.0
    %3740 = vmatprep.subr.mxu0 0.0
    %3741 = vmatpush1.msra.mxu0 0.0
    %3742 = vmatprep.mubr.f32.mxu0 0.0
    %3743 = vmatmul.mubr.f32.gmra.mrb[0].mxu0 %v3673
    %v3744 = vpop.f32.mrb[0].mxu0
    %v3745 = vadd.f32 0.0, %v3744
    %v3746 = vpop.f32.mrb[0].mxu0
    %3747 = vmatprep.mubr.f32.mxu0 0.0
    %3748 = vmatmul.mubr.f32.gmra.mrb[0].mxu0 %v3676
    %v3749 = vpop.f32.mrb[0].mxu0
    %v3750 = vadd.f32 0.0, %v3749
    %v3751 = vpop.f32.mrb[0].mxu0
    %3752 = vdwg.mxu0
    %v3754 = vsel %vm785, %v1541, 0
    %v3757 = vsel %vm785, %v1542, 0
    %3759 = vmatprep.subr.mxu0 0.0
    %3760 = vmatpush1.msra.mxu0 %v3515
    %3761 = vmatprep.subr.mxu0 0.0
    %3762 = vmatpush1.msra.mxu0 0.0
    %3763 = vmatprep.subr.mxu0 0.0
    %3764 = vmatpush1.msra.mxu0 0.0
    %3765 = vmatprep.subr.mxu0 0.0
    %3766 = vmatpush1.msra.mxu0 0.0
    %3767 = vmatprep.subr.mxu0 0.0
    %3768 = vmatpush1.msra.mxu0 0.0
    %3769 = vmatprep.subr.mxu0 0.0
    %3770 = vmatpush1.msra.mxu0 0.0
    %3771 = vmatprep.subr.mxu0 0.0
    %3772 = vmatpush1.msra.mxu0 0.0
    %3773 = vmatprep.subr.mxu0 0.0
    %3774 = vmatpush1.msra.mxu0 0.0
    %3775 = vmatprep.subr.mxu0 0.0
    %3776 = vmatpush1.msra.mxu0 0.0
    %3777 = vmatprep.subr.mxu0 0.0
    %3778 = vmatpush1.msra.mxu0 0.0
    %3779 = vmatprep.subr.mxu0 0.0
    %3780 = vmatpush1.msra.mxu0 0.0
    %3781 = vmatprep.subr.mxu0 0.0
    %3782 = vmatpush1.msra.mxu0 0.0
    %3783 = vmatprep.subr.mxu0 0.0
    %3784 = vmatpush1.msra.mxu0 0.0
    %3785 = vmatprep.subr.mxu0 0.0
    %3786 = vmatpush1.msra.mxu0 0.0
    %3787 = vmatprep.subr.mxu0 0.0
    %3788 = vmatpush1.msra.mxu0 0.0
    %3789 = vmatprep.subr.mxu0 0.0
    %3790 = vmatpush1.msra.mxu0 0.0
    %3791 = vmatprep.subr.mxu0 0.0
    %3792 = vmatpush1.msra.mxu0 0.0
    %3793 = vmatprep.subr.mxu0 0.0
    %3794 = vmatpush1.msra.mxu0 0.0
    %3795 = vmatprep.subr.mxu0 0.0
    %3796 = vmatpush1.msra.mxu0 0.0
    %3797 = vmatprep.subr.mxu0 0.0
    %3798 = vmatpush1.msra.mxu0 0.0
    %3799 = vmatprep.subr.mxu0 0.0
    %3800 = vmatpush1.msra.mxu0 0.0
    %3801 = vmatprep.subr.mxu0 0.0
    %3802 = vmatpush1.msra.mxu0 0.0
    %3803 = vmatprep.subr.mxu0 0.0
    %3804 = vmatpush1.msra.mxu0 0.0
    %3805 = vmatprep.subr.mxu0 0.0
    %3806 = vmatpush1.msra.mxu0 0.0
    %3807 = vmatprep.subr.mxu0 0.0
    %3808 = vmatpush1.msra.mxu0 0.0
    %3809 = vmatprep.subr.mxu0 0.0
    %3810 = vmatpush1.msra.mxu0 0.0
    %3811 = vmatprep.subr.mxu0 0.0
    %3812 = vmatpush1.msra.mxu0 0.0
    %3813 = vmatprep.subr.mxu0 0.0
    %3814 = vmatpush1.msra.mxu0 0.0
    %3815 = vmatprep.subr.mxu0 0.0
    %3816 = vmatpush1.msra.mxu0 0.0
    %3817 = vmatprep.subr.mxu0 0.0
    %3818 = vmatpush1.msra.mxu0 0.0
    %3819 = vmatprep.subr.mxu0 0.0
    %3820 = vmatpush1.msra.mxu0 0.0
    %3821 = vmatprep.subr.mxu0 0.0
    %3822 = vmatpush1.msra.mxu0 0.0
    %3823 = vmatprep.mubr.f32.mxu0 0.0
    %3824 = vmatmul.mubr.f32.gmra.mrb[0].mxu0 %v3754
    %v3825 = vpop.f32.mrb[0].mxu0
    %v3826 = vadd.f32 0.0, %v3825
    %v3827 = vpop.f32.mrb[0].mxu0
    %3828 = vmatprep.mubr.f32.mxu0 0.0
    %3829 = vmatmul.mubr.f32.gmra.mrb[0].mxu0 %v3757
    %v3830 = vpop.f32.mrb[0].mxu0
    %v3831 = vadd.f32 0.0, %v3830
    %v3832 = vpop.f32.mrb[0].mxu0
    %3833 = vdwg.mxu0
    %v3835 = vsel %vm785, %v1543, 0
    %v3838 = vsel %vm785, %v1544, 0
    %3840 = vmatprep.subr.mxu0 0.0
    %3841 = vmatpush1.msra.mxu0 %v3588
    %3842 = vmatprep.subr.mxu0 0.0
    %3843 = vmatpush1.msra.mxu0 0.0
    %3844 = vmatprep.subr.mxu0 0.0
    %3845 = vmatpush1.msra.mxu0 0.0
    %3846 = vmatprep.subr.mxu0 0.0
    %3847 = vmatpush1.msra.mxu0 0.0
    %3848 = vmatprep.subr.mxu0 0.0
    %3849 = vmatpush1.msra.mxu0 0.0
    %3850 = vmatprep.subr.mxu0 0.0
    %3851 = vmatpush1.msra.mxu0 0.0
    %3852 = vmatprep.subr.mxu0 0.0
    %3853 = vmatpush1.msra.mxu0 0.0
    %3854 = vmatprep.subr.mxu0 0.0
    %3855 = vmatpush1.msra.mxu0 0.0
    %3856 = vmatprep.subr.mxu0 0.0
    %3857 = vmatpush1.msra.mxu0 0.0
    %3858 = vmatprep.subr.mxu0 0.0
    %3859 = vmatpush1.msra.mxu0 0.0
    %3860 = vmatprep.subr.mxu0 0.0
    %3861 = vmatpush1.msra.mxu0 0.0
    %3862 = vmatprep.subr.mxu0 0.0
    %3863 = vmatpush1.msra.mxu0 0.0
    %3864 = vmatprep.subr.mxu0 0.0
    %3865 = vmatpush1.msra.mxu0 0.0
    %3866 = vmatprep.subr.mxu0 0.0
    %3867 = vmatpush1.msra.mxu0 0.0
    %3868 = vmatprep.subr.mxu0 0.0
    %3869 = vmatpush1.msra.mxu0 0.0
    %3870 = vmatprep.subr.mxu0 0.0
    %3871 = vmatpush1.msra.mxu0 0.0
    %3872 = vmatprep.subr.mxu0 0.0
    %3873 = vmatpush1.msra.mxu0 0.0
    %3874 = vmatprep.subr.mxu0 0.0
    %3875 = vmatpush1.msra.mxu0 0.0
    %3876 = vmatprep.subr.mxu0 0.0
    %3877 = vmatpush1.msra.mxu0 0.0
    %3878 = vmatprep.subr.mxu0 0.0
    %3879 = vmatpush1.msra.mxu0 0.0
    %3880 = vmatprep.subr.mxu0 0.0
    %3881 = vmatpush1.msra.mxu0 0.0
    %3882 = vmatprep.subr.mxu0 0.0
    %3883 = vmatpush1.msra.mxu0 0.0
    %3884 = vmatprep.subr.mxu0 0.0
    %3885 = vmatpush1.msra.mxu0 0.0
    %3886 = vmatprep.subr.mxu0 0.0
    %3887 = vmatpush1.msra.mxu0 0.0
    %3888 = vmatprep.subr.mxu0 0.0
    %3889 = vmatpush1.msra.mxu0 0.0
    %3890 = vmatprep.subr.mxu0 0.0
    %3891 = vmatpush1.msra.mxu0 0.0
    %3892 = vmatprep.subr.mxu0 0.0
    %3893 = vmatpush1.msra.mxu0 0.0
    %3894 = vmatprep.subr.mxu0 0.0
    %3895 = vmatpush1.msra.mxu0 0.0
    %3896 = vmatprep.subr.mxu0 0.0
    %3897 = vmatpush1.msra.mxu0 0.0
    %3898 = vmatprep.subr.mxu0 0.0
    %3899 = vmatpush1.msra.mxu0 0.0
    %3900 = vmatprep.subr.mxu0 0.0
    %3901 = vmatpush1.msra.mxu0 0.0
    %3902 = vmatprep.subr.mxu0 0.0
    %3903 = vmatpush1.msra.mxu0 0.0
    %3904 = vmatprep.mubr.f32.mxu0 0.0
    %3905 = vmatmul.mubr.f32.gmra.mrb[0].mxu0 %v3835
    %v3906 = vpop.f32.mrb[0].mxu0
    %v3907 = vadd.f32 0.0, %v3906
    %v3908 = vpop.f32.mrb[0].mxu0
    %3909 = vmatprep.mubr.f32.mxu0 0.0
    %3910 = vmatmul.mubr.f32.gmra.mrb[0].mxu0 %v3838
    %v3911 = vpop.f32.mrb[0].mxu0
    %v3912 = vadd.f32 0.0, %v3911
    %v3913 = vpop.f32.mrb[0].mxu0
    %3914 = vdwg.mxu0
    %v3915 = vsel %vm785, %v3664, 0.0
    %v3916 = vsel %vm785, %v3745, 0.0
    %v3917 = vadd.f32 %v3915, %v3916
    %v3918 = vsel %vm785, %v3826, 0.0
    %v3919 = vadd.f32 %v3917, %v3918
    %v3920 = vsel %vm785, %v3907, 0.0
    %v3921 = vadd.f32 %v3919, %v3920
    %v3922 = vsel %vm785, %v3669, 0.0
    %v3923 = vsel %vm785, %v3750, 0.0
    %v3924 = vadd.f32 %v3922, %v3923
    %v3925 = vsel %vm785, %v3831, 0.0
    %v3926 = vadd.f32 %v3924, %v3925
    %v3927 = vsel %vm785, %v3912, 0.0
    %v3928 = vadd.f32 %v3926, %v3927
    %v3929 = vadd.f32 %v2246, %v3921
    %v3930 = vadd.f32 %v2253, %v3928
    %v3932 = vsel %vm785, %v1553, 0
    %v3935 = vsel %vm785, %v1554, 0
    %3937 = vmatprep.subr.mxu0 0.0
    %3938 = vmatpush1.msra.mxu0 %v3369
    %3939 = vmatprep.subr.mxu0 0.0
    %3940 = vmatpush1.msra.mxu0 0.0
    %3941 = vmatprep.subr.mxu0 0.0
    %3942 = vmatpush1.msra.mxu0 0.0
    %3943 = vmatprep.subr.mxu0 0.0
    %3944 = vmatpush1.msra.mxu0 0.0
    %3945 = vmatprep.subr.mxu0 0.0
    %3946 = vmatpush1.msra.mxu0 0.0
    %3947 = vmatprep.subr.mxu0 0.0
    %3948 = vmatpush1.msra.mxu0 0.0
    %3949 = vmatprep.subr.mxu0 0.0
    %3950 = vmatpush1.msra.mxu0 0.0
    %3951 = vmatprep.subr.mxu0 0.0
    %3952 = vmatpush1.msra.mxu0 0.0
    %3953 = vmatprep.subr.mxu0 0.0
    %3954 = vmatpush1.msra.mxu0 0.0
    %3955 = vmatprep.subr.mxu0 0.0
    %3956 = vmatpush1.msra.mxu0 0.0
    %3957 = vmatprep.subr.mxu0 0.0
    %3958 = vmatpush1.msra.mxu0 0.0
    %3959 = vmatprep.subr.mxu0 0.0
    %3960 = vmatpush1.msra.mxu0 0.0
    %3961 = vmatprep.subr.mxu0 0.0
    %3962 = vmatpush1.msra.mxu0 0.0
    %3963 = vmatprep.subr.mxu0 0.0
    %3964 = vmatpush1.msra.mxu0 0.0
    %3965 = vmatprep.subr.mxu0 0.0
    %3966 = vmatpush1.msra.mxu0 0.0
    %3967 = vmatprep.subr.mxu0 0.0
    %3968 = vmatpush1.msra.mxu0 0.0
    %3969 = vmatprep.subr.mxu0 0.0
    %3970 = vmatpush1.msra.mxu0 0.0
    %3971 = vmatprep.subr.mxu0 0.0
    %3972 = vmatpush1.msra.mxu0 0.0
    %3973 = vmatprep.subr.mxu0 0.0
    %3974 = vmatpush1.msra.mxu0 0.0
    %3975 = vmatprep.subr.mxu0 0.0
    %3976 = vmatpush1.msra.mxu0 0.0
    %3977 = vmatprep.subr.mxu0 0.0
    %3978 = vmatpush1.msra.mxu0 0.0
    %3979 = vmatprep.subr.mxu0 0.0
    %3980 = vmatpush1.msra.mxu0 0.0
    %3981 = vmatprep.subr.mxu0 0.0
    %3982 = vmatpush1.msra.mxu0 0.0
    %3983 = vmatprep.subr.mxu0 0.0
    %3984 = vmatpush1.msra.mxu0 0.0
    %3985 = vmatprep.subr.mxu0 0.0
    %3986 = vmatpush1.msra.mxu0 0.0
    %3987 = vmatprep.subr.mxu0 0.0
    %3988 = vmatpush1.msra.mxu0 0.0
    %3989 = vmatprep.subr.mxu0 0.0
    %3990 = vmatpush1.msra.mxu0 0.0
    %3991 = vmatprep.subr.mxu0 0.0
    %3992 = vmatpush1.msra.mxu0 0.0
    %3993 = vmatprep.subr.mxu0 0.0
    %3994 = vmatpush1.msra.mxu0 0.0
    %3995 = vmatprep.subr.mxu0 0.0
    %3996 = vmatpush1.msra.mxu0 0.0
    %3997 = vmatprep.subr.mxu0 0.0
    %3998 = vmatpush1.msra.mxu0 0.0
    %3999 = vmatprep.subr.mxu0 0.0
    %4000 = vmatpush1.msra.mxu0 0.0
    %4001 = vmatprep.mubr.f32.mxu0 0.0
    %4002 = vmatmul.mubr.f32.gmra.mrb[0].mxu0 %v3932
    %v4003 = vpop.f32.mrb[0].mxu0
    %v4004 = vadd.f32 0.0, %v4003
    %v4005 = vpop.f32.mrb[0].mxu0
    %4006 = vmatprep.mubr.f32.mxu0 0.0
    %4007 = vmatmul.mubr.f32.gmra.mrb[0].mxu0 %v3935
    %v4008 = vpop.f32.mrb[0].mxu0
    %v4009 = vadd.f32 0.0, %v4008
    %v4010 = vpop.f32.mrb[0].mxu0
    %4011 = vdwg.mxu0
    %v4013 = vsel %vm785, %v1555, 0
    %v4016 = vsel %vm785, %v1556, 0
    %4018 = vmatprep.subr.mxu0 0.0
    %4019 = vmatpush1.msra.mxu0 %v3442
    %4020 = vmatprep.subr.mxu0 0.0
    %4021 = vmatpush1.msra.mxu0 0.0
    %4022 = vmatprep.subr.mxu0 0.0
    %4023 = vmatpush1.msra.mxu0 0.0
    %4024 = vmatprep.subr.mxu0 0.0
    %4025 = vmatpush1.msra.mxu0 0.0
    %4026 = vmatprep.subr.mxu0 0.0
    %4027 = vmatpush1.msra.mxu0 0.0
    %4028 = vmatprep.subr.mxu0 0.0
    %4029 = vmatpush1.msra.mxu0 0.0
    %4030 = vmatprep.subr.mxu0 0.0
    %4031 = vmatpush1.msra.mxu0 0.0
    %4032 = vmatprep.subr.mxu0 0.0
    %4033 = vmatpush1.msra.mxu0 0.0
    %4034 = vmatprep.subr.mxu0 0.0
    %4035 = vmatpush1.msra.mxu0 0.0
    %4036 = vmatprep.subr.mxu0 0.0
    %4037 = vmatpush1.msra.mxu0 0.0
    %4038 = vmatprep.subr.mxu0 0.0
    %4039 = vmatpush1.msra.mxu0 0.0
    %4040 = vmatprep.subr.mxu0 0.0
    %4041 = vmatpush1.msra.mxu0 0.0
    %4042 = vmatprep.subr.mxu0 0.0
    %4043 = vmatpush1.msra.mxu0 0.0
    %4044 = vmatprep.subr.mxu0 0.0
    %4045 = vmatpush1.msra.mxu0 0.0
    %4046 = vmatprep.subr.mxu0 0.0
    %4047 = vmatpush1.msra.mxu0 0.0
    %4048 = vmatprep.subr.mxu0 0.0
    %4049 = vmatpush1.msra.mxu0 0.0
    %4050 = vmatprep.subr.mxu0 0.0
    %4051 = vmatpush1.msra.mxu0 0.0
    %4052 = vmatprep.subr.mxu0 0.0
    %4053 = vmatpush1.msra.mxu0 0.0
    %4054 = vmatprep.subr.mxu0 0.0
    %4055 = vmatpush1.msra.mxu0 0.0
    %4056 = vmatprep.subr.mxu0 0.0
    %4057 = vmatpush1.msra.mxu0 0.0
    %4058 = vmatprep.subr.mxu0 0.0
    %4059 = vmatpush1.msra.mxu0 0.0
    %4060 = vmatprep.subr.mxu0 0.0
    %4061 = vmatpush1.msra.mxu0 0.0
    %4062 = vmatprep.subr.mxu0 0.0
    %4063 = vmatpush1.msra.mxu0 0.0
    %4064 = vmatprep.subr.mxu0 0.0
    %4065 = vmatpush1.msra.mxu0 0.0
    %4066 = vmatprep.subr.mxu0 0.0
    %4067 = vmatpush1.msra.mxu0 0.0
    %4068 = vmatprep.subr.mxu0 0.0
    %4069 = vmatpush1.msra.mxu0 0.0
    %4070 = vmatprep.subr.mxu0 0.0
    %4071 = vmatpush1.msra.mxu0 0.0
    %4072 = vmatprep.subr.mxu0 0.0
    %4073 = vmatpush1.msra.mxu0 0.0
    %4074 = vmatprep.subr.mxu0 0.0
    %4075 = vmatpush1.msra.mxu0 0.0
    %4076 = vmatprep.subr.mxu0 0.0
    %4077 = vmatpush1.msra.mxu0 0.0
    %4078 = vmatprep.subr.mxu0 0.0
    %4079 = vmatpush1.msra.mxu0 0.0
    %4080 = vmatprep.subr.mxu0 0.0
    %4081 = vmatpush1.msra.mxu0 0.0
    %4082 = vmatprep.mubr.f32.mxu0 0.0
    %4083 = vmatmul.mubr.f32.gmra.mrb[0].mxu0 %v4013
    %v4084 = vpop.f32.mrb[0].mxu0
    %v4085 = vadd.f32 0.0, %v4084
    %v4086 = vpop.f32.mrb[0].mxu0
    %4087 = vmatprep.mubr.f32.mxu0 0.0
    %4088 = vmatmul.mubr.f32.gmra.mrb[0].mxu0 %v4016
    %v4089 = vpop.f32.mrb[0].mxu0
    %v4090 = vadd.f32 0.0, %v4089
    %v4091 = vpop.f32.mrb[0].mxu0
    %4092 = vdwg.mxu0
    %v4094 = vsel %vm785, %v1557, 0
    %v4097 = vsel %vm785, %v1558, 0
    %4099 = vmatprep.subr.mxu0 0.0
    %4100 = vmatpush1.msra.mxu0 %v3515
    %4101 = vmatprep.subr.mxu0 0.0
    %4102 = vmatpush1.msra.mxu0 0.0
    %4103 = vmatprep.subr.mxu0 0.0
    %4104 = vmatpush1.msra.mxu0 0.0
    %4105 = vmatprep.subr.mxu0 0.0
    %4106 = vmatpush1.msra.mxu0 0.0
    %4107 = vmatprep.subr.mxu0 0.0
    %4108 = vmatpush1.msra.mxu0 0.0
    %4109 = vmatprep.subr.mxu0 0.0
    %4110 = vmatpush1.msra.mxu0 0.0
    %4111 = vmatprep.subr.mxu0 0.0
    %4112 = vmatpush1.msra.mxu0 0.0
    %4113 = vmatprep.subr.mxu0 0.0
    %4114 = vmatpush1.msra.mxu0 0.0
    %4115 = vmatprep.subr.mxu0 0.0
    %4116 = vmatpush1.msra.mxu0 0.0
    %4117 = vmatprep.subr.mxu0 0.0
    %4118 = vmatpush1.msra.mxu0 0.0
    %4119 = vmatprep.subr.mxu0 0.0
    %4120 = vmatpush1.msra.mxu0 0.0
    %4121 = vmatprep.subr.mxu0 0.0
    %4122 = vmatpush1.msra.mxu0 0.0
    %4123 = vmatprep.subr.mxu0 0.0
    %4124 = vmatpush1.msra.mxu0 0.0
    %4125 = vmatprep.subr.mxu0 0.0
    %4126 = vmatpush1.msra.mxu0 0.0
    %4127 = vmatprep.subr.mxu0 0.0
    %4128 = vmatpush1.msra.mxu0 0.0
    %4129 = vmatprep.subr.mxu0 0.0
    %4130 = vmatpush1.msra.mxu0 0.0
    %4131 = vmatprep.subr.mxu0 0.0
    %4132 = vmatpush1.msra.mxu0 0.0
    %4133 = vmatprep.subr.mxu0 0.0
    %4134 = vmatpush1.msra.mxu0 0.0
    %4135 = vmatprep.subr.mxu0 0.0
    %4136 = vmatpush1.msra.mxu0 0.0
    %4137 = vmatprep.subr.mxu0 0.0
    %4138 = vmatpush1.msra.mxu0 0.0
    %4139 = vmatprep.subr.mxu0 0.0
    %4140 = vmatpush1.msra.mxu0 0.0
    %4141 = vmatprep.subr.mxu0 0.0
    %4142 = vmatpush1.msra.mxu0 0.0
    %4143 = vmatprep.subr.mxu0 0.0
    %4144 = vmatpush1.msra.mxu0 0.0
    %4145 = vmatprep.subr.mxu0 0.0
    %4146 = vmatpush1.msra.mxu0 0.0
    %4147 = vmatprep.subr.mxu0 0.0
    %4148 = vmatpush1.msra.mxu0 0.0
    %4149 = vmatprep.subr.mxu0 0.0
    %4150 = vmatpush1.msra.mxu0 0.0
    %4151 = vmatprep.subr.mxu0 0.0
    %4152 = vmatpush1.msra.mxu0 0.0
    %4153 = vmatprep.subr.mxu0 0.0
    %4154 = vmatpush1.msra.mxu0 0.0
    %4155 = vmatprep.subr.mxu0 0.0
    %4156 = vmatpush1.msra.mxu0 0.0
    %4157 = vmatprep.subr.mxu0 0.0
    %4158 = vmatpush1.msra.mxu0 0.0
    %4159 = vmatprep.subr.mxu0 0.0
    %4160 = vmatpush1.msra.mxu0 0.0
    %4161 = vmatprep.subr.mxu0 0.0
    %4162 = vmatpush1.msra.mxu0 0.0
    %4163 = vmatprep.mubr.f32.mxu0 0.0
    %4164 = vmatmul.mubr.f32.gmra.mrb[0].mxu0 %v4094
    %v4165 = vpop.f32.mrb[0].mxu0
    %v4166 = vadd.f32 0.0, %v4165
    %v4167 = vpop.f32.mrb[0].mxu0
    %4168 = vmatprep.mubr.f32.mxu0 0.0
    %4169 = vmatmul.mubr.f32.gmra.mrb[0].mxu0 %v4097
    %v4170 = vpop.f32.mrb[0].mxu0
    %v4171 = vadd.f32 0.0, %v4170
    %v4172 = vpop.f32.mrb[0].mxu0
    %4173 = vdwg.mxu0
    %v4175 = vsel %vm785, %v1559, 0
    %v4178 = vsel %vm785, %v1560, 0
    %4180 = vmatprep.subr.mxu0 0.0
    %4181 = vmatpush1.msra.mxu0 %v3588
    %4182 = vmatprep.subr.mxu0 0.0
    %4183 = vmatpush1.msra.mxu0 0.0
    %4184 = vmatprep.subr.mxu0 0.0
    %4185 = vmatpush1.msra.mxu0 0.0
    %4186 = vmatprep.subr.mxu0 0.0
    %4187 = vmatpush1.msra.mxu0 0.0
    %4188 = vmatprep.subr.mxu0 0.0
    %4189 = vmatpush1.msra.mxu0 0.0
    %4190 = vmatprep.subr.mxu0 0.0
    %4191 = vmatpush1.msra.mxu0 0.0
    %4192 = vmatprep.subr.mxu0 0.0
    %4193 = vmatpush1.msra.mxu0 0.0
    %4194 = vmatprep.subr.mxu0 0.0
    %4195 = vmatpush1.msra.mxu0 0.0
    %4196 = vmatprep.subr.mxu0 0.0
    %4197 = vmatpush1.msra.mxu0 0.0
    %4198 = vmatprep.subr.mxu0 0.0
    %4199 = vmatpush1.msra.mxu0 0.0
    %4200 = vmatprep.subr.mxu0 0.0
    %4201 = vmatpush1.msra.mxu0 0.0
    %4202 = vmatprep.subr.mxu0 0.0
    %4203 = vmatpush1.msra.mxu0 0.0
    %4204 = vmatprep.subr.mxu0 0.0
    %4205 = vmatpush1.msra.mxu0 0.0
    %4206 = vmatprep.subr.mxu0 0.0
    %4207 = vmatpush1.msra.mxu0 0.0
    %4208 = vmatprep.subr.mxu0 0.0
    %4209 = vmatpush1.msra.mxu0 0.0
    %4210 = vmatprep.subr.mxu0 0.0
    %4211 = vmatpush1.msra.mxu0 0.0
    %4212 = vmatprep.subr.mxu0 0.0
    %4213 = vmatpush1.msra.mxu0 0.0
    %4214 = vmatprep.subr.mxu0 0.0
    %4215 = vmatpush1.msra.mxu0 0.0
    %4216 = vmatprep.subr.mxu0 0.0
    %4217 = vmatpush1.msra.mxu0 0.0
    %4218 = vmatprep.subr.mxu0 0.0
    %4219 = vmatpush1.msra.mxu0 0.0
    %4220 = vmatprep.subr.mxu0 0.0
    %4221 = vmatpush1.msra.mxu0 0.0
    %4222 = vmatprep.subr.mxu0 0.0
    %4223 = vmatpush1.msra.mxu0 0.0
    %4224 = vmatprep.subr.mxu0 0.0
    %4225 = vmatpush1.msra.mxu0 0.0
    %4226 = vmatprep.subr.mxu0 0.0
    %4227 = vmatpush1.msra.mxu0 0.0
    %4228 = vmatprep.subr.mxu0 0.0
    %4229 = vmatpush1.msra.mxu0 0.0
    %4230 = vmatprep.subr.mxu0 0.0
    %4231 = vmatpush1.msra.mxu0 0.0
    %4232 = vmatprep.subr.mxu0 0.0
    %4233 = vmatpush1.msra.mxu0 0.0
    %4234 = vmatprep.subr.mxu0 0.0
    %4235 = vmatpush1.msra.mxu0 0.0
    %4236 = vmatprep.subr.mxu0 0.0
    %4237 = vmatpush1.msra.mxu0 0.0
    %4238 = vmatprep.subr.mxu0 0.0
    %4239 = vmatpush1.msra.mxu0 0.0
    %4240 = vmatprep.subr.mxu0 0.0
    %4241 = vmatpush1.msra.mxu0 0.0
    %4242 = vmatprep.subr.mxu0 0.0
    %4243 = vmatpush1.msra.mxu0 0.0
    %4244 = vmatprep.mubr.f32.mxu0 0.0
    %4245 = vmatmul.mubr.f32.gmra.mrb[0].mxu0 %v4175
    %v4246 = vpop.f32.mrb[0].mxu0
    %v4247 = vadd.f32 0.0, %v4246
    %v4248 = vpop.f32.mrb[0].mxu0
    %4249 = vmatprep.mubr.f32.mxu0 0.0
    %4250 = vmatmul.mubr.f32.gmra.mrb[0].mxu0 %v4178
    %v4251 = vpop.f32.mrb[0].mxu0
    %v4252 = vadd.f32 0.0, %v4251
    %v4253 = vpop.f32.mrb[0].mxu0
    %4254 = vdwg.mxu0
    %v4255 = vsel %vm785, %v4004, 0.0
    %v4256 = vsel %vm785, %v4085, 0.0
    %v4257 = vadd.f32 %v4255, %v4256
    %v4258 = vsel %vm785, %v4166, 0.0
    %v4259 = vadd.f32 %v4257, %v4258
    %v4260 = vsel %vm785, %v4247, 0.0
    %v4261 = vadd.f32 %v4259, %v4260
    %v4262 = vsel %vm785, %v4009, 0.0
    %v4263 = vsel %vm785, %v4090, 0.0
    %v4264 = vadd.f32 %v4262, %v4263
    %v4265 = vsel %vm785, %v4171, 0.0
    %v4266 = vadd.f32 %v4264, %v4265
    %v4267 = vsel %vm785, %v4252, 0.0
    %v4268 = vadd.f32 %v4266, %v4267
    %v4269 = vadd.f32 %v2584, %v4261
    %v4270 = vadd.f32 %v2591, %v4268
    %v4272 = vsel %vm785, %v1569, 0
    %v4275 = vsel %vm785, %v1570, 0
    %4277 = vmatprep.subr.mxu0 0.0
    %4278 = vmatpush1.msra.mxu0 %v3369
    %4279 = vmatprep.subr.mxu0 0.0
    %4280 = vmatpush1.msra.mxu0 0.0
    %4281 = vmatprep.subr.mxu0 0.0
    %4282 = vmatpush1.msra.mxu0 0.0
    %4283 = vmatprep.subr.mxu0 0.0
    %4284 = vmatpush1.msra.mxu0 0.0
    %4285 = vmatprep.subr.mxu0 0.0
    %4286 = vmatpush1.msra.mxu0 0.0
    %4287 = vmatprep.subr.mxu0 0.0
    %4288 = vmatpush1.msra.mxu0 0.0
    %4289 = vmatprep.subr.mxu0 0.0
    %4290 = vmatpush1.msra.mxu0 0.0
    %4291 = vmatprep.subr.mxu0 0.0
    %4292 = vmatpush1.msra.mxu0 0.0
    %4293 = vmatprep.subr.mxu0 0.0
    %4294 = vmatpush1.msra.mxu0 0.0
    %4295 = vmatprep.subr.mxu0 0.0
    %4296 = vmatpush1.msra.mxu0 0.0
    %4297 = vmatprep.subr.mxu0 0.0
    %4298 = vmatpush1.msra.mxu0 0.0
    %4299 = vmatprep.subr.mxu0 0.0
    %4300 = vmatpush1.msra.mxu0 0.0
    %4301 = vmatprep.subr.mxu0 0.0
    %4302 = vmatpush1.msra.mxu0 0.0
    %4303 = vmatprep.subr.mxu0 0.0
    %4304 = vmatpush1.msra.mxu0 0.0
    %4305 = vmatprep.subr.mxu0 0.0
    %4306 = vmatpush1.msra.mxu0 0.0
    %4307 = vmatprep.subr.mxu0 0.0
    %4308 = vmatpush1.msra.mxu0 0.0
    %4309 = vmatprep.subr.mxu0 0.0
    %4310 = vmatpush1.msra.mxu0 0.0
    %4311 = vmatprep.subr.mxu0 0.0
    %4312 = vmatpush1.msra.mxu0 0.0
    %4313 = vmatprep.subr.mxu0 0.0
    %4314 = vmatpush1.msra.mxu0 0.0
    %4315 = vmatprep.subr.mxu0 0.0
    %4316 = vmatpush1.msra.mxu0 0.0
    %4317 = vmatprep.subr.mxu0 0.0
    %4318 = vmatpush1.msra.mxu0 0.0
    %4319 = vmatprep.subr.mxu0 0.0
    %4320 = vmatpush1.msra.mxu0 0.0
    %4321 = vmatprep.subr.mxu0 0.0
    %4322 = vmatpush1.msra.mxu0 0.0
    %4323 = vmatprep.subr.mxu0 0.0
    %4324 = vmatpush1.msra.mxu0 0.0
    %4325 = vmatprep.subr.mxu0 0.0
    %4326 = vmatpush1.msra.mxu0 0.0
    %4327 = vmatprep.subr.mxu0 0.0
    %4328 = vmatpush1.msra.mxu0 0.0
    %4329 = vmatprep.subr.mxu0 0.0
    %4330 = vmatpush1.msra.mxu0 0.0
    %4331 = vmatprep.subr.mxu0 0.0
    %4332 = vmatpush1.msra.mxu0 0.0
    %4333 = vmatprep.subr.mxu0 0.0
    %4334 = vmatpush1.msra.mxu0 0.0
    %4335 = vmatprep.subr.mxu0 0.0
    %4336 = vmatpush1.msra.mxu0 0.0
    %4337 = vmatprep.subr.mxu0 0.0
    %4338 = vmatpush1.msra.mxu0 0.0
    %4339 = vmatprep.subr.mxu0 0.0
    %4340 = vmatpush1.msra.mxu0 0.0
    %4341 = vmatprep.mubr.f32.mxu0 0.0
    %4342 = vmatmul.mubr.f32.gmra.mrb[0].mxu0 %v4272
    %v4343 = vpop.f32.mrb[0].mxu0
    %v4344 = vadd.f32 0.0, %v4343
    %v4345 = vpop.f32.mrb[0].mxu0
    %4346 = vmatprep.mubr.f32.mxu0 0.0
    %4347 = vmatmul.mubr.f32.gmra.mrb[0].mxu0 %v4275
    %v4348 = vpop.f32.mrb[0].mxu0
    %v4349 = vadd.f32 0.0, %v4348
    %v4350 = vpop.f32.mrb[0].mxu0
    %4351 = vdwg.mxu0
    %v4353 = vsel %vm785, %v1571, 0
    %v4356 = vsel %vm785, %v1572, 0
    %4358 = vmatprep.subr.mxu0 0.0
    %4359 = vmatpush1.msra.mxu0 %v3442
    %4360 = vmatprep.subr.mxu0 0.0
    %4361 = vmatpush1.msra.mxu0 0.0
    %4362 = vmatprep.subr.mxu0 0.0
    %4363 = vmatpush1.msra.mxu0 0.0
    %4364 = vmatprep.subr.mxu0 0.0
    %4365 = vmatpush1.msra.mxu0 0.0
    %4366 = vmatprep.subr.mxu0 0.0
    %4367 = vmatpush1.msra.mxu0 0.0
    %4368 = vmatprep.subr.mxu0 0.0
    %4369 = vmatpush1.msra.mxu0 0.0
    %4370 = vmatprep.subr.mxu0 0.0
    %4371 = vmatpush1.msra.mxu0 0.0
    %4372 = vmatprep.subr.mxu0 0.0
    %4373 = vmatpush1.msra.mxu0 0.0
    %4374 = vmatprep.subr.mxu0 0.0
    %4375 = vmatpush1.msra.mxu0 0.0
    %4376 = vmatprep.subr.mxu0 0.0
    %4377 = vmatpush1.msra.mxu0 0.0
    %4378 = vmatprep.subr.mxu0 0.0
    %4379 = vmatpush1.msra.mxu0 0.0
    %4380 = vmatprep.subr.mxu0 0.0
    %4381 = vmatpush1.msra.mxu0 0.0
    %4382 = vmatprep.subr.mxu0 0.0
    %4383 = vmatpush1.msra.mxu0 0.0
    %4384 = vmatprep.subr.mxu0 0.0
    %4385 = vmatpush1.msra.mxu0 0.0
    %4386 = vmatprep.subr.mxu0 0.0
    %4387 = vmatpush1.msra.mxu0 0.0
    %4388 = vmatprep.subr.mxu0 0.0
    %4389 = vmatpush1.msra.mxu0 0.0
    %4390 = vmatprep.subr.mxu0 0.0
    %4391 = vmatpush1.msra.mxu0 0.0
    %4392 = vmatprep.subr.mxu0 0.0
    %4393 = vmatpush1.msra.mxu0 0.0
    %4394 = vmatprep.subr.mxu0 0.0
    %4395 = vmatpush1.msra.mxu0 0.0
    %4396 = vmatprep.subr.mxu0 0.0
    %4397 = vmatpush1.msra.mxu0 0.0
    %4398 = vmatprep.subr.mxu0 0.0
    %4399 = vmatpush1.msra.mxu0 0.0
    %4400 = vmatprep.subr.mxu0 0.0
    %4401 = vmatpush1.msra.mxu0 0.0
    %4402 = vmatprep.subr.mxu0 0.0
    %4403 = vmatpush1.msra.mxu0 0.0
    %4404 = vmatprep.subr.mxu0 0.0
    %4405 = vmatpush1.msra.mxu0 0.0
    %4406 = vmatprep.subr.mxu0 0.0
    %4407 = vmatpush1.msra.mxu0 0.0
    %4408 = vmatprep.subr.mxu0 0.0
    %4409 = vmatpush1.msra.mxu0 0.0
    %4410 = vmatprep.subr.mxu0 0.0
    %4411 = vmatpush1.msra.mxu0 0.0
    %4412 = vmatprep.subr.mxu0 0.0
    %4413 = vmatpush1.msra.mxu0 0.0
    %4414 = vmatprep.subr.mxu0 0.0
    %4415 = vmatpush1.msra.mxu0 0.0
    %4416 = vmatprep.subr.mxu0 0.0
    %4417 = vmatpush1.msra.mxu0 0.0
    %4418 = vmatprep.subr.mxu0 0.0
    %4419 = vmatpush1.msra.mxu0 0.0
    %4420 = vmatprep.subr.mxu0 0.0
    %4421 = vmatpush1.msra.mxu0 0.0
    %4422 = vmatprep.mubr.f32.mxu0 0.0
    %4423 = vmatmul.mubr.f32.gmra.mrb[0].mxu0 %v4353
    %v4424 = vpop.f32.mrb[0].mxu0
    %v4425 = vadd.f32 0.0, %v4424
    %v4426 = vpop.f32.mrb[0].mxu0
    %4427 = vmatprep.mubr.f32.mxu0 0.0
    %4428 = vmatmul.mubr.f32.gmra.mrb[0].mxu0 %v4356
    %v4429 = vpop.f32.mrb[0].mxu0
    %v4430 = vadd.f32 0.0, %v4429
    %v4431 = vpop.f32.mrb[0].mxu0
    %4432 = vdwg.mxu0
    %v4434 = vsel %vm785, %v1573, 0
    %v4437 = vsel %vm785, %v1574, 0
    %4439 = vmatprep.subr.mxu0 0.0
    %4440 = vmatpush1.msra.mxu0 %v3515
    %4441 = vmatprep.subr.mxu0 0.0
    %4442 = vmatpush1.msra.mxu0 0.0
    %4443 = vmatprep.subr.mxu0 0.0
    %4444 = vmatpush1.msra.mxu0 0.0
    %4445 = vmatprep.subr.mxu0 0.0
    %4446 = vmatpush1.msra.mxu0 0.0
    %4447 = vmatprep.subr.mxu0 0.0
    %4448 = vmatpush1.msra.mxu0 0.0
    %4449 = vmatprep.subr.mxu0 0.0
    %4450 = vmatpush1.msra.mxu0 0.0
    %4451 = vmatprep.subr.mxu0 0.0
    %4452 = vmatpush1.msra.mxu0 0.0
    %4453 = vmatprep.subr.mxu0 0.0
    %4454 = vmatpush1.msra.mxu0 0.0
    %4455 = vmatprep.subr.mxu0 0.0
    %4456 = vmatpush1.msra.mxu0 0.0
    %4457 = vmatprep.subr.mxu0 0.0
    %4458 = vmatpush1.msra.mxu0 0.0
    %4459 = vmatprep.subr.mxu0 0.0
    %4460 = vmatpush1.msra.mxu0 0.0
    %4461 = vmatprep.subr.mxu0 0.0
    %4462 = vmatpush1.msra.mxu0 0.0
    %4463 = vmatprep.subr.mxu0 0.0
    %4464 = vmatpush1.msra.mxu0 0.0
    %4465 = vmatprep.subr.mxu0 0.0
    %4466 = vmatpush1.msra.mxu0 0.0
    %4467 = vmatprep.subr.mxu0 0.0
    %4468 = vmatpush1.msra.mxu0 0.0
    %4469 = vmatprep.subr.mxu0 0.0
    %4470 = vmatpush1.msra.mxu0 0.0
    %4471 = vmatprep.subr.mxu0 0.0
    %4472 = vmatpush1.msra.mxu0 0.0
    %4473 = vmatprep.subr.mxu0 0.0
    %4474 = vmatpush1.msra.mxu0 0.0
    %4475 = vmatprep.subr.mxu0 0.0
    %4476 = vmatpush1.msra.mxu0 0.0
    %4477 = vmatprep.subr.mxu0 0.0
    %4478 = vmatpush1.msra.mxu0 0.0
    %4479 = vmatprep.subr.mxu0 0.0
    %4480 = vmatpush1.msra.mxu0 0.0
    %4481 = vmatprep.subr.mxu0 0.0
    %4482 = vmatpush1.msra.mxu0 0.0
    %4483 = vmatprep.subr.mxu0 0.0
    %4484 = vmatpush1.msra.mxu0 0.0
    %4485 = vmatprep.subr.mxu0 0.0
    %4486 = vmatpush1.msra.mxu0 0.0
    %4487 = vmatprep.subr.mxu0 0.0
    %4488 = vmatpush1.msra.mxu0 0.0
    %4489 = vmatprep.subr.mxu0 0.0
    %4490 = vmatpush1.msra.mxu0 0.0
    %4491 = vmatprep.subr.mxu0 0.0
    %4492 = vmatpush1.msra.mxu0 0.0
    %4493 = vmatprep.subr.mxu0 0.0
    %4494 = vmatpush1.msra.mxu0 0.0
    %4495 = vmatprep.subr.mxu0 0.0
    %4496 = vmatpush1.msra.mxu0 0.0
    %4497 = vmatprep.subr.mxu0 0.0
    %4498 = vmatpush1.msra.mxu0 0.0
    %4499 = vmatprep.subr.mxu0 0.0
    %4500 = vmatpush1.msra.mxu0 0.0
    %4501 = vmatprep.subr.mxu0 0.0
    %4502 = vmatpush1.msra.mxu0 0.0
    %4503 = vmatprep.mubr.f32.mxu0 0.0
    %4504 = vmatmul.mubr.f32.gmra.mrb[0].mxu0 %v4434
    %v4505 = vpop.f32.mrb[0].mxu0
    %v4506 = vadd.f32 0.0, %v4505
    %v4507 = vpop.f32.mrb[0].mxu0
    %4508 = vmatprep.mubr.f32.mxu0 0.0
    %4509 = vmatmul.mubr.f32.gmra.mrb[0].mxu0 %v4437
    %v4510 = vpop.f32.mrb[0].mxu0
    %v4511 = vadd.f32 0.0, %v4510
    %v4512 = vpop.f32.mrb[0].mxu0
    %4513 = vdwg.mxu0
    %v4515 = vsel %vm785, %v1575, 0
    %v4518 = vsel %vm785, %v1576, 0
    %4520 = vmatprep.subr.mxu0 0.0
    %4521 = vmatpush1.msra.mxu0 %v3588
    %4522 = vmatprep.subr.mxu0 0.0
    %4523 = vmatpush1.msra.mxu0 0.0
    %4524 = vmatprep.subr.mxu0 0.0
    %4525 = vmatpush1.msra.mxu0 0.0
    %4526 = vmatprep.subr.mxu0 0.0
    %4527 = vmatpush1.msra.mxu0 0.0
    %4528 = vmatprep.subr.mxu0 0.0
    %4529 = vmatpush1.msra.mxu0 0.0
    %4530 = vmatprep.subr.mxu0 0.0
    %4531 = vmatpush1.msra.mxu0 0.0
    %4532 = vmatprep.subr.mxu0 0.0
    %4533 = vmatpush1.msra.mxu0 0.0
    %4534 = vmatprep.subr.mxu0 0.0
    %4535 = vmatpush1.msra.mxu0 0.0
    %4536 = vmatprep.subr.mxu0 0.0
    %4537 = vmatpush1.msra.mxu0 0.0
    %4538 = vmatprep.subr.mxu0 0.0
    %4539 = vmatpush1.msra.mxu0 0.0
    %4540 = vmatprep.subr.mxu0 0.0
    %4541 = vmatpush1.msra.mxu0 0.0
    %4542 = vmatprep.subr.mxu0 0.0
    %4543 = vmatpush1.msra.mxu0 0.0
    %4544 = vmatprep.subr.mxu0 0.0
    %4545 = vmatpush1.msra.mxu0 0.0
    %4546 = vmatprep.subr.mxu0 0.0
    %4547 = vmatpush1.msra.mxu0 0.0
    %4548 = vmatprep.subr.mxu0 0.0
    %4549 = vmatpush1.msra.mxu0 0.0
    %4550 = vmatprep.subr.mxu0 0.0
    %4551 = vmatpush1.msra.mxu0 0.0
    %4552 = vmatprep.subr.mxu0 0.0
    %4553 = vmatpush1.msra.mxu0 0.0
    %4554 = vmatprep.subr.mxu0 0.0
    %4555 = vmatpush1.msra.mxu0 0.0
    %4556 = vmatprep.subr.mxu0 0.0
    %4557 = vmatpush1.msra.mxu0 0.0
    %4558 = vmatprep.subr.mxu0 0.0
    %4559 = vmatpush1.msra.mxu0 0.0
    %4560 = vmatprep.subr.mxu0 0.0
    %4561 = vmatpush1.msra.mxu0 0.0
    %4562 = vmatprep.subr.mxu0 0.0
    %4563 = vmatpush1.msra.mxu0 0.0
    %4564 = vmatprep.subr.mxu0 0.0
    %4565 = vmatpush1.msra.mxu0 0.0
    %4566 = vmatprep.subr.mxu0 0.0
    %4567 = vmatpush1.msra.mxu0 0.0
    %4568 = vmatprep.subr.mxu0 0.0
    %4569 = vmatpush1.msra.mxu0 0.0
    %4570 = vmatprep.subr.mxu0 0.0
    %4571 = vmatpush1.msra.mxu0 0.0
    %4572 = vmatprep.subr.mxu0 0.0
    %4573 = vmatpush1.msra.mxu0 0.0
    %4574 = vmatprep.subr.mxu0 0.0
    %4575 = vmatpush1.msra.mxu0 0.0
    %4576 = vmatprep.subr.mxu0 0.0
    %4577 = vmatpush1.msra.mxu0 0.0
    %4578 = vmatprep.subr.mxu0 0.0
    %4579 = vmatpush1.msra.mxu0 0.0
    %4580 = vmatprep.subr.mxu0 0.0
    %4581 = vmatpush1.msra.mxu0 0.0
    %4582 = vmatprep.subr.mxu0 0.0
    %4583 = vmatpush1.msra.mxu0 0.0
    %4584 = vmatprep.mubr.f32.mxu0 0.0
    %4585 = vmatmul.mubr.f32.gmra.mrb[0].mxu0 %v4515
    %v4586 = vpop.f32.mrb[0].mxu0
    %v4587 = vadd.f32 0.0, %v4586
    %v4588 = vpop.f32.mrb[0].mxu0
    %4589 = vmatprep.mubr.f32.mxu0 0.0
    %4590 = vmatmul.mubr.f32.gmra.mrb[0].mxu0 %v4518
    %v4591 = vpop.f32.mrb[0].mxu0
    %v4592 = vadd.f32 0.0, %v4591
    %v4593 = vpop.f32.mrb[0].mxu0
    %4594 = vdwg.mxu0
    %v4595 = vsel %vm785, %v4344, 0.0
    %v4596 = vsel %vm785, %v4425, 0.0
    %v4597 = vadd.f32 %v4595, %v4596
    %v4598 = vsel %vm785, %v4506, 0.0
    %v4599 = vadd.f32 %v4597, %v4598
    %v4600 = vsel %vm785, %v4587, 0.0
    %v4601 = vadd.f32 %v4599, %v4600
    %v4602 = vsel %vm785, %v4349, 0.0
    %v4603 = vsel %vm785, %v4430, 0.0
    %v4604 = vadd.f32 %v4602, %v4603
    %v4605 = vsel %vm785, %v4511, 0.0
    %v4606 = vadd.f32 %v4604, %v4605
    %v4607 = vsel %vm785, %v4592, 0.0
    %v4608 = vadd.f32 %v4606, %v4607
    %v4609 = vadd.f32 %v2922, %v4601
    %v4610 = vadd.f32 %v2929, %v4608
    %v4612 = vsel %vm785, %v1585, 0
    %v4615 = vsel %vm785, %v1586, 0
    %4617 = vmatprep.subr.mxu0 0.0
    %4618 = vmatpush1.msra.mxu0 %v3369
    %4619 = vmatprep.subr.mxu0 0.0
    %4620 = vmatpush1.msra.mxu0 0.0
    %4621 = vmatprep.subr.mxu0 0.0
    %4622 = vmatpush1.msra.mxu0 0.0
    %4623 = vmatprep.subr.mxu0 0.0
    %4624 = vmatpush1.msra.mxu0 0.0
    %4625 = vmatprep.subr.mxu0 0.0
    %4626 = vmatpush1.msra.mxu0 0.0
    %4627 = vmatprep.subr.mxu0 0.0
    %4628 = vmatpush1.msra.mxu0 0.0
    %4629 = vmatprep.subr.mxu0 0.0
    %4630 = vmatpush1.msra.mxu0 0.0
    %4631 = vmatprep.subr.mxu0 0.0
    %4632 = vmatpush1.msra.mxu0 0.0
    %4633 = vmatprep.subr.mxu0 0.0
    %4634 = vmatpush1.msra.mxu0 0.0
    %4635 = vmatprep.subr.mxu0 0.0
    %4636 = vmatpush1.msra.mxu0 0.0
    %4637 = vmatprep.subr.mxu0 0.0
    %4638 = vmatpush1.msra.mxu0 0.0
    %4639 = vmatprep.subr.mxu0 0.0
    %4640 = vmatpush1.msra.mxu0 0.0
    %4641 = vmatprep.subr.mxu0 0.0
    %4642 = vmatpush1.msra.mxu0 0.0
    %4643 = vmatprep.subr.mxu0 0.0
    %4644 = vmatpush1.msra.mxu0 0.0
    %4645 = vmatprep.subr.mxu0 0.0
    %4646 = vmatpush1.msra.mxu0 0.0
    %4647 = vmatprep.subr.mxu0 0.0
    %4648 = vmatpush1.msra.mxu0 0.0
    %4649 = vmatprep.subr.mxu0 0.0
    %4650 = vmatpush1.msra.mxu0 0.0
    %4651 = vmatprep.subr.mxu0 0.0
    %4652 = vmatpush1.msra.mxu0 0.0
    %4653 = vmatprep.subr.mxu0 0.0
    %4654 = vmatpush1.msra.mxu0 0.0
    %4655 = vmatprep.subr.mxu0 0.0
    %4656 = vmatpush1.msra.mxu0 0.0
    %4657 = vmatprep.subr.mxu0 0.0
    %4658 = vmatpush1.msra.mxu0 0.0
    %4659 = vmatprep.subr.mxu0 0.0
    %4660 = vmatpush1.msra.mxu0 0.0
    %4661 = vmatprep.subr.mxu0 0.0
    %4662 = vmatpush1.msra.mxu0 0.0
    %4663 = vmatprep.subr.mxu0 0.0
    %4664 = vmatpush1.msra.mxu0 0.0
    %4665 = vmatprep.subr.mxu0 0.0
    %4666 = vmatpush1.msra.mxu0 0.0
    %4667 = vmatprep.subr.mxu0 0.0
    %4668 = vmatpush1.msra.mxu0 0.0
    %4669 = vmatprep.subr.mxu0 0.0
    %4670 = vmatpush1.msra.mxu0 0.0
    %4671 = vmatprep.subr.mxu0 0.0
    %4672 = vmatpush1.msra.mxu0 0.0
    %4673 = vmatprep.subr.mxu0 0.0
    %4674 = vmatpush1.msra.mxu0 0.0
    %4675 = vmatprep.subr.mxu0 0.0
    %4676 = vmatpush1.msra.mxu0 0.0
    %4677 = vmatprep.subr.mxu0 0.0
    %4678 = vmatpush1.msra.mxu0 0.0
    %4679 = vmatprep.subr.mxu0 0.0
    %4680 = vmatpush1.msra.mxu0 0.0
    %4681 = vmatprep.mubr.f32.mxu0 0.0
    %4682 = vmatmul.mubr.f32.gmra.mrb[0].mxu0 %v4612
    %v4683 = vpop.f32.mrb[0].mxu0
    %v4684 = vadd.f32 0.0, %v4683
    %v4685 = vpop.f32.mrb[0].mxu0
    %4686 = vmatprep.mubr.f32.mxu0 0.0
    %4687 = vmatmul.mubr.f32.gmra.mrb[0].mxu0 %v4615
    %v4688 = vpop.f32.mrb[0].mxu0
    %v4689 = vadd.f32 0.0, %v4688
    %v4690 = vpop.f32.mrb[0].mxu0
    %4691 = vdwg.mxu0
    %v4693 = vsel %vm785, %v1587, 0
    %v4696 = vsel %vm785, %v1588, 0
    %4698 = vmatprep.subr.mxu0 0.0
    %4699 = vmatpush1.msra.mxu0 %v3442
    %4700 = vmatprep.subr.mxu0 0.0
    %4701 = vmatpush1.msra.mxu0 0.0
    %4702 = vmatprep.subr.mxu0 0.0
    %4703 = vmatpush1.msra.mxu0 0.0
    %4704 = vmatprep.subr.mxu0 0.0
    %4705 = vmatpush1.msra.mxu0 0.0
    %4706 = vmatprep.subr.mxu0 0.0
    %4707 = vmatpush1.msra.mxu0 0.0
    %4708 = vmatprep.subr.mxu0 0.0
    %4709 = vmatpush1.msra.mxu0 0.0
    %4710 = vmatprep.subr.mxu0 0.0
    %4711 = vmatpush1.msra.mxu0 0.0
    %4712 = vmatprep.subr.mxu0 0.0
    %4713 = vmatpush1.msra.mxu0 0.0
    %4714 = vmatprep.subr.mxu0 0.0
    %4715 = vmatpush1.msra.mxu0 0.0
    %4716 = vmatprep.subr.mxu0 0.0
    %4717 = vmatpush1.msra.mxu0 0.0
    %4718 = vmatprep.subr.mxu0 0.0
    %4719 = vmatpush1.msra.mxu0 0.0
    %4720 = vmatprep.subr.mxu0 0.0
    %4721 = vmatpush1.msra.mxu0 0.0
    %4722 = vmatprep.subr.mxu0 0.0
    %4723 = vmatpush1.msra.mxu0 0.0
    %4724 = vmatprep.subr.mxu0 0.0
    %4725 = vmatpush1.msra.mxu0 0.0
    %4726 = vmatprep.subr.mxu0 0.0
    %4727 = vmatpush1.msra.mxu0 0.0
    %4728 = vmatprep.subr.mxu0 0.0
    %4729 = vmatpush1.msra.mxu0 0.0
    %4730 = vmatprep.subr.mxu0 0.0
    %4731 = vmatpush1.msra.mxu0 0.0
    %4732 = vmatprep.subr.mxu0 0.0
    %4733 = vmatpush1.msra.mxu0 0.0
    %4734 = vmatprep.subr.mxu0 0.0
    %4735 = vmatpush1.msra.mxu0 0.0
    %4736 = vmatprep.subr.mxu0 0.0
    %4737 = vmatpush1.msra.mxu0 0.0
    %4738 = vmatprep.subr.mxu0 0.0
    %4739 = vmatpush1.msra.mxu0 0.0
    %4740 = vmatprep.subr.mxu0 0.0
    %4741 = vmatpush1.msra.mxu0 0.0
    %4742 = vmatprep.subr.mxu0 0.0
    %4743 = vmatpush1.msra.mxu0 0.0
    %4744 = vmatprep.subr.mxu0 0.0
    %4745 = vmatpush1.msra.mxu0 0.0
    %4746 = vmatprep.subr.mxu0 0.0
    %4747 = vmatpush1.msra.mxu0 0.0
    %4748 = vmatprep.subr.mxu0 0.0
    %4749 = vmatpush1.msra.mxu0 0.0
    %4750 = vmatprep.subr.mxu0 0.0
    %4751 = vmatpush1.msra.mxu0 0.0
    %4752 = vmatprep.subr.mxu0 0.0
    %4753 = vmatpush1.msra.mxu0 0.0
    %4754 = vmatprep.subr.mxu0 0.0
    %4755 = vmatpush1.msra.mxu0 0.0
    %4756 = vmatprep.subr.mxu0 0.0
    %4757 = vmatpush1.msra.mxu0 0.0
    %4758 = vmatprep.subr.mxu0 0.0
    %4759 = vmatpush1.msra.mxu0 0.0
    %4760 = vmatprep.subr.mxu0 0.0
    %4761 = vmatpush1.msra.mxu0 0.0
    %4762 = vmatprep.mubr.f32.mxu0 0.0
    %4763 = vmatmul.mubr.f32.gmra.mrb[0].mxu0 %v4693
    %v4764 = vpop.f32.mrb[0].mxu0
    %v4765 = vadd.f32 0.0, %v4764
    %v4766 = vpop.f32.mrb[0].mxu0
    %4767 = vmatprep.mubr.f32.mxu0 0.0
    %4768 = vmatmul.mubr.f32.gmra.mrb[0].mxu0 %v4696
    %v4769 = vpop.f32.mrb[0].mxu0
    %v4770 = vadd.f32 0.0, %v4769
    %v4771 = vpop.f32.mrb[0].mxu0
    %4772 = vdwg.mxu0
    %v4774 = vsel %vm785, %v1589, 0
    %v4777 = vsel %vm785, %v1590, 0
    %4779 = vmatprep.subr.mxu0 0.0
    %4780 = vmatpush1.msra.mxu0 %v3515
    %4781 = vmatprep.subr.mxu0 0.0
    %4782 = vmatpush1.msra.mxu0 0.0
    %4783 = vmatprep.subr.mxu0 0.0
    %4784 = vmatpush1.msra.mxu0 0.0
    %4785 = vmatprep.subr.mxu0 0.0
    %4786 = vmatpush1.msra.mxu0 0.0
    %4787 = vmatprep.subr.mxu0 0.0
    %4788 = vmatpush1.msra.mxu0 0.0
    %4789 = vmatprep.subr.mxu0 0.0
    %4790 = vmatpush1.msra.mxu0 0.0
    %4791 = vmatprep.subr.mxu0 0.0
    %4792 = vmatpush1.msra.mxu0 0.0
    %4793 = vmatprep.subr.mxu0 0.0
    %4794 = vmatpush1.msra.mxu0 0.0
    %4795 = vmatprep.subr.mxu0 0.0
    %4796 = vmatpush1.msra.mxu0 0.0
    %4797 = vmatprep.subr.mxu0 0.0
    %4798 = vmatpush1.msra.mxu0 0.0
    %4799 = vmatprep.subr.mxu0 0.0
    %4800 = vmatpush1.msra.mxu0 0.0
    %4801 = vmatprep.subr.mxu0 0.0
    %4802 = vmatpush1.msra.mxu0 0.0
    %4803 = vmatprep.subr.mxu0 0.0
    %4804 = vmatpush1.msra.mxu0 0.0
    %4805 = vmatprep.subr.mxu0 0.0
    %4806 = vmatpush1.msra.mxu0 0.0
    %4807 = vmatprep.subr.mxu0 0.0
    %4808 = vmatpush1.msra.mxu0 0.0
    %4809 = vmatprep.subr.mxu0 0.0
    %4810 = vmatpush1.msra.mxu0 0.0
    %4811 = vmatprep.subr.mxu0 0.0
    %4812 = vmatpush1.msra.mxu0 0.0
    %4813 = vmatprep.subr.mxu0 0.0
    %4814 = vmatpush1.msra.mxu0 0.0
    %4815 = vmatprep.subr.mxu0 0.0
    %4816 = vmatpush1.msra.mxu0 0.0
    %4817 = vmatprep.subr.mxu0 0.0
    %4818 = vmatpush1.msra.mxu0 0.0
    %4819 = vmatprep.subr.mxu0 0.0
    %4820 = vmatpush1.msra.mxu0 0.0
    %4821 = vmatprep.subr.mxu0 0.0
    %4822 = vmatpush1.msra.mxu0 0.0
    %4823 = vmatprep.subr.mxu0 0.0
    %4824 = vmatpush1.msra.mxu0 0.0
    %4825 = vmatprep.subr.mxu0 0.0
    %4826 = vmatpush1.msra.mxu0 0.0
    %4827 = vmatprep.subr.mxu0 0.0
    %4828 = vmatpush1.msra.mxu0 0.0
    %4829 = vmatprep.subr.mxu0 0.0
    %4830 = vmatpush1.msra.mxu0 0.0
    %4831 = vmatprep.subr.mxu0 0.0
    %4832 = vmatpush1.msra.mxu0 0.0
    %4833 = vmatprep.subr.mxu0 0.0
    %4834 = vmatpush1.msra.mxu0 0.0
    %4835 = vmatprep.subr.mxu0 0.0
    %4836 = vmatpush1.msra.mxu0 0.0
    %4837 = vmatprep.subr.mxu0 0.0
    %4838 = vmatpush1.msra.mxu0 0.0
    %4839 = vmatprep.subr.mxu0 0.0
    %4840 = vmatpush1.msra.mxu0 0.0
    %4841 = vmatprep.subr.mxu0 0.0
    %4842 = vmatpush1.msra.mxu0 0.0
    %4843 = vmatprep.mubr.f32.mxu0 0.0
    %4844 = vmatmul.mubr.f32.gmra.mrb[0].mxu0 %v4774
    %v4845 = vpop.f32.mrb[0].mxu0
    %v4846 = vadd.f32 0.0, %v4845
    %v4847 = vpop.f32.mrb[0].mxu0
    %4848 = vmatprep.mubr.f32.mxu0 0.0
    %4849 = vmatmul.mubr.f32.gmra.mrb[0].mxu0 %v4777
    %v4850 = vpop.f32.mrb[0].mxu0
    %v4851 = vadd.f32 0.0, %v4850
    %v4852 = vpop.f32.mrb[0].mxu0
    %4853 = vdwg.mxu0
    %v4855 = vsel %vm785, %v1591, 0
    %v4858 = vsel %vm785, %v1592, 0
    %4860 = vmatprep.subr.mxu0 0.0
    %4861 = vmatpush1.msra.mxu0 %v3588
    %4862 = vmatprep.subr.mxu0 0.0
    %4863 = vmatpush1.msra.mxu0 0.0
    %4864 = vmatprep.subr.mxu0 0.0
    %4865 = vmatpush1.msra.mxu0 0.0
    %4866 = vmatprep.subr.mxu0 0.0
    %4867 = vmatpush1.msra.mxu0 0.0
    %4868 = vmatprep.subr.mxu0 0.0
    %4869 = vmatpush1.msra.mxu0 0.0
    %4870 = vmatprep.subr.mxu0 0.0
    %4871 = vmatpush1.msra.mxu0 0.0
    %4872 = vmatprep.subr.mxu0 0.0
    %4873 = vmatpush1.msra.mxu0 0.0
    %4874 = vmatprep.subr.mxu0 0.0
    %4875 = vmatpush1.msra.mxu0 0.0
    %4876 = vmatprep.subr.mxu0 0.0
    %4877 = vmatpush1.msra.mxu0 0.0
    %4878 = vmatprep.subr.mxu0 0.0
    %4879 = vmatpush1.msra.mxu0 0.0
    %4880 = vmatprep.subr.mxu0 0.0
    %4881 = vmatpush1.msra.mxu0 0.0
    %4882 = vmatprep.subr.mxu0 0.0
    %4883 = vmatpush1.msra.mxu0 0.0
    %4884 = vmatprep.subr.mxu0 0.0
    %4885 = vmatpush1.msra.mxu0 0.0
    %4886 = vmatprep.subr.mxu0 0.0
    %4887 = vmatpush1.msra.mxu0 0.0
    %4888 = vmatprep.subr.mxu0 0.0
    %4889 = vmatpush1.msra.mxu0 0.0
    %4890 = vmatprep.subr.mxu0 0.0
    %4891 = vmatpush1.msra.mxu0 0.0
    %4892 = vmatprep.subr.mxu0 0.0
    %4893 = vmatpush1.msra.mxu0 0.0
    %4894 = vmatprep.subr.mxu0 0.0
    %4895 = vmatpush1.msra.mxu0 0.0
    %4896 = vmatprep.subr.mxu0 0.0
    %4897 = vmatpush1.msra.mxu0 0.0
    %4898 = vmatprep.subr.mxu0 0.0
    %4899 = vmatpush1.msra.mxu0 0.0
    %4900 = vmatprep.subr.mxu0 0.0
    %4901 = vmatpush1.msra.mxu0 0.0
    %4902 = vmatprep.subr.mxu0 0.0
    %4903 = vmatpush1.msra.mxu0 0.0
    %4904 = vmatprep.subr.mxu0 0.0
    %4905 = vmatpush1.msra.mxu0 0.0
    %4906 = vmatprep.subr.mxu0 0.0
    %4907 = vmatpush1.msra.mxu0 0.0
    %4908 = vmatprep.subr.mxu0 0.0
    %4909 = vmatpush1.msra.mxu0 0.0
    %4910 = vmatprep.subr.mxu0 0.0
    %4911 = vmatpush1.msra.mxu0 0.0
    %4912 = vmatprep.subr.mxu0 0.0
    %4913 = vmatpush1.msra.mxu0 0.0
    %4914 = vmatprep.subr.mxu0 0.0
    %4915 = vmatpush1.msra.mxu0 0.0
    %4916 = vmatprep.subr.mxu0 0.0
    %4917 = vmatpush1.msra.mxu0 0.0
    %4918 = vmatprep.subr.mxu0 0.0
    %4919 = vmatpush1.msra.mxu0 0.0
    %4920 = vmatprep.subr.mxu0 0.0
    %4921 = vmatpush1.msra.mxu0 0.0
    %4922 = vmatprep.subr.mxu0 0.0
    %4923 = vmatpush1.msra.mxu0 0.0
    %4924 = vmatprep.mubr.f32.mxu0 0.0
    %4925 = vmatmul.mubr.f32.gmra.mrb[0].mxu0 %v4855
    %v4926 = vpop.f32.mrb[0].mxu0
    %v4927 = vadd.f32 0.0, %v4926
    %v4928 = vpop.f32.mrb[0].mxu0
    %4929 = vmatprep.mubr.f32.mxu0 0.0
    %4930 = vmatmul.mubr.f32.gmra.mrb[0].mxu0 %v4858
    %v4931 = vpop.f32.mrb[0].mxu0
    %v4932 = vadd.f32 0.0, %v4931
    %v4933 = vpop.f32.mrb[0].mxu0
    %4934 = vdwg.mxu0
    %v4935 = vsel %vm785, %v4684, 0.0
    %v4936 = vsel %vm785, %v4765, 0.0
    %v4937 = vadd.f32 %v4935, %v4936
    %v4938 = vsel %vm785, %v4846, 0.0
    %v4939 = vadd.f32 %v4937, %v4938
    %v4940 = vsel %vm785, %v4927, 0.0
    %v4941 = vadd.f32 %v4939, %v4940
    %v4942 = vsel %vm785, %v4689, 0.0
    %v4943 = vsel %vm785, %v4770, 0.0
    %v4944 = vadd.f32 %v4942, %v4943
    %v4945 = vsel %vm785, %v4851, 0.0
    %v4946 = vadd.f32 %v4944, %v4945
    %v4947 = vsel %vm785, %v4932, 0.0
    %v4948 = vadd.f32 %v4946, %v4947
    %v4949 = vadd.f32 %v3260, %v4941
    %v4950 = vadd.f32 %v3267, %v4948
    %4953 = vrot.lane.b32.xlu0 %v4269, 8
    %v4954 = vpop.permute.xlu0 %4953
    %4955 = vrot.lane.b32.xlu0 %v4270, 8
    %v4956 = vpop.permute.xlu0 %4955
    %4961 = vrot.lane.b32.xlu0 %v4609, 16
    %v4962 = vpop.permute.xlu0 %4961
    %4963 = vrot.lane.b32.xlu0 %v4610, 16
    %v4964 = vpop.permute.xlu0 %4963
    %4969 = vrot.lane.b32.xlu0 %v4949, 24
    %v4970 = vpop.permute.xlu0 %4969
    %4971 = vrot.lane.b32.xlu0 %v4950, 24
    %v4972 = vpop.permute.xlu0 %4971
    %v4975 = vsel %vm785, %v3929, %v4954
    %v4976 = vsel %vm785, %v3930, %v4956
    %v4977 = vsel %vm32, %v4975, %v4962
    %v4978 = vsel %vm32, %v4976, %v4964
    %vm4979 = vcmask 195584
    %v4980 = vsel %vm4979, %v4977, %v4970
    %v4981 = vsel %vm4979, %v4978, %v4972
    %vm4982 = vcmask 261120
    %4983 = vst.msk [vmem:[#allocation3] sm:$0xff] %vm4982, %v4980
    %4984 = vst.msk [vmem:[#allocation3 + $0x8] sm:$0xff] %vm4982, %v4981
    // Predicated region
    $region22: #{tpu_custom_call.1} parent=1 // pred_check
      _
    $region23: #{tpu_custom_call.1} parent=1 // pred_check_branch
      %4986 = sbr.rel (0) target = $region25
    $region24: #{tpu_custom_call.1} parent=1 // pred_region
      %s4988 = ssub.s32 256, 256
      %4989 = vsyncadd [#allocation4], %s4988
      %s4990 = sshll.u32 [#allocation3], 4
      %s4991 = int_to_ptr.vmem [resolvable:$true] %s4990
      %4996 = dma.vmem_to_hbm [thread:$0]  %s4991, 256, %s5, [#allocation4], 128, 128, 8
    $region25: #{tpu_custom_call.1} parent=1 // pred_fallthru
      _
    // Predicated region
    $region26: #{tpu_custom_call.1} parent=1 // pred_check
      _
    $region27: #{tpu_custom_call.1} parent=1 // pred_check_branch
      %4998 = sbr.rel (0) target = $region29
    $region28: #{tpu_custom_call.1} parent=1 // pred_region
      %4999 = dma.done [#allocation4], 256
    $region29: #{tpu_custom_call.1} parent=1 // pred_fallthru
      _
    %5000 = vsyncpa [#allocation4], 1

</llo_original>
